<compile_context>
chip_gen: v7x
topology: tpu7x:2x2x1
jax: 0.10.0
libtpu: 0.0.40
codegen_flags: <defaults>
</compile_context>

<pallas_src>
import functools

import jax
import jax.numpy as jnp
from jax import lax
from jax.experimental import pallas as pl
from jax.experimental.pallas import tpu as pltpu

LANE = 128          # channel dims padded to multiples of this (lane width)
EXPANSION = 4
_VMEM_LIMIT = 64 * 1024 * 1024


# ----------------------------------------------------------------------------
# helpers
# ----------------------------------------------------------------------------
def _relu6(x):
    return jnp.clip(x, 0.0, 6.0)


def _round_up(x, m):
    return (x + m - 1) // m * m


def _pad_to(x, tail):
    """Zero-pad the trailing len(tail) dims of x up to sizes in `tail`."""
    nlead = x.ndim - len(tail)
    pads = [(0, 0)] * nlead + [(0, t - s) for s, t in zip(x.shape[nlead:], tail)]
    if all(p == (0, 0) for p in pads):
        return x
    return jnp.pad(x, pads)


def _tile_rows(m, target=512):
    """Row tile for flattened (M, C) pointwise kernels: multiple of 8, >=2 grid
    steps when possible (megacore), capped at `target`."""
    if m <= 8:
        return m
    return min(target, max(8, (m // 2) // 8 * 8))


def _pick_tn(cout):
    """Cout tile (multiple of 128) so weights never blow scoped VMEM."""
    for t in (512, 384, 256, 128):
        if cout % t == 0:
            return t
    return cout


def _pick_row_block(oh, ow):
    """Output-row strip so the flattened strip (rb*OW) is ~256-1024 rows and,
    when possible, a multiple of 8 (dense stores)."""
    divs = [d for d in range(1, oh + 1) if oh % d == 0]
    good = [d for d in divs if d * ow <= 1024 and (d * ow) % 8 == 0]
    if good:
        return max(good)
    cand = [d for d in divs if d * ow <= 1024]
    rb = max(cand) if cand else 1
    if rb * ow < 256:
        bigger = [d for d in divs if 256 <= d * ow <= 4096]
        if bigger:
            rb = min(bigger)
    return rb


# ----------------------------------------------------------------------------
# Pallas kernels
# ----------------------------------------------------------------------------
def _pw_kernel(x_ref, w_ref, b_ref, o_ref, *, apply_relu6):
    # x:(tm,Cin)  w:(Cin,tn)  b:(1,tn)  o:(tm,tn)
    acc = jnp.dot(x_ref[...], w_ref[...], preferred_element_type=jnp.float32)
    acc = acc + b_ref[...]
    if apply_relu6:
        acc = _relu6(acc)
    o_ref[...] = acc.astype(o_ref.dtype)


def _pw_add_kernel(x_ref, w_ref, b_ref, sc_ref, o_ref):
    # fused conv3 + identity shortcut (read in f32) + ReLU6
    acc = jnp.dot(x_ref[...], w_ref[...], preferred_element_type=jnp.float32)
    acc = acc + b_ref[...] + sc_ref[...].astype(jnp.float32)
    o_ref[...] = _relu6(acc).astype(o_ref.dtype)


def _pw_convsc_add_kernel(x_ref, w_ref, b_ref, xs_ref, ws_ref, o_ref):
    # fused conv3 + 1x1-shortcut-conv + ReLU6   (b_ref already holds b3 + bs)
    acc = jnp.dot(x_ref[...], w_ref[...], preferred_element_type=jnp.float32)
    acc = acc + jnp.dot(xs_ref[...], ws_ref[...],
                        preferred_element_type=jnp.float32)
    acc = acc + b_ref[...]
    o_ref[...] = _relu6(acc).astype(o_ref.dtype)


def _conv3x3_kernel(x_ref, w_ref, b_ref, o_ref, *, stride, row_block, ow,
                    apply_relu6, flat_out):
    # x:(nph, Hs, Ws, Cin) phase-split padded image (resident across strips of the same n)
    # w:(3,3,Cin,Cout)  b:(1,Cout)  o:(row_block*ow, Cout)  [or (row_block, ow, Cout)]
    cin = x_ref.shape[-1]
    cout = o_ref.shape[-1]
    m = row_block * ow
    row0 = pl.multiple_of(pl.program_id(1) * row_block, row_block)

    # Local f32 accumulator seeded with the bias: taps chain through the MXU result path,
    # no per-tap VMEM-scratch round trip and no separate zero-fill / bias-add pass.
    acc = jnp.broadcast_to(b_ref[...], (m, cout))
    for kh in range(3):
        for kw in range(3):
            ph = (kh % stride) * stride + (kw % stride)
            patch = x_ref[ph,
                          pl.ds(row0 + kh // stride, row_block),
                          pl.ds(kw // stride, ow), :]
            acc = acc + jnp.dot(patch.reshape(m, cin), w_ref[kh, kw],
                                preferred_element_type=jnp.float32)
    if apply_relu6:
        acc = _relu6(acc)
    out = acc if flat_out else acc.reshape(row_block, ow, cout)
    o_ref[...] = out.astype(o_ref.dtype)


# ----------------------------------------------------------------------------
# Wrappers
# ----------------------------------------------------------------------------
def conv1x1(x2d, w, b, *, apply_relu6=False, out_dtype=None):
    """1x1 conv + bias (+ ReLU6) on a flattened (M, Cin) activation. w:(Cin,Cout)."""
    M, Cin = x2d.shape
    Cout = w.shape[1]
    out_dtype = out_dtype or x2d.dtype
    tm = _tile_rows(M)
    tn = _pick_tn(Cout)
    nj = Cout // tn
    ni = pl.cdiv(M, tm)
    bytes_accessed = int(M * Cin * x2d.dtype.itemsize
                         + Cin * Cout * w.dtype.itemsize + Cout * 4
                         + M * Cout * jnp.dtype(out_dtype).itemsize)
    return pl.pallas_call(
        functools.partial(_pw_kernel, apply_relu6=apply_relu6),
        out_shape=jax.ShapeDtypeStruct((M, Cout), out_dtype),
        grid=(nj, ni),                 # Cout axis OUTER -> weight block resident over the M sweep
        in_specs=[pl.BlockSpec((tm, Cin), lambda j, i: (i, 0)),
                  pl.BlockSpec((Cin, tn), lambda j, i: (0, j)),
                  pl.BlockSpec((1, tn), lambda j, i: (0, j))],
        out_specs=pl.BlockSpec((tm, tn), lambda j, i: (i, j)),
        compiler_params=pltpu.CompilerParams(
            dimension_semantics=("parallel", "parallel"),
            vmem_limit_bytes=_VMEM_LIMIT),
        cost_estimate=pl.CostEstimate(flops=2 * M * Cin * Cout, transcendentals=0,
                                      bytes_accessed=bytes_accessed),
    )(x2d, w, b.reshape(1, Cout))


def conv1x1_shortcut_add_relu6(mid2d, w3, b3, sc2d, *, ws=None, bs=None,
                               out_dtype=None):
    """Fused epilogue: relu6(mid @ w3 + b3 + shortcut) on flattened activations.

    If ws is None, sc2d is the identity-shortcut tensor (M, Cout), read in f32.
    Otherwise sc2d is the (already spatially strided) input of the 1x1 shortcut
    conv, which is computed inside the same kernel (bias folded into b3 + bs).
    """
    M, Cmid = mid2d.shape
    Cout = w3.shape[1]
    out_dtype = out_dtype or mid2d.dtype
    tm = _tile_rows(M)
    tn = _pick_tn(Cout)
    nj = Cout // tn
    ni = pl.cdiv(M, tm)

    if ws is None:
        bias = b3.reshape(1, Cout).astype(jnp.float32)
        args = (mid2d, w3, bias, sc2d)
        in_specs = [pl.BlockSpec((tm, Cmid), lambda j, i: (i, 0)),
                    pl.BlockSpec((Cmid, tn), lambda j, i: (0, j)),
                    pl.BlockSpec((1, tn), lambda j, i: (0, j)),
                    pl.BlockSpec((tm, tn), lambda j, i: (i, j))]
        kernel = _pw_add_kernel
        flops = 2 * M * Cmid * Cout
        bytes_accessed = int(M * Cmid * mid2d.dtype.itemsize
                             + Cmid * Cout * w3.dtype.itemsize + Cout * 4
                             + M * Cout * sc2d.dtype.itemsize
                             + M * Cout * jnp.dtype(out_dtype).itemsize)
    else:
        Cin_sc = sc2d.shape[-1]
        bias = (b3 + bs).reshape(1, Cout).astype(jnp.float32)
        args = (mid2d, w3, bias, sc2d, ws)
        in_specs = [pl.BlockSpec((tm, Cmid), lambda j, i: (i, 0)),
                    pl.BlockSpec((Cmid, tn), lambda j, i: (0, j)),
                    pl.BlockSpec((1, tn), lambda j, i: (0, j)),
                    pl.BlockSpec((tm, Cin_sc), lambda j, i: (i, 0)),
                    pl.BlockSpec((Cin_sc, tn), lambda j, i: (0, j))]
        kernel = _pw_convsc_add_kernel
        flops = 2 * M * (Cmid + Cin_sc) * Cout
        bytes_accessed = int(M * Cmid * mid2d.dtype.itemsize
                             + M * Cin_sc * sc2d.dtype.itemsize
                             + (Cmid + Cin_sc) * Cout * w3.dtype.itemsize + Cout * 4
                             + M * Cout * jnp.dtype(out_dtype).itemsize)

    return pl.pallas_call(
        kernel,
        out_shape=jax.ShapeDtypeStruct((M, Cout), out_dtype),
        grid=(nj, ni),
        in_specs=in_specs,
        out_specs=pl.BlockSpec((tm, tn), lambda j, i: (i, j)),
        compiler_params=pltpu.CompilerParams(
            dimension_semantics=("parallel", "parallel"),
            vmem_limit_bytes=_VMEM_LIMIT),
        cost_estimate=pl.CostEstimate(flops=flops, transcendentals=0,
                                      bytes_accessed=bytes_accessed),
    )(*args)


def conv3x3(x_nhwc, w, b, *, stride=1, apply_relu6=False, out_dtype=None):
    """3x3 conv, padding=1, stride s, + bias (+ ReLU6). w:(3,3,Cin,Cout)  b:(Cout,)."""
    N, H, W, Cin = x_nhwc.shape
    Cout = w.shape[-1]
    out_dtype = out_dtype or x_nhwc.dtype
    OH = (H - 1) // stride + 1
    OW = (W - 1) // stride + 1

    # Spatial halo pad (rounded up to a multiple of `stride` so the phase split is exact).
    # TODO(synk): fuse conv1 + this halo handling into the kernel to drop this HBM round trip.
    Hp = _round_up(H + 2, stride)
    Wp = _round_up(W + 2, stride)
    x_pad = jnp.pad(x_nhwc, ((0, 0), (1, Hp - H - 1), (1, Wp - W - 1), (0, 0)))

    nph = stride * stride
    Hs, Ws = Hp // stride, Wp // stride
    if stride == 1:
        x_ph = x_pad                                       # (N, Hp, Wp, Cin), nph == 1
    else:
        # Pre-split into stride*stride spatial phases -> every in-kernel tap is unit-stride.
        x_ph = x_pad.reshape(N, Hs, stride, Ws, stride, Cin)
        x_ph = jnp.transpose(x_ph, (0, 2, 4, 1, 3, 5)).reshape(N * nph, Hs, Ws, Cin)

    row_block = _pick_row_block(OH, OW)
    n_strips = OH // row_block
    m_blk = row_block * OW
    M = N * OH * OW
    flat_out = (m_blk % 8 == 0) or (N * n_strips == 1)

    if flat_out:
        out_shape = jax.ShapeDtypeStruct((M, Cout), out_dtype)
        out_spec = pl.BlockSpec((m_blk, Cout), lambda n, s: (n * n_strips + s, 0))
    else:
        # Fallback when the flattened strip is not sublane-aligned.
        out_shape = jax.ShapeDtypeStruct((N * OH, OW, Cout), out_dtype)
        out_spec = pl.BlockSpec((row_block, OW, Cout),
                                lambda n, s: (n * n_strips + s, 0, 0))

    bytes_accessed = int(N * nph * Hs * Ws * Cin * x_nhwc.dtype.itemsize
                         + 9 * Cin * Cout * w.dtype.itemsize + Cout * 4
                         + M * Cout * jnp.dtype(out_dtype).itemsize)
    # TODO(synk): v7x - tile the input over H strips (manual DMA) instead of whole-image residency.
    out = pl.pallas_call(
        functools.partial(_conv3x3_kernel, stride=stride, row_block=row_block,
                          ow=OW, apply_relu6=apply_relu6, flat_out=flat_out),
        out_shape=out_shape,
        grid=(N, n_strips),
        in_specs=[pl.BlockSpec((nph, Hs, Ws, Cin), lambda n, s: (n, 0, 0, 0)),
                  pl.BlockSpec((3, 3, Cin, Cout), lambda n, s: (0, 0, 0, 0)),
                  pl.BlockSpec((1, Cout), lambda n, s: (0, 0))],
        out_specs=out_spec,
        compiler_params=pltpu.CompilerParams(
            dimension_semantics=("parallel", "parallel"),
            vmem_limit_bytes=_VMEM_LIMIT),
        cost_estimate=pl.CostEstimate(
            flops=2 * 9 * M * Cin * Cout, transcendentals=0,
            bytes_accessed=bytes_accessed),
    )(x_ph, w, b.reshape(1, Cout))
    return out.reshape(N, OH, OW, Cout)


# ----------------------------------------------------------------------------
# Bottleneck module (forward)
# ----------------------------------------------------------------------------
def init_bottleneck_params(key, in_planes, planes, stride=1):
    ks = jax.random.split(key, 8)
    scale = 0.1
    p = {
        # kernel-friendly layouts: 1x1: (Cin, Cout); 3x3: (kh, kw, Cin, Cout)
        "w1": scale * jax.random.normal(ks[0], (in_planes, planes), jnp.float32),
        "b1": scale * jax.random.normal(ks[1], (planes,), jnp.float32),
        "w2": scale * jax.random.normal(ks[2], (3, 3, planes, planes), jnp.float32),
        "b2": scale * jax.random.normal(ks[3], (planes,), jnp.float32),
        "w3": scale * jax.random.normal(ks[4], (planes, EXPANSION * planes), jnp.float32),
        "b3": scale * jax.random.normal(ks[5], (EXPANSION * planes,), jnp.float32),
    }
    if stride != 1 or in_planes != EXPANSION * planes:
        p["ws"] = scale * jax.random.normal(
            ks[6], (in_planes, EXPANSION * planes), jnp.float32)
        p["bs"] = scale * jax.random.normal(
            ks[7], (EXPANSION * planes,), jnp.float32)
    return p


def bottleneck_forward(x_nchw, params, *, stride=1, use_bf16=True):
    """x:(N,Cin,H,W) -> (N, 4*planes, ceil(H/stride), ceil(W/stride))."""
    x = jnp.transpose(x_nchw, (0, 2, 3, 1))                 # NHWC
    in_dtype = x.dtype
    cdt = jnp.bfloat16 if use_bf16 else in_dtype            # matmul-input dtype (bf16 default)

    N, H, W, Cin = x.shape
    Cmid = params["w1"].shape[1]
    Cout = params["w3"].shape[1]
    Cin_p, Cmid_p, Cout_p = (_round_up(c, LANE) for c in (Cin, Cmid, Cout))

    # Lane-dense layout: pad all channel dims to multiples of 128 once, up front.
    xp = _pad_to(x, (Cin_p,)).astype(cdt)
    w1 = _pad_to(params["w1"], (Cin_p, Cmid_p)).astype(cdt)
    b1 = _pad_to(params["b1"], (Cmid_p,)).astype(jnp.float32)
    w2 = _pad_to(params["w2"], (Cmid_p, Cmid_p)).astype(cdt)
    b2 = _pad_to(params["b2"], (Cmid_p,)).astype(jnp.float32)
    w3 = _pad_to(params["w3"], (Cmid_p, Cout_p)).astype(cdt)
    b3 = _pad_to(params["b3"], (Cout_p,)).astype(jnp.float32)

    out1 = conv1x1(xp.reshape(N * H * W, Cin_p), w1, b1,
                   apply_relu6=True, out_dtype=cdt)                        # conv1 + relu6
    out2 = conv3x3(out1.reshape(N, H, W, Cmid_p), w2, b2, stride=stride,
                   apply_relu6=True, out_dtype=cdt)                        # conv2 + relu6
    _, OH, OW, _ = out2.shape
    mid2d = out2.reshape(N * OH * OW, Cmid_p)

    # conv3 + shortcut + add + relu6 fused into one kernel.
    if "ws" in params:
        ws = _pad_to(params["ws"], (Cin_p, Cout_p)).astype(cdt)
        bs = _pad_to(params["bs"], (Cout_p,)).astype(jnp.float32)
        xs = xp if stride == 1 else xp[:, ::stride, ::stride, :]
        y2d = conv1x1_shortcut_add_relu6(
            mid2d, w3, b3, xs.reshape(N * OH * OW, Cin_p),
            ws=ws, bs=bs, out_dtype=in_dtype)
    else:
        # Identity shortcut: keep the residual in the original (f32) dtype for the add.
        sc = _pad_to(x, (Cout_p,))
        if stride != 1:
            sc = sc[:, ::stride, ::stride, :]
        y2d = conv1x1_shortcut_add_relu6(
            mid2d, w3, b3, sc.reshape(N * OH * OW, Cout_p), out_dtype=in_dtype)

    y = y2d.reshape(N, OH, OW, Cout_p)[..., :Cout]           # drop channel padding
    return jnp.transpose(y, (0, 3, 1, 2))                    # back to NCHW


# ----------------------------------------------------------------------------
# Pure-JAX reference (NCHW, matches PyTorch conv2d semantics)
# ----------------------------------------------------------------------------
def _ref_conv(x, w_oihw, b, stride, padding):
    y = lax.conv_general_dilated(
        x, w_oihw, (stride, stride), [(padding, padding)] * 2,
        dimension_numbers=("NCHW", "OIHW", "NCHW"))
    return y + b.reshape(1, -1, 1, 1)


def bottleneck_reference(x_nchw, params, *, stride=1):
    w1 = jnp.transpose(params["w1"], (1, 0))[:, :, None, None]           # OIHW
    w2 = jnp.transpose(params["w2"], (3, 2, 0, 1))                       # OIHW
    w3 = jnp.transpose(params["w3"], (1, 0))[:, :, None, None]
    out = _relu6(_ref_conv(x_nchw, w1, params["b1"], 1, 0))
    out = _relu6(_ref_conv(out, w2, params["b2"], stride, 1))
    out = _ref_conv(out, w3, params["b3"], 1, 0)
    if "ws" in params:
        ws = jnp.transpose(params["ws"], (1, 0))[:, :, None, None]
        sc = _ref_conv(x_nchw, ws, params["bs"], stride, 0)
    else:
        sc = x_nchw if stride == 1 else x_nchw[:, :, ::stride, ::stride]
    return _relu6(out + sc)


# ----------------------------------------------------------------------------
if __name__ == "__main__":
    key = jax.random.PRNGKey(0)

    configs = [
        # (in_planes, planes, stride)
        (8, 4, 1),    # projection shortcut (in_planes != 4*planes)
        (16, 4, 1),   # identity shortcut
        (8, 4, 2),    # strided projection shortcut (exercises the phase-split path)
    ]
    N, H, W = 2, 8, 8

    for idx, (in_planes, planes, stride) in enumerate(configs):
        k_x, k_p = jax.random.split(jax.random.fold_in(key, idx))
        x = jax.random.normal(k_x, (N, in_planes, H, W), jnp.float32)
        params = init_bottleneck_params(k_p, in_planes, planes, stride=stride)
        ref = bottleneck_reference(x, params, stride=stride)
        OH = (H - 1) // stride + 1
        assert ref.shape == (N, EXPANSION * planes, OH, OH)

        # f32 path (exact-semantics check).
        fwd_f32 = jax.jit(functools.partial(bottleneck_forward, stride=stride,
                                            use_bf16=False))
        out_f32 = jax.block_until_ready(fwd_f32(x, params))
        assert out_f32.shape == ref.shape
        err = float(jnp.max(jnp.abs(out_f32 - ref)))
        assert jnp.allclose(out_f32, ref, atol=1e-4, rtol=1e-4), \
            f"cfg{idx} f32 max abs err {err}"

        # bf16 matmul-input path (default; f32 accumulation), looser tolerance.
        fwd_bf16 = jax.jit(functools.partial(bottleneck_forward, stride=stride))
        out_bf16 = jax.block_until_ready(fwd_bf16(x, params))
        err_bf16 = float(jnp.max(jnp.abs(out_bf16 - ref)))
        assert jnp.allclose(out_bf16, ref, atol=5e-2, rtol=5e-2), \
            f"cfg{idx} bf16 max abs err {err_bf16}"

    print("KERNEL_OK")
</pallas_src>

<mosaic_0001>
module attributes {stable_mosaic.version = 11 : i64} {
  func.func @_pw_kernel(%arg0: i32, %arg1: i32, %arg2: memref<64x128xf32, #tpu.memory_space<vmem>>, %arg3: memref<128x128xf32, #tpu.memory_space<vmem>>, %arg4: memref<1x128xf32, #tpu.memory_space<vmem>>, %arg5: memref<64x128xf32, #tpu.memory_space<vmem>>) attributes {dimension_semantics = [#tpu.dimension_semantics<parallel>, #tpu.dimension_semantics<parallel>], iteration_bounds = array<i64: 1, 2>, scalar_prefetch = 0 : i64, scratch_operands = 0 : i64, tpu.core_type = #tpu.core_type<tc>, window_params = [{transform_indices = @transform_0, window_bounds = array<i64: 64, 128>}, {transform_indices = @transform_1, window_bounds = array<i64: 128, 128>}, {transform_indices = @transform_2, window_bounds = array<i64: 1, 128>}, {transform_indices = @transform_3, window_bounds = array<i64: 64, 128>}]} {
    %c0 = arith.constant 0 : index
    %c0_0 = arith.constant 0 : index
    %0 = vector.load %arg2[%c0, %c0_0] : memref<64x128xf32, #tpu.memory_space<vmem>>, vector<64x128xf32>
    %c0_1 = arith.constant 0 : index
    %c0_2 = arith.constant 0 : index
    %1 = vector.load %arg3[%c0_1, %c0_2] : memref<128x128xf32, #tpu.memory_space<vmem>>, vector<128x128xf32>
    %cst = arith.constant dense<0.000000e+00> : vector<64x128xf32>
    %2 = tpu.matmul %0, %1, %cst {dimension_numbers = #tpu.dot_dimension_numbers<[1], [0], [0], [1], [0, 0, 1, 1], [], []>} : vector<64x128xf32>, vector<128x128xf32>, vector<64x128xf32> -> vector<64x128xf32>
    %c0_3 = arith.constant 0 : index
    %c0_4 = arith.constant 0 : index
    %3 = vector.load %arg4[%c0_3, %c0_4] : memref<1x128xf32, #tpu.memory_space<vmem>>, vector<1x128xf32>
    %4 = vector.broadcast %3 : vector<1x128xf32> to vector<64x128xf32>
    %5 = arith.addf %2, %4 : vector<64x128xf32>
    %cst_5 = arith.constant 0.000000e+00 : f32
    %cst_6 = arith.constant 6.000000e+00 : f32
    %6 = vector.broadcast %cst_5 : f32 to vector<64x128xf32>
    %7 = arith.maximumf %6, %5 : vector<64x128xf32>
    %8 = vector.broadcast %cst_6 : f32 to vector<64x128xf32>
    %9 = arith.minimumf %8, %7 : vector<64x128xf32>
    %c0_7 = arith.constant 0 : index
    %c0_8 = arith.constant 0 : index
    %10 = vector.load %arg5[%c0_7, %c0_8] : memref<64x128xf32, #tpu.memory_space<vmem>>, vector<64x128xf32>
    tpu.vector_store %arg5[%c0_7, %c0_8], %9 {strides = array<i32>} : memref<64x128xf32, #tpu.memory_space<vmem>>, vector<64x128xf32>,
    return
  }
  func.func @transform_0(%arg0: i32, %arg1: i32) -> (i32, i32) {
    %c0_i32 = arith.constant 0 : i32
    %c0_i32_0 = arith.constant 0 : i32
    return %arg1, %c0_i32 : i32, i32
  }
  func.func @transform_1(%arg0: i32, %arg1: i32) -> (i32, i32) {
    %c0_i32 = arith.constant 0 : i32
    %c0_i32_0 = arith.constant 0 : i32
    return %c0_i32, %arg0 : i32, i32
  }
  func.func @transform_2(%arg0: i32, %arg1: i32) -> (i32, i32) {
    %c0_i32 = arith.constant 0 : i32
    %c0_i32_0 = arith.constant 0 : i32
    return %c0_i32, %arg0 : i32, i32
  }
  func.func @transform_3(%arg0: i32, %arg1: i32) -> (i32, i32) {
    %c0_i32 = arith.constant 0 : i32
    return %arg1, %arg0 : i32, i32
  }
}

module attributes {stable_mosaic.version = 11 : i64} {
  func.func @_conv3x3_kernel(%arg0: i32, %arg1: i32, %arg2: memref<1x10x10x128xf32, #tpu.memory_space<vmem>>, %arg3: memref<3x3x128x128xf32, #tpu.memory_space<vmem>>, %arg4: memref<1x128xf32, #tpu.memory_space<vmem>>, %arg5: memref<64x128xf32, #tpu.memory_space<vmem>>) attributes {dimension_semantics = [#tpu.dimension_semantics<parallel>, #tpu.dimension_semantics<parallel>], iteration_bounds = array<i64: 2, 1>, scalar_prefetch = 0 : i64, scratch_operands = 0 : i64, tpu.core_type = #tpu.core_type<tc>, window_params = [{transform_indices = @transform_0, window_bounds = array<i64: 1, 10, 10, 128>}, {pipeline_mode = #tpu.pipeline_mode<synchronous>, transform_indices = @transform_1, window_bounds = array<i64: 3, 3, 128, 128>}, {pipeline_mode = #tpu.pipeline_mode<synchronous>, transform_indices = @transform_2, window_bounds = array<i64: 1, 128>}, {transform_indices = @transform_3, window_bounds = array<i64: 64, 128>}]} {
    %c8_i32 = arith.constant 8 : i32
    %0 = arith.muli %arg1, %c8_i32 : i32
    %1 = tpu.assume_multiple %0, 8 : i32
    %c0 = arith.constant 0 : index
    %c0_0 = arith.constant 0 : index
    %2 = vector.load %arg4[%c0, %c0_0] : memref<1x128xf32, #tpu.memory_space<vmem>>, vector<1x128xf32>
    %3 = vector.shape_cast %2 : vector<1x128xf32> to vector<1x128xf32>
    %4 = vector.broadcast %3 : vector<1x128xf32> to vector<64x128xf32>
    %c0_i32 = arith.constant 0 : i32
    %5 = arith.addi %1, %c0_i32 : i32
    %c0_1 = arith.constant 0 : index
    %6 = arith.index_cast %5 : i32 to index
    %c0_2 = arith.constant 0 : index
    %c0_3 = arith.constant 0 : index
    %7 = vector.load %arg2[%c0_1, %6, %c0_2, %c0_3] : memref<1x10x10x128xf32, #tpu.memory_space<vmem>>, vector<1x8x8x128xf32>
    %8 = vector.shape_cast %7 : vector<1x8x8x128xf32> to vector<8x8x128xf32>
    %9 = vector.shape_cast %8 : vector<8x8x128xf32> to vector<64x128xf32>
    %c0_4 = arith.constant 0 : index
    %c0_5 = arith.constant 0 : index
    %c0_6 = arith.constant 0 : index
    %c0_7 = arith.constant 0 : index
    %10 = vector.load %arg3[%c0_4, %c0_5, %c0_6, %c0_7] : memref<3x3x128x128xf32, #tpu.memory_space<vmem>>, vector<1x1x128x128xf32>
    %11 = vector.shape_cast %10 : vector<1x1x128x128xf32> to vector<128x128xf32>
    %cst = arith.constant dense<0.000000e+00> : vector<64x128xf32>
    %12 = tpu.matmul %9, %11, %cst {dimension_numbers = #tpu.dot_dimension_numbers<[1], [0], [0], [1], [0, 0, 1, 1], [], []>} : vector<64x128xf32>, vector<128x128xf32>, vector<64x128xf32> -> vector<64x128xf32>
    %13 = arith.addf %4, %12 : vector<64x128xf32>
    %c0_i32_8 = arith.constant 0 : i32
    %14 = arith.addi %1, %c0_i32_8 : i32
    %c0_9 = arith.constant 0 : index
    %15 = arith.index_cast %14 : i32 to index
    %c1 = arith.constant 1 : index
    %c0_10 = arith.constant 0 : index
    %16 = vector.load %arg2[%c0_9, %15, %c1, %c0_10] : memref<1x10x10x128xf32, #tpu.memory_space<vmem>>, vector<1x8x8x128xf32>
    %17 = vector.shape_cast %16 : vector<1x8x8x128xf32> to vector<8x8x128xf32>
    %18 = vector.shape_cast %17 : vector<8x8x128xf32> to vector<64x128xf32>
    %c0_11 = arith.constant 0 : index
    %c1_12 = arith.constant 1 : index
    %c0_13 = arith.constant 0 : index
    %c0_14 = arith.constant 0 : index
    %19 = vector.load %arg3[%c0_11, %c1_12, %c0_13, %c0_14] : memref<3x3x128x128xf32, #tpu.memory_space<vmem>>, vector<1x1x128x128xf32>
    %20 = vector.shape_cast %19 : vector<1x1x128x128xf32> to vector<128x128xf32>
    %cst_15 = arith.constant dense<0.000000e+00> : vector<64x128xf32>
    %21 = tpu.matmul %18, %20, %cst_15 {dimension_numbers = #tpu.dot_dimension_numbers<[1], [0], [0], [1], [0, 0, 1, 1], [], []>} : vector<64x128xf32>, vector<128x128xf32>, vector<64x128xf32> -> vector<64x128xf32>
    %22 = arith.addf %13, %21 : vector<64x128xf32>
    %c0_i32_16 = arith.constant 0 : i32
    %23 = arith.addi %1, %c0_i32_16 : i32
    %c0_17 = arith.constant 0 : index
    %24 = arith.index_cast %23 : i32 to index
    %c2 = arith.constant 2 : index
    %c0_18 = arith.constant 0 : index
    %25 = vector.load %arg2[%c0_17, %24, %c2, %c0_18] : memref<1x10x10x128xf32, #tpu.memory_space<vmem>>, vector<1x8x8x128xf32>
    %26 = vector.shape_cast %25 : vector<1x8x8x128xf32> to vector<8x8x128xf32>
    %27 = vector.shape_cast %26 : vector<8x8x128xf32> to vector<64x128xf32>
    %c0_19 = arith.constant 0 : index
    %c2_20 = arith.constant 2 : index
    %c0_21 = arith.constant 0 : index
    %c0_22 = arith.constant 0 : index
    %28 = vector.load %arg3[%c0_19, %c2_20, %c0_21, %c0_22] : memref<3x3x128x128xf32, #tpu.memory_space<vmem>>, vector<1x1x128x128xf32>
    %29 = vector.shape_cast %28 : vector<1x1x128x128xf32> to vector<128x128xf32>
    %cst_23 = arith.constant dense<0.000000e+00> : vector<64x128xf32>
    %30 = tpu.matmul %27, %29, %cst_23 {dimension_numbers = #tpu.dot_dimension_numbers<[1], [0], [0], [1], [0, 0, 1, 1], [], []>} : vector<64x128xf32>, vector<128x128xf32>, vector<64x128xf32> -> vector<64x128xf32>
    %31 = arith.addf %22, %30 : vector<64x128xf32>
    %c1_i32 = arith.constant 1 : i32
    %32 = arith.addi %1, %c1_i32 : i32
    %c0_24 = arith.constant 0 : index
    %33 = arith.index_cast %32 : i32 to index
    %c0_25 = arith.constant 0 : index
    %c0_26 = arith.constant 0 : index
    %34 = vector.load %arg2[%c0_24, %33, %c0_25, %c0_26] : memref<1x10x10x128xf32, #tpu.memory_space<vmem>>, vector<1x8x8x128xf32>
    %35 = vector.shape_cast %34 : vector<1x8x8x128xf32> to vector<8x8x128xf32>
    %36 = vector.shape_cast %35 : vector<8x8x128xf32> to vector<64x128xf32>
    %c1_27 = arith.constant 1 : index
    %c0_28 = arith.constant 0 : index
    %c0_29 = arith.constant 0 : index
    %c0_30 = arith.constant 0 : index
    %37 = vector.load %arg3[%c1_27, %c0_28, %c0_29, %c0_30] : memref<3x3x128x128xf32, #tpu.memory_space<vmem>>, vector<1x1x128x128xf32>
    %38 = vector.shape_cast %37 : vector<1x1x128x128xf32> to vector<128x128xf32>
    %cst_31 = arith.constant dense<0.000000e+00> : vector<64x128xf32>
    %39 = tpu.matmul %36, %38, %cst_31 {dimension_numbers = #tpu.dot_dimension_numbers<[1], [0], [0], [1], [0, 0, 1, 1], [], []>} : vector<64x128xf32>, vector<128x128xf32>, vector<64x128xf32> -> vector<64x128xf32>
    %40 = arith.addf %31, %39 : vector<64x128xf32>
    %c1_i32_32 = arith.constant 1 : i32
    %41 = arith.addi %1, %c1_i32_32 : i32
    %c0_33 = arith.constant 0 : index
    %42 = arith.index_cast %41 : i32 to index
    %c1_34 = arith.constant 1 : index
    %c0_35 = arith.constant 0 : index
    %43 = vector.load %arg2[%c0_33, %42, %c1_34, %c0_35] : memref<1x10x10x128xf32, #tpu.memory_space<vmem>>, vector<1x8x8x128xf32>
    %44 = vector.shape_cast %43 : vector<1x8x8x128xf32> to vector<8x8x128xf32>
    %45 = vector.shape_cast %44 : vector<8x8x128xf32> to vector<64x128xf32>
    %c1_36 = arith.constant 1 : index
    %c1_37 = arith.constant 1 : index
    %c0_38 = arith.constant 0 : index
    %c0_39 = arith.constant 0 : index
    %46 = vector.load %arg3[%c1_36, %c1_37, %c0_38, %c0_39] : memref<3x3x128x128xf32, #tpu.memory_space<vmem>>, vector<1x1x128x128xf32>
    %47 = vector.shape_cast %46 : vector<1x1x128x128xf32> to vector<128x128xf32>
    %cst_40 = arith.constant dense<0.000000e+00> : vector<64x128xf32>
    %48 = tpu.matmul %45, %47, %cst_40 {dimension_numbers = #tpu.dot_dimension_numbers<[1], [0], [0], [1], [0, 0, 1, 1], [], []>} : vector<64x128xf32>, vector<128x128xf32>, vector<64x128xf32> -> vector<64x128xf32>
    %49 = arith.addf %40, %48 : vector<64x128xf32>
    %c1_i32_41 = arith.constant 1 : i32
    %50 = arith.addi %1, %c1_i32_41 : i32
    %c0_42 = arith.constant 0 : index
    %51 = arith.index_cast %50 : i32 to index
    %c2_43 = arith.constant 2 : index
    %c0_44 = arith.constant 0 : index
    %52 = vector.load %arg2[%c0_42, %51, %c2_43, %c0_44] : memref<1x10x10x128xf32, #tpu.memory_space<vmem>>, vector<1x8x8x128xf32>
    %53 = vector.shape_cast %52 : vector<1x8x8x128xf32> to vector<8x8x128xf32>
    %54 = vector.shape_cast %53 : vector<8x8x128xf32> to vector<64x128xf32>
    %c1_45 = arith.constant 1 : index
    %c2_46 = arith.constant 2 : index
    %c0_47 = arith.constant 0 : index
    %c0_48 = arith.constant 0 : index
    %55 = vector.load %arg3[%c1_45, %c2_46, %c0_47, %c0_48] : memref<3x3x128x128xf32, #tpu.memory_space<vmem>>, vector<1x1x128x128xf32>
    %56 = vector.shape_cast %55 : vector<1x1x128x128xf32> to vector<128x128xf32>
    %cst_49 = arith.constant dense<0.000000e+00> : vector<64x128xf32>
    %57 = tpu.matmul %54, %56, %cst_49 {dimension_numbers = #tpu.dot_dimension_numbers<[1], [0], [0], [1], [0, 0, 1, 1], [], []>} : vector<64x128xf32>, vector<128x128xf32>, vector<64x128xf32> -> vector<64x128xf32>
    %58 = arith.addf %49, %57 : vector<64x128xf32>
    %c2_i32 = arith.constant 2 : i32
    %59 = arith.addi %1, %c2_i32 : i32
    %c0_50 = arith.constant 0 : index
    %60 = arith.index_cast %59 : i32 to index
    %c0_51 = arith.constant 0 : index
    %c0_52 = arith.constant 0 : index
    %61 = vector.load %arg2[%c0_50, %60, %c0_51, %c0_52] : memref<1x10x10x128xf32, #tpu.memory_space<vmem>>, vector<1x8x8x128xf32>
    %62 = vector.shape_cast %61 : vector<1x8x8x128xf32> to vector<8x8x128xf32>
    %63 = vector.shape_cast %62 : vector<8x8x128xf32> to vector<64x128xf32>
    %c2_53 = arith.constant 2 : index
    %c0_54 = arith.constant 0 : index
    %c0_55 = arith.constant 0 : index
    %c0_56 = arith.constant 0 : index
    %64 = vector.load %arg3[%c2_53, %c0_54, %c0_55, %c0_56] : memref<3x3x128x128xf32, #tpu.memory_space<vmem>>, vector<1x1x128x128xf32>
    %65 = vector.shape_cast %64 : vector<1x1x128x128xf32> to vector<128x128xf32>
    %cst_57 = arith.constant dense<0.000000e+00> : vector<64x128xf32>
    %66 = tpu.matmul %63, %65, %cst_57 {dimension_numbers = #tpu.dot_dimension_numbers<[1], [0], [0], [1], [0, 0, 1, 1], [], []>} : vector<64x128xf32>, vector<128x128xf32>, vector<64x128xf32> -> vector<64x128xf32>
    %67 = arith.addf %58, %66 : vector<64x128xf32>
    %c2_i32_58 = arith.constant 2 : i32
    %68 = arith.addi %1, %c2_i32_58 : i32
    %c0_59 = arith.constant 0 : index
    %69 = arith.index_cast %68 : i32 to index
    %c1_60 = arith.constant 1 : index
    %c0_61 = arith.constant 0 : index
    %70 = vector.load %arg2[%c0_59, %69, %c1_60, %c0_61] : memref<1x10x10x128xf32, #tpu.memory_space<vmem>>, vector<1x8x8x128xf32>
    %71 = vector.shape_cast %70 : vector<1x8x8x128xf32> to vector<8x8x128xf32>
    %72 = vector.shape_cast %71 : vector<8x8x128xf32> to vector<64x128xf32>
    %c2_62 = arith.constant 2 : index
    %c1_63 = arith.constant 1 : index
    %c0_64 = arith.constant 0 : index
    %c0_65 = arith.constant 0 : index
    %73 = vector.load %arg3[%c2_62, %c1_63, %c0_64, %c0_65] : memref<3x3x128x128xf32, #tpu.memory_space<vmem>>, vector<1x1x128x128xf32>
    %74 = vector.shape_cast %73 : vector<1x1x128x128xf32> to vector<128x128xf32>
    %cst_66 = arith.constant dense<0.000000e+00> : vector<64x128xf32>
    %75 = tpu.matmul %72, %74, %cst_66 {dimension_numbers = #tpu.dot_dimension_numbers<[1], [0], [0], [1], [0, 0, 1, 1], [], []>} : vector<64x128xf32>, vector<128x128xf32>, vector<64x128xf32> -> vector<64x128xf32>
    %76 = arith.addf %67, %75 : vector<64x128xf32>
    %c2_i32_67 = arith.constant 2 : i32
    %77 = arith.addi %1, %c2_i32_67 : i32
    %c0_68 = arith.constant 0 : index
    %78 = arith.index_cast %77 : i32 to index
    %c2_69 = arith.constant 2 : index
    %c0_70 = arith.constant 0 : index
    %79 = vector.load %arg2[%c0_68, %78, %c2_69, %c0_70] : memref<1x10x10x128xf32, #tpu.memory_space<vmem>>, vector<1x8x8x128xf32>
    %80 = vector.shape_cast %79 : vector<1x8x8x128xf32> to vector<8x8x128xf32>
    %81 = vector.shape_cast %80 : vector<8x8x128xf32> to vector<64x128xf32>
    %c2_71 = arith.constant 2 : index
    %c2_72 = arith.constant 2 : index
    %c0_73 = arith.constant 0 : index
    %c0_74 = arith.constant 0 : index
    %82 = vector.load %arg3[%c2_71, %c2_72, %c0_73, %c0_74] : memref<3x3x128x128xf32, #tpu.memory_space<vmem>>, vector<1x1x128x128xf32>
    %83 = vector.shape_cast %82 : vector<1x1x128x128xf32> to vector<128x128xf32>
    %cst_75 = arith.constant dense<0.000000e+00> : vector<64x128xf32>
    %84 = tpu.matmul %81, %83, %cst_75 {dimension_numbers = #tpu.dot_dimension_numbers<[1], [0], [0], [1], [0, 0, 1, 1], [], []>} : vector<64x128xf32>, vector<128x128xf32>, vector<64x128xf32> -> vector<64x128xf32>
    %85 = arith.addf %76, %84 : vector<64x128xf32>
    %cst_76 = arith.constant 0.000000e+00 : f32
    %cst_77 = arith.constant 6.000000e+00 : f32
    %86 = vector.broadcast %cst_76 : f32 to vector<64x128xf32>
    %87 = arith.maximumf %86, %85 : vector<64x128xf32>
    %88 = vector.broadcast %cst_77 : f32 to vector<64x128xf32>
    %89 = arith.minimumf %88, %87 : vector<64x128xf32>
    %c0_78 = arith.constant 0 : index
    %c0_79 = arith.constant 0 : index
    %90 = vector.load %arg5[%c0_78, %c0_79] : memref<64x128xf32, #tpu.memory_space<vmem>>, vector<64x128xf32>
    tpu.vector_store %arg5[%c0_78, %c0_79], %89 {strides = array<i32>} : memref<64x128xf32, #tpu.memory_space<vmem>>, vector<64x128xf32>,
    return
  }
  func.func @transform_0(%arg0: i32, %arg1: i32) -> (i32, i32, i32, i32) {
    %c0_i32 = arith.constant 0 : i32
    %c0_i32_0 = arith.constant 0 : i32
    %c0_i32_1 = arith.constant 0 : i32
    %c0_i32_2 = arith.constant 0 : i32
    return %arg0, %c0_i32, %c0_i32_0, %c0_i32_1 : i32, i32, i32, i32
  }
  func.func @transform_1(%arg0: i32, %arg1: i32) -> (i32, i32, i32, i32) {
    %c0_i32 = arith.constant 0 : i32
    %c0_i32_0 = arith.constant 0 : i32
    %c0_i32_1 = arith.constant 0 : i32
    %c0_i32_2 = arith.constant 0 : i32
    %c0_i32_3 = arith.constant 0 : i32
    return %c0_i32, %c0_i32_0, %c0_i32_1, %c0_i32_2 : i32, i32, i32, i32
  }
  func.func @transform_2(%arg0: i32, %arg1: i32) -> (i32, i32) {
    %c0_i32 = arith.constant 0 : i32
    %c0_i32_0 = arith.constant 0 : i32
    %c0_i32_1 = arith.constant 0 : i32
    return %c0_i32, %c0_i32_0 : i32, i32
  }
  func.func @transform_3(%arg0: i32, %arg1: i32) -> (i32, i32) {
    %c1_i32 = arith.constant 1 : i32
    %0 = arith.muli %arg0, %c1_i32 : i32
    %1 = arith.addi %0, %arg1 : i32
    %c0_i32 = arith.constant 0 : i32
    %c0_i32_0 = arith.constant 0 : i32
    return %1, %c0_i32 : i32, i32
  }
}

module attributes {stable_mosaic.version = 11 : i64} {
  func.func @_pw_convsc_add_kernel(%arg0: i32, %arg1: i32, %arg2: memref<64x128xf32, #tpu.memory_space<vmem>>, %arg3: memref<128x128xf32, #tpu.memory_space<vmem>>, %arg4: memref<1x128xf32, #tpu.memory_space<vmem>>, %arg5: memref<64x128xf32, #tpu.memory_space<vmem>>, %arg6: memref<128x128xf32, #tpu.memory_space<vmem>>, %arg7: memref<64x128xf32, #tpu.memory_space<vmem>>) attributes {dimension_semantics = [#tpu.dimension_semantics<parallel>, #tpu.dimension_semantics<parallel>], iteration_bounds = array<i64: 1, 2>, scalar_prefetch = 0 : i64, scratch_operands = 0 : i64, tpu.core_type = #tpu.core_type<tc>, window_params = [{transform_indices = @transform_0, window_bounds = array<i64: 64, 128>}, {transform_indices = @transform_1, window_bounds = array<i64: 128, 128>}, {transform_indices = @transform_2, window_bounds = array<i64: 1, 128>}, {transform_indices = @transform_3, window_bounds = array<i64: 64, 128>}, {transform_indices = @transform_4, window_bounds = array<i64: 128, 128>}, {transform_indices = @transform_5, window_bounds = array<i64: 64, 128>}]} {
    %c0 = arith.constant 0 : index
    %c0_0 = arith.constant 0 : index
    %0 = vector.load %arg2[%c0, %c0_0] : memref<64x128xf32, #tpu.memory_space<vmem>>, vector<64x128xf32>
    %c0_1 = arith.constant 0 : index
    %c0_2 = arith.constant 0 : index
    %1 = vector.load %arg3[%c0_1, %c0_2] : memref<128x128xf32, #tpu.memory_space<vmem>>, vector<128x128xf32>
    %cst = arith.constant dense<0.000000e+00> : vector<64x128xf32>
    %2 = tpu.matmul %0, %1, %cst {dimension_numbers = #tpu.dot_dimension_numbers<[1], [0], [0], [1], [0, 0, 1, 1], [], []>} : vector<64x128xf32>, vector<128x128xf32>, vector<64x128xf32> -> vector<64x128xf32>
    %c0_3 = arith.constant 0 : index
    %c0_4 = arith.constant 0 : index
    %3 = vector.load %arg5[%c0_3, %c0_4] : memref<64x128xf32, #tpu.memory_space<vmem>>, vector<64x128xf32>
    %c0_5 = arith.constant 0 : index
    %c0_6 = arith.constant 0 : index
    %4 = vector.load %arg6[%c0_5, %c0_6] : memref<128x128xf32, #tpu.memory_space<vmem>>, vector<128x128xf32>
    %cst_7 = arith.constant dense<0.000000e+00> : vector<64x128xf32>
    %5 = tpu.matmul %3, %4, %cst_7 {dimension_numbers = #tpu.dot_dimension_numbers<[1], [0], [0], [1], [0, 0, 1, 1], [], []>} : vector<64x128xf32>, vector<128x128xf32>, vector<64x128xf32> -> vector<64x128xf32>
    %6 = arith.addf %2, %5 : vector<64x128xf32>
    %c0_8 = arith.constant 0 : index
    %c0_9 = arith.constant 0 : index
    %7 = vector.load %arg4[%c0_8, %c0_9] : memref<1x128xf32, #tpu.memory_space<vmem>>, vector<1x128xf32>
    %8 = vector.broadcast %7 : vector<1x128xf32> to vector<64x128xf32>
    %9 = arith.addf %6, %8 : vector<64x128xf32>
    %cst_10 = arith.constant 0.000000e+00 : f32
    %cst_11 = arith.constant 6.000000e+00 : f32
    %10 = vector.broadcast %cst_10 : f32 to vector<64x128xf32>
    %11 = arith.maximumf %10, %9 : vector<64x128xf32>
    %12 = vector.broadcast %cst_11 : f32 to vector<64x128xf32>
    %13 = arith.minimumf %12, %11 : vector<64x128xf32>
    %c0_12 = arith.constant 0 : index
    %c0_13 = arith.constant 0 : index
    %14 = vector.load %arg7[%c0_12, %c0_13] : memref<64x128xf32, #tpu.memory_space<vmem>>, vector<64x128xf32>
    tpu.vector_store %arg7[%c0_12, %c0_13], %13 {strides = array<i32>} : memref<64x128xf32, #tpu.memory_space<vmem>>, vector<64x128xf32>,
    return
  }
  func.func @transform_0(%arg0: i32, %arg1: i32) -> (i32, i32) {
    %c0_i32 = arith.constant 0 : i32
    %c0_i32_0 = arith.constant 0 : i32
    return %arg1, %c0_i32 : i32, i32
  }
  func.func @transform_1(%arg0: i32, %arg1: i32) -> (i32, i32) {
    %c0_i32 = arith.constant 0 : i32
    %c0_i32_0 = arith.constant 0 : i32
    return %c0_i32, %arg0 : i32, i32
  }
  func.func @transform_2(%arg0: i32, %arg1: i32) -> (i32, i32) {
    %c0_i32 = arith.constant 0 : i32
    %c0_i32_0 = arith.constant 0 : i32
    return %c0_i32, %arg0 : i32, i32
  }
  func.func @transform_3(%arg0: i32, %arg1: i32) -> (i32, i32) {
    %c0_i32 = arith.constant 0 : i32
    %c0_i32_0 = arith.constant 0 : i32
    return %arg1, %c0_i32 : i32, i32
  }
  func.func @transform_4(%arg0: i32, %arg1: i32) -> (i32, i32) {
    %c0_i32 = arith.constant 0 : i32
    %c0_i32_0 = arith.constant 0 : i32
    return %c0_i32, %arg0 : i32, i32
  }
  func.func @transform_5(%arg0: i32, %arg1: i32) -> (i32, i32) {
    %c0_i32 = arith.constant 0 : i32
    return %arg1, %arg0 : i32, i32
  }
}

</mosaic_0001>

<llo_original>
// kernel: bottleneck_forward.3
$region0: #{bottleneck_forward.3}
  #allocation0 [shape = 'u32[]', space=smem, size = 0x4, offset = 0x4, fixed_abs, tag = 'smem constant byte address 0x4 - core index']
  #allocation1 [shape = 'u32[144,128]{1,0:T(1,128)}', space=vmem, size = 0x12000, scoped, tag = 'internal scratch']
  %s0 = inlined_call_operand.hbm [shape: f32[128,128], index: 0, kind: input, shape index: {}]
  %s1 = inlined_call_operand.hbm [shape: f32[128,128], index: 1, kind: input, shape index: {}]
  %s2 = inlined_call_operand.hbm [shape: f32[1,128], index: 2, kind: input, shape index: {}]
  %s3 = inlined_call_operand.hbm [shape: f32[128,128], index: 3, kind: output, shape index: {}]
  %s4 = sld [smem:[#allocation0]]
  $region57: #{bottleneck_forward.3} parent=0
    _
  %s6 = ssub.s32 1, %s4
  %s7 = scalar_select 0, %s6, %s4
  $region1: #{bottleneck_forward.3} parent=0
    #allocation2 [shape = 'u8[65536]{0}', space=vmem, size = 0x10000, scoped, tag = 'input window, operand 0']
    #allocation3 [shape = 's32[2]{0}', space=sflag, size = 0x8, scoped, tag = 'scoped memory for bottleneck_forward.3']
    #allocation4 [shape = 's32[2]{0}', space=sflag, size = 0x8, scoped, tag = 'scoped memory for bottleneck_forward.3']
    #allocation5 [shape = 'u8[65536]{0}', space=vmem, size = 0x10000, scoped, tag = 'input window, operand 1, single buffered']
    #allocation6 [shape = 's32[1]{0}', space=sflag, size = 0x4, scoped, tag = 'scoped memory for bottleneck_forward.3']
    #allocation7 [shape = 'u8[512]{0}', space=vmem, size = 0x400, scoped, tag = 'input window, operand 2, single buffered']
    #allocation8 [shape = 'u8[65536]{0}', space=vmem, size = 0x10000, scoped, tag = 'output window, operand 0']
    %8 = vsyncpa [#allocation3], 0
    %s9 = scalar_lea.sflag [#allocation3], 1
    %10 = vsyncpa %s9, 0
    %11 = vsyncpa [#allocation6], 0
    %12 = vsyncpa [#allocation4], 0
    %s13 = scalar_lea.sflag [#allocation4], 1
    %14 = vsyncpa %s13, 0
    loop: start=0, step=1, limit=4
    $region2: #{bottleneck_forward.3} parent=1 // loop_pre_header
      _
    $region3: #{bottleneck_forward.3} parent=1 // loop_header
      %s16 = sphi 0, %s20
      %p17 = scmp.ge.s32.totalorder %s16, 4
      %s23 = sphi 0, %s35
      %s24 = sphi 0, %s31
      %s25 = sphi 0, %s23
      %s26 = sphi 0, %s24
      %s27 = sphi 0, %s25
      %s28 = sphi 0, %s26
      %s38 = sphi 0, %s40
      %s41 = sphi 0, %s38
      %s42 = sphi 0, %s41
      %s58 = sphi 0, %s42
      %s64 = sphi 0, %s66
      %s67 = sphi 0, %s64
      %s68 = sphi 0, %s67
      %s84 = sphi 0, %s68
      %s90 = sphi 0, %s92
      %s93 = sphi 0, %s90
      %s94 = sphi 0, %s93
      %s110 = sphi 0, %s94
      %s118 = sphi 0, %s120
      %s121 = sphi 0, %s118
      %s122 = sphi 0, %s121
      %s138 = sphi 0, %s122
    $region4: #{bottleneck_forward.3} parent=1 // loop_header_branch
      %19 = sbr.rel (%p17) target = $region8
    $region5: #{bottleneck_forward.3} parent=1 // loop_body
      %s21 = ssub.s32 %s16, 1
      %s22 = ssub.s32 %s16, 2
      %s29 = sadd.s32 1, %s24
      %p30 = scmp.ge.s32.totalorder %s29, 2
      %s31 = scalar_select %p30, 0, %s29
      %s32 = sadd.s32 1, %s23
      %s33 = scalar_select %p30, %s32, %s23
      %p34 = scmp.ge.s32.totalorder %s33, 1
      %s35 = scalar_select %p34, 0, %s33
      %s36 = ssub.s32 %s24, %s31
      %p37 = scmp.eq.s32.totalorder %s36, 0
      %s39 = sadd.s32 %s38, 1
      %s40 = scalar_select %p37, %s38, %s39
      %p43 = pneg %p37
      %p44 = scmp.eq.s32.totalorder %s16, 1
      %p45 = por %p43, %p44
      %p46 = scmp.ne.s32.totalorder %s38, %s41
      %p47 = scmp.eq.s32.totalorder %s16, 0
      %p48 = por %p46, %p47
      %p49 = scmp.ne.s32.totalorder %s38, %s41
      %p50 = scmp.eq.s32.totalorder %s21, 1
      %p51 = por %p49, %p50
      %p52 = scmp.ne.s32.totalorder %s41, %s42
      %p53 = scmp.eq.s32.totalorder %s21, 0
      %p54 = por %p52, %p53
      %p55 = scmp.ne.s32.totalorder %s41, %s42
      %p56 = scmp.eq.s32.totalorder %s22, 1
      %p57 = por %p55, %p56
      %p59 = scmp.ne.s32.totalorder %s42, %s58
      %p60 = scmp.eq.s32.totalorder %s22, 0
      %p61 = por %p59, %p60
      %s62 = ssub.s32 %s23, %s35
      %p63 = scmp.eq.s32.totalorder %s62, 0
      %s65 = sadd.s32 %s64, 1
      %s66 = scalar_select %p63, %s64, %s65
      %p69 = pneg %p63
      %p70 = scmp.eq.s32.totalorder %s16, 1
      %p71 = por %p69, %p70
      %p72 = scmp.ne.s32.totalorder %s64, %s67
      %p73 = scmp.eq.s32.totalorder %s16, 0
      %p74 = por %p72, %p73
      %p75 = scmp.ne.s32.totalorder %s64, %s67
      %p76 = scmp.eq.s32.totalorder %s21, 1
      %p77 = por %p75, %p76
      %p78 = scmp.ne.s32.totalorder %s67, %s68
      %p79 = scmp.eq.s32.totalorder %s21, 0
      %p80 = por %p78, %p79
      %p81 = scmp.ne.s32.totalorder %s67, %s68
      %p82 = scmp.eq.s32.totalorder %s22, 1
      %p83 = por %p81, %p82
      %p85 = scmp.ne.s32.totalorder %s68, %s84
      %p86 = scmp.eq.s32.totalorder %s22, 0
      %p87 = por %p85, %p86
      %s88 = ssub.s32 %s23, %s35
      %p89 = scmp.eq.s32.totalorder %s88, 0
      %s91 = sadd.s32 %s90, 1
      %s92 = scalar_select %p89, %s90, %s91
      %p95 = pneg %p89
      %p96 = scmp.eq.s32.totalorder %s16, 1
      %p97 = por %p95, %p96
      %p98 = scmp.ne.s32.totalorder %s90, %s93
      %p99 = scmp.eq.s32.totalorder %s16, 0
      %p100 = por %p98, %p99
      %p101 = scmp.ne.s32.totalorder %s90, %s93
      %p102 = scmp.eq.s32.totalorder %s21, 1
      %p103 = por %p101, %p102
      %p104 = scmp.ne.s32.totalorder %s93, %s94
      %p105 = scmp.eq.s32.totalorder %s21, 0
      %p106 = por %p104, %p105
      %p107 = scmp.ne.s32.totalorder %s93, %s94
      %p108 = scmp.eq.s32.totalorder %s22, 1
      %p109 = por %p107, %p108
      %p111 = scmp.ne.s32.totalorder %s94, %s110
      %p112 = scmp.eq.s32.totalorder %s22, 0
      %p113 = por %p111, %p112
      %s114 = ssub.s32 %s24, %s31
      %s115 = ssub.s32 %s23, %s35
      %s116 = sor.u32 %s114, %s115
      %p117 = scmp.eq.s32.totalorder %s116, 0
      %s119 = sadd.s32 %s118, 1
      %s120 = scalar_select %p117, %s118, %s119
      %p123 = pneg %p117
      %p124 = scmp.eq.s32.totalorder %s16, 1
      %p125 = por %p123, %p124
      %p126 = scmp.ne.s32.totalorder %s118, %s121
      %p127 = scmp.eq.s32.totalorder %s16, 0
      %p128 = por %p126, %p127
      %p129 = scmp.ne.s32.totalorder %s118, %s121
      %p130 = scmp.eq.s32.totalorder %s21, 1
      %p131 = por %p129, %p130
      %p132 = scmp.ne.s32.totalorder %s121, %s122
      %p133 = scmp.eq.s32.totalorder %s21, 0
      %p134 = por %p132, %p133
      %p135 = scmp.ne.s32.totalorder %s121, %s122
      %p136 = scmp.eq.s32.totalorder %s22, 1
      %p137 = por %p135, %p136
      %p139 = scmp.ne.s32.totalorder %s122, %s138
      %p140 = scmp.eq.s32.totalorder %s22, 0
      %p141 = por %p139, %p140
      %p142 = scmp.le.s32.totalorder 1, %s16
      %p143 = scmp.lt.s32.totalorder %s16, 3
      %p144 = pnand %p142, %p143
      %p145 = pneg %p144
      // Predicated region
      $region9: #{bottleneck_forward.3} parent=5 // pred_check
        _
      $region10: #{bottleneck_forward.3} parent=5 // pred_check_branch
        %147 = sbr.rel (%p144) target = $region12
      $region11: #{bottleneck_forward.3} parent=5 // pred_region
        %s148 = ssub.s32 %s16, 1
        // Predicated region
        $region13: #{bottleneck_forward.3} parent=11 // pred_check
          %p149 = pneg %p80
        $region14: #{bottleneck_forward.3} parent=11 // pred_check_branch
          %151 = sbr.rel (%p149) target = $region16
        $region15: #{bottleneck_forward.3} parent=11 // pred_region
          %s153 = ssub.s32 2048, 2048
          %154 = vsyncadd [#allocation6], %s153
          %s155 = smul.addr %s25, 128
          %s156 = scalar_lea.hbm %s1, %s155
          %s157 = sshll.u32 [#allocation5], 4
          %s158 = int_to_ptr.vmem [resolvable:$true] %s157
          %163 = dma.hbm_to_vmem [thread:$0]  %s156, 2048, %s158, [#allocation6], 128, 128, 8
        $region16: #{bottleneck_forward.3} parent=11 // pred_fallthru
          _
        // Predicated region
        $region17: #{bottleneck_forward.3} parent=11 // pred_check
          %p164 = pneg %p106
        $region18: #{bottleneck_forward.3} parent=11 // pred_check_branch
          %166 = sbr.rel (%p164) target = $region20
        $region19: #{bottleneck_forward.3} parent=11 // pred_region
          %s168 = ssub.s32 16, 16
          %169 = vsyncadd [#allocation6], %s168
          %s170 = smul.addr %s25, 16
          %s171 = scalar_lea.hbm %s2, %s170
          %s173 = sshll.u32 [#allocation7], 4
          %s174 = int_to_ptr.vmem [resolvable:$true] %s173
          %176 = dma.hbm_to_vmem [thread:$0]  %s171, 16, %s174, [#allocation6]
        $region20: #{bottleneck_forward.3} parent=11 // pred_fallthru
          _
      $region12: #{bottleneck_forward.3} parent=5 // pred_fallthru
        _
      %p177 = scmp.lt.s32.totalorder %s16, 2
      // Predicated region
      $region21: #{bottleneck_forward.3} parent=5 // pred_check
        %p178 = pneg %p177
      $region22: #{bottleneck_forward.3} parent=5 // pred_check_branch
        %180 = sbr.rel (%p178) target = $region24
      $region23: #{bottleneck_forward.3} parent=5 // pred_region
        // Predicated region
        $region25: #{bottleneck_forward.3} parent=23 // pred_check
          %p181 = pneg %p48
        $region26: #{bottleneck_forward.3} parent=23 // pred_check_branch
          %183 = sbr.rel (%p181) target = $region28
        $region27: #{bottleneck_forward.3} parent=23 // pred_region
          %s184 = sand.u32 %s38, 1
          %s185 = scalar_lea.sflag [#allocation3], %s184
          %s186 = sand.u32 %s38, 1
          %s187 = smul.addr %s186, 64
          %s188 = scalar_lea.vmem [#allocation2], %s187
          %s189 = smul.u32 8, %s24
          %s191 = ssub.s32 1024, 1024
          %192 = vsyncadd %s185, %s191
          %s193 = smul.addr %s189, 128
          %s194 = scalar_lea.hbm %s0, %s193
          %s195 = sshll.u32 %s188, 4
          %s196 = int_to_ptr.vmem [resolvable:$true] %s195
          %201 = dma.hbm_to_vmem [thread:$0]  %s194, 1024, %s196, %s185, 128, 128, 8
        $region28: #{bottleneck_forward.3} parent=23 // pred_fallthru
          _
      $region24: #{bottleneck_forward.3} parent=5 // pred_fallthru
        _
      %p202 = scmp.le.s32.totalorder 1, %s16
      %p203 = scmp.lt.s32.totalorder %s16, 3
      %p204 = pnand %p202, %p203
      %p205 = pneg %p204
      // Predicated region
      $region29: #{bottleneck_forward.3} parent=5 // pred_check
        _
      $region30: #{bottleneck_forward.3} parent=5 // pred_check_branch
        %207 = sbr.rel (%p204) target = $region32
      $region31: #{bottleneck_forward.3} parent=5 // pred_region
        %s208 = ssub.s32 %s16, 1
        %s209 = sand.u32 %s41, 1
        %s210 = scalar_lea.sflag [#allocation3], %s209
        %s211 = sand.u32 %s41, 1
        %s212 = smul.addr %s211, 64
        %s213 = scalar_lea.vmem [#allocation2], %s212
        // Predicated region
        $region33: #{bottleneck_forward.3} parent=31 // pred_check
          %p214 = pneg %p54
        $region34: #{bottleneck_forward.3} parent=31 // pred_check_branch
          %216 = sbr.rel (%p214) target = $region36
        $region35: #{bottleneck_forward.3} parent=31 // pred_region
          %217 = dma.done %s210, 1024
        $region36: #{bottleneck_forward.3} parent=31 // pred_fallthru
          _
        // Predicated region
        $region37: #{bottleneck_forward.3} parent=31 // pred_check
          %p218 = pneg %p80
        $region38: #{bottleneck_forward.3} parent=31 // pred_check_branch
          %220 = sbr.rel (%p218) target = $region40
        $region39: #{bottleneck_forward.3} parent=31 // pred_region
          %221 = dma.done [#allocation6], 2048
        $region40: #{bottleneck_forward.3} parent=31 // pred_fallthru
          _
        // Predicated region
        $region41: #{bottleneck_forward.3} parent=31 // pred_check
          %p222 = pneg %p106
        $region42: #{bottleneck_forward.3} parent=31 // pred_check_branch
          %224 = sbr.rel (%p222) target = $region44
        $region43: #{bottleneck_forward.3} parent=31 // pred_region
          %225 = dma.done [#allocation6], 16
        $region44: #{bottleneck_forward.3} parent=31 // pred_fallthru
          _
        %s226 = sand.u32 %s41, 1
        %s227 = scalar_lea.sflag [#allocation3], %s226
        %s228 = sand.u32 %s41, 1
        %s229 = smul.addr %s228, 64
        %s230 = scalar_lea.vmem [#allocation2], %s229
        %p231 = pneg %p54
        %p232 = pneg %p51
        %p233 = pneg %p80
        %p234 = pneg %p77
        %p235 = pneg %p106
        %p236 = pneg %p103
        %p237 = pneg %p134
        %p238 = pneg %p131
        %s239 = sand.u32 %s121, 1
        %s240 = scalar_lea.sflag [#allocation4], %s239
        %s241 = sand.u32 %s121, 1
        %s242 = smul.addr %s241, 64
        %s243 = scalar_lea.vmem [#allocation8], %s242
        %s244 = smul.u32 8, %s26
        %s245 = smul.u32 8, %s26
        %v246 = vld [vmem:[%s213] sm:$0xff]
        %v247 = vld [vmem:[%s213 + $0x8] sm:$0xff]
        %v248 = vld [vmem:[%s213 + $0x10] sm:$0xff]
        %v249 = vld [vmem:[%s213 + $0x18] sm:$0xff]
        %v250 = vld [vmem:[%s213 + $0x20] sm:$0xff]
        %v251 = vld [vmem:[%s213 + $0x28] sm:$0xff]
        %v252 = vld [vmem:[%s213 + $0x30] sm:$0xff]
        %v253 = vld [vmem:[%s213 + $0x38] sm:$0xff]
        %v254 = vld [vmem:[#allocation5] sm:$0xff]
        %v255 = vld [vmem:[#allocation5 + $0x8] sm:$0xff]
        %v256 = vld [vmem:[#allocation5 + $0x10] sm:$0xff]
        %v257 = vld [vmem:[#allocation5 + $0x18] sm:$0xff]
        %v258 = vld [vmem:[#allocation5 + $0x20] sm:$0xff]
        %v259 = vld [vmem:[#allocation5 + $0x28] sm:$0xff]
        %v260 = vld [vmem:[#allocation5 + $0x30] sm:$0xff]
        %v261 = vld [vmem:[#allocation5 + $0x38] sm:$0xff]
        %v262 = vld [vmem:[#allocation5 + $0x40] sm:$0xff]
        %v263 = vld [vmem:[#allocation5 + $0x48] sm:$0xff]
        %v264 = vld [vmem:[#allocation5 + $0x50] sm:$0xff]
        %v265 = vld [vmem:[#allocation5 + $0x58] sm:$0xff]
        %v266 = vld [vmem:[#allocation5 + $0x60] sm:$0xff]
        %v267 = vld [vmem:[#allocation5 + $0x68] sm:$0xff]
        %v268 = vld [vmem:[#allocation5 + $0x70] sm:$0xff]
        %v269 = vld [vmem:[#allocation5 + $0x78] sm:$0xff]
        %v270 = vld [vmem:[#allocation7] sm:$0x1]
        %v272 = vlaneseq
        %v273 = vshrl.u32 %v272, 7
        %v274 = vsub.s32 0, %v273
        %v275 = vrot.slane %v270, %v274
        %277 = vmatprep.subr.mxu0 0.0
        %278 = vmatpush1.msra.mxu0 %v254
        %279 = vmatprep.subr.mxu0 0.0
        %280 = vmatpush1.msra.mxu0 %v255
        %281 = vmatprep.subr.mxu0 0.0
        %282 = vmatpush1.msra.mxu0 %v256
        %283 = vmatprep.subr.mxu0 0.0
        %284 = vmatpush1.msra.mxu0 %v257
        %285 = vmatprep.subr.mxu0 0.0
        %286 = vmatpush1.msra.mxu0 %v258
        %287 = vmatprep.subr.mxu0 0.0
        %288 = vmatpush1.msra.mxu0 %v259
        %289 = vmatprep.subr.mxu0 0.0
        %290 = vmatpush1.msra.mxu0 %v260
        %291 = vmatprep.subr.mxu0 0.0
        %292 = vmatpush1.msra.mxu0 %v261
        %293 = vmatprep.subr.mxu0 0.0
        %294 = vmatpush1.msra.mxu0 %v262
        %295 = vmatprep.subr.mxu0 0.0
        %296 = vmatpush1.msra.mxu0 %v263
        %297 = vmatprep.subr.mxu0 0.0
        %298 = vmatpush1.msra.mxu0 %v264
        %299 = vmatprep.subr.mxu0 0.0
        %300 = vmatpush1.msra.mxu0 %v265
        %301 = vmatprep.subr.mxu0 0.0
        %302 = vmatpush1.msra.mxu0 %v266
        %303 = vmatprep.subr.mxu0 0.0
        %304 = vmatpush1.msra.mxu0 %v267
        %305 = vmatprep.subr.mxu0 0.0
        %306 = vmatpush1.msra.mxu0 %v268
        %307 = vmatprep.subr.mxu0 0.0
        %308 = vmatpush1.msra.mxu0 %v269
        %309 = vmatprep.subr.mxu0 0.0
        %310 = vmatpush1.msra.mxu0 0.0
        %311 = vmatprep.subr.mxu0 0.0
        %312 = vmatpush1.msra.mxu0 0.0
        %313 = vmatprep.subr.mxu0 0.0
        %314 = vmatpush1.msra.mxu0 0.0
        %315 = vmatprep.subr.mxu0 0.0
        %316 = vmatpush1.msra.mxu0 0.0
        %317 = vmatprep.subr.mxu0 0.0
        %318 = vmatpush1.msra.mxu0 0.0
        %319 = vmatprep.subr.mxu0 0.0
        %320 = vmatpush1.msra.mxu0 0.0
        %321 = vmatprep.subr.mxu0 0.0
        %322 = vmatpush1.msra.mxu0 0.0
        %323 = vmatprep.subr.mxu0 0.0
        %324 = vmatpush1.msra.mxu0 0.0
        %325 = vmatprep.subr.mxu0 0.0
        %326 = vmatpush1.msra.mxu0 0.0
        %327 = vmatprep.subr.mxu0 0.0
        %328 = vmatpush1.msra.mxu0 0.0
        %329 = vmatprep.subr.mxu0 0.0
        %330 = vmatpush1.msra.mxu0 0.0
        %331 = vmatprep.subr.mxu0 0.0
        %332 = vmatpush1.msra.mxu0 0.0
        %333 = vmatprep.subr.mxu0 0.0
        %334 = vmatpush1.msra.mxu0 0.0
        %335 = vmatprep.subr.mxu0 0.0
        %336 = vmatpush1.msra.mxu0 0.0
        %337 = vmatprep.subr.mxu0 0.0
        %338 = vmatpush1.msra.mxu0 0.0
        %339 = vmatprep.subr.mxu0 0.0
        %340 = vmatpush1.msra.mxu0 0.0
        %341 = vmatprep.mubr.f32.mxu0 0.0
        %342 = vmatmul.mubr.f32.gmra.mrb[0].mxu0 %v246
        %v343 = vpop.f32.mrb[0].mxu0
        %v344 = vadd.f32 %v275, %v343
        %v345 = vpop.f32.mrb[0].mxu0
        %346 = vmatprep.mubr.f32.mxu0 0.0
        %347 = vmatmul.mubr.f32.gmra.mrb[0].mxu0 %v247
        %v348 = vpop.f32.mrb[0].mxu0
        %v349 = vadd.f32 %v275, %v348
        %v350 = vpop.f32.mrb[0].mxu0
        %351 = vmatprep.mubr.f32.mxu0 0.0
        %352 = vmatmul.mubr.f32.gmra.mrb[0].mxu0 %v248
        %v353 = vpop.f32.mrb[0].mxu0
        %v354 = vadd.f32 %v275, %v353
        %v355 = vpop.f32.mrb[0].mxu0
        %356 = vmatprep.mubr.f32.mxu0 0.0
        %357 = vmatmul.mubr.f32.gmra.mrb[0].mxu0 %v249
        %v358 = vpop.f32.mrb[0].mxu0
        %v359 = vadd.f32 %v275, %v358
        %v360 = vpop.f32.mrb[0].mxu0
        %361 = vmatprep.mubr.f32.mxu0 0.0
        %362 = vmatmul.mubr.f32.gmra.mrb[0].mxu0 %v250
        %v363 = vpop.f32.mrb[0].mxu0
        %v364 = vadd.f32 %v275, %v363
        %v365 = vpop.f32.mrb[0].mxu0
        %366 = vmatprep.mubr.f32.mxu0 0.0
        %367 = vmatmul.mubr.f32.gmra.mrb[0].mxu0 %v251
        %v368 = vpop.f32.mrb[0].mxu0
        %v369 = vadd.f32 %v275, %v368
        %v370 = vpop.f32.mrb[0].mxu0
        %371 = vmatprep.mubr.f32.mxu0 0.0
        %372 = vmatmul.mubr.f32.gmra.mrb[0].mxu0 %v252
        %v373 = vpop.f32.mrb[0].mxu0
        %v374 = vadd.f32 %v275, %v373
        %v375 = vpop.f32.mrb[0].mxu0
        %376 = vmatprep.mubr.f32.mxu0 0.0
        %377 = vmatmul.mubr.f32.gmra.mrb[0].mxu0 %v253
        %v378 = vpop.f32.mrb[0].mxu0
        %v379 = vadd.f32 %v275, %v378
        %v380 = vpop.f32.mrb[0].mxu0
        %381 = vdwg.mxu0
        %v382 = vmax.f32 %v344, 0.0
        %v383 = vmax.f32 %v349, 0.0
        %v384 = vmax.f32 %v354, 0.0
        %v385 = vmax.f32 %v359, 0.0
        %v386 = vmax.f32 %v364, 0.0
        %v387 = vmax.f32 %v369, 0.0
        %v388 = vmax.f32 %v374, 0.0
        %v389 = vmax.f32 %v379, 0.0
        %v390 = vmin.f32 %v382, 6.0
        %v391 = vmin.f32 %v383, 6.0
        %v392 = vmin.f32 %v384, 6.0
        %v393 = vmin.f32 %v385, 6.0
        %v394 = vmin.f32 %v386, 6.0
        %v395 = vmin.f32 %v387, 6.0
        %v396 = vmin.f32 %v388, 6.0
        %v397 = vmin.f32 %v389, 6.0
        %398 = vst [vmem:[%s243] sm:$0xff] %v390
        %399 = vst [vmem:[%s243 + $0x8] sm:$0xff] %v391
        %400 = vst [vmem:[%s243 + $0x10] sm:$0xff] %v392
        %401 = vst [vmem:[%s243 + $0x18] sm:$0xff] %v393
        %402 = vst [vmem:[%s243 + $0x20] sm:$0xff] %v394
        %403 = vst [vmem:[%s243 + $0x28] sm:$0xff] %v395
        %404 = vst [vmem:[%s243 + $0x30] sm:$0xff] %v396
        %405 = vst [vmem:[%s243 + $0x38] sm:$0xff] %v397
        %s406 = sand.u32 %s121, 1
        %s407 = scalar_lea.sflag [#allocation4], %s406
        %s408 = sand.u32 %s121, 1
        %s409 = smul.addr %s408, 64
        %s410 = scalar_lea.vmem [#allocation8], %s409
        // Predicated region
        $region45: #{bottleneck_forward.3} parent=31 // pred_check
          %p411 = pneg %p131
        $region46: #{bottleneck_forward.3} parent=31 // pred_check_branch
          %413 = sbr.rel (%p411) target = $region48
        $region47: #{bottleneck_forward.3} parent=31 // pred_region
          %s414 = smul.u32 8, %s26
          %s416 = ssub.s32 1024, 1024
          %417 = vsyncadd %s407, %s416
          %s418 = sadd.s32 %s25, %s414
          %s419 = smul.addr %s418, 128
          %s420 = scalar_lea.hbm %s3, %s419
          %s421 = sshll.u32 %s410, 4
          %s422 = int_to_ptr.vmem [resolvable:$true] %s421
          %427 = dma.vmem_to_hbm [thread:$0]  %s422, 1024, %s420, %s407, 128, 128, 8
        $region48: #{bottleneck_forward.3} parent=31 // pred_fallthru
          _
      $region32: #{bottleneck_forward.3} parent=5 // pred_fallthru
        _
      %p428 = scmp.le.s32.totalorder 2, %s16
      // Predicated region
      $region49: #{bottleneck_forward.3} parent=5 // pred_check
        %p429 = pneg %p428
      $region50: #{bottleneck_forward.3} parent=5 // pred_check_branch
        %431 = sbr.rel (%p429) target = $region52
      $region51: #{bottleneck_forward.3} parent=5 // pred_region
        %s432 = ssub.s32 %s16, 2
        // Predicated region
        $region53: #{bottleneck_forward.3} parent=51 // pred_check
          %p433 = pneg %p137
        $region54: #{bottleneck_forward.3} parent=51 // pred_check_branch
          %435 = sbr.rel (%p433) target = $region56
        $region55: #{bottleneck_forward.3} parent=51 // pred_region
          %s436 = sand.u32 %s122, 1
          %s437 = scalar_lea.sflag [#allocation4], %s436
          %s438 = sand.u32 %s122, 1
          %s439 = smul.addr %s438, 64
          %s440 = scalar_lea.vmem [#allocation8], %s439
          %441 = dma.done %s437, 1024
        $region56: #{bottleneck_forward.3} parent=51 // pred_fallthru
          _
      $region52: #{bottleneck_forward.3} parent=5 // pred_fallthru
        _
    $region6: #{bottleneck_forward.3} parent=1 // loop_footer
      %s20 = sadd.s32 1, %s16
    $region7: #{bottleneck_forward.3} parent=1 // loop_footer_branch
      %15 = sbr.rel target = $region3
    $region8: #{bottleneck_forward.3} parent=1 // loop_exit
      _
    %442 = vsyncpa [#allocation3], 1
    %s443 = scalar_lea.sflag [#allocation3], 1
    %444 = vsyncpa %s443, 1
    %445 = vsyncpa [#allocation6], 1
    %446 = vsyncpa [#allocation4], 1
    %s447 = scalar_lea.sflag [#allocation4], 1
    %448 = vsyncpa %s447, 1

// kernel: bottleneck_forward.5
$region0: #{bottleneck_forward.5}
  #allocation0 [shape = 'u32[]', space=smem, size = 0x4, offset = 0x4, fixed_abs, tag = 'smem constant byte address 0x4 - core index']
  #allocation1 [shape = 'u32[144,128]{1,0:T(1,128)}', space=vmem, size = 0x12000, scoped, tag = 'internal scratch']
  %s0 = inlined_call_operand.hbm [shape: f32[128,128], index: 0, kind: input, shape index: {}]
  %s1 = inlined_call_operand.hbm [shape: f32[128,128], index: 1, kind: input, shape index: {}]
  %s2 = inlined_call_operand.hbm [shape: f32[1,128], index: 2, kind: input, shape index: {}]
  %s3 = inlined_call_operand.hbm [shape: f32[128,128], index: 3, kind: input, shape index: {}]
  %s4 = inlined_call_operand.hbm [shape: f32[128,128], index: 4, kind: input, shape index: {}]
  %s5 = inlined_call_operand.hbm [shape: f32[128,128], index: 5, kind: output, shape index: {}]
  %s6 = sld [smem:[#allocation0]]
  $region73: #{bottleneck_forward.5} parent=0
    _
  %s8 = ssub.s32 1, %s6
  %s9 = scalar_select 0, %s8, %s6
  $region1: #{bottleneck_forward.5} parent=0
    #allocation2 [shape = 'u8[65536]{0}', space=vmem, size = 0x10000, scoped, tag = 'input window, operand 0']
    #allocation3 [shape = 's32[2]{0}', space=sflag, size = 0x8, scoped, tag = 'scoped memory for bottleneck_forward.5']
    #allocation4 [shape = 's32[2]{0}', space=sflag, size = 0x8, scoped, tag = 'scoped memory for bottleneck_forward.5']
    #allocation5 [shape = 'u8[65536]{0}', space=vmem, size = 0x10000, scoped, tag = 'input window, operand 1, single buffered']
    #allocation6 [shape = 's32[1]{0}', space=sflag, size = 0x4, scoped, tag = 'scoped memory for bottleneck_forward.5']
    #allocation7 [shape = 'u8[512]{0}', space=vmem, size = 0x400, scoped, tag = 'input window, operand 2, single buffered']
    #allocation8 [shape = 'u8[65536]{0}', space=vmem, size = 0x10000, scoped, tag = 'input window, operand 3']
    #allocation9 [shape = 's32[2]{0}', space=sflag, size = 0x8, scoped, tag = 'scoped memory for bottleneck_forward.5']
    #allocation10 [shape = 'u8[65536]{0}', space=vmem, size = 0x10000, scoped, tag = 'input window, operand 4, single buffered']
    #allocation11 [shape = 'u8[65536]{0}', space=vmem, size = 0x10000, scoped, tag = 'output window, operand 0']
    %10 = vsyncpa [#allocation3], 0
    %s11 = scalar_lea.sflag [#allocation3], 1
    %12 = vsyncpa %s11, 0
    %13 = vsyncpa [#allocation6], 0
    %14 = vsyncpa [#allocation9], 0
    %s15 = scalar_lea.sflag [#allocation9], 1
    %16 = vsyncpa %s15, 0
    %17 = vsyncpa [#allocation4], 0
    %s18 = scalar_lea.sflag [#allocation4], 1
    %19 = vsyncpa %s18, 0
    loop: start=0, step=1, limit=4
    $region2: #{bottleneck_forward.5} parent=1 // loop_pre_header
      _
    $region3: #{bottleneck_forward.5} parent=1 // loop_header
      %s21 = sphi 0, %s25
      %p22 = scmp.ge.s32.totalorder %s21, 4
      %s28 = sphi 0, %s40
      %s29 = sphi 0, %s36
      %s30 = sphi 0, %s28
      %s31 = sphi 0, %s29
      %s32 = sphi 0, %s30
      %s33 = sphi 0, %s31
      %s43 = sphi 0, %s45
      %s46 = sphi 0, %s43
      %s47 = sphi 0, %s46
      %s63 = sphi 0, %s47
      %s69 = sphi 0, %s71
      %s72 = sphi 0, %s69
      %s73 = sphi 0, %s72
      %s89 = sphi 0, %s73
      %s95 = sphi 0, %s97
      %s98 = sphi 0, %s95
      %s99 = sphi 0, %s98
      %s115 = sphi 0, %s99
      %s121 = sphi 0, %s123
      %s124 = sphi 0, %s121
      %s125 = sphi 0, %s124
      %s141 = sphi 0, %s125
      %s147 = sphi 0, %s149
      %s150 = sphi 0, %s147
      %s151 = sphi 0, %s150
      %s167 = sphi 0, %s151
      %s175 = sphi 0, %s177
      %s178 = sphi 0, %s175
      %s179 = sphi 0, %s178
      %s195 = sphi 0, %s179
    $region4: #{bottleneck_forward.5} parent=1 // loop_header_branch
      %24 = sbr.rel (%p22) target = $region8
    $region5: #{bottleneck_forward.5} parent=1 // loop_body
      %s26 = ssub.s32 %s21, 1
      %s27 = ssub.s32 %s21, 2
      %s34 = sadd.s32 1, %s29
      %p35 = scmp.ge.s32.totalorder %s34, 2
      %s36 = scalar_select %p35, 0, %s34
      %s37 = sadd.s32 1, %s28
      %s38 = scalar_select %p35, %s37, %s28
      %p39 = scmp.ge.s32.totalorder %s38, 1
      %s40 = scalar_select %p39, 0, %s38
      %s41 = ssub.s32 %s29, %s36
      %p42 = scmp.eq.s32.totalorder %s41, 0
      %s44 = sadd.s32 %s43, 1
      %s45 = scalar_select %p42, %s43, %s44
      %p48 = pneg %p42
      %p49 = scmp.eq.s32.totalorder %s21, 1
      %p50 = por %p48, %p49
      %p51 = scmp.ne.s32.totalorder %s43, %s46
      %p52 = scmp.eq.s32.totalorder %s21, 0
      %p53 = por %p51, %p52
      %p54 = scmp.ne.s32.totalorder %s43, %s46
      %p55 = scmp.eq.s32.totalorder %s26, 1
      %p56 = por %p54, %p55
      %p57 = scmp.ne.s32.totalorder %s46, %s47
      %p58 = scmp.eq.s32.totalorder %s26, 0
      %p59 = por %p57, %p58
      %p60 = scmp.ne.s32.totalorder %s46, %s47
      %p61 = scmp.eq.s32.totalorder %s27, 1
      %p62 = por %p60, %p61
      %p64 = scmp.ne.s32.totalorder %s47, %s63
      %p65 = scmp.eq.s32.totalorder %s27, 0
      %p66 = por %p64, %p65
      %s67 = ssub.s32 %s28, %s40
      %p68 = scmp.eq.s32.totalorder %s67, 0
      %s70 = sadd.s32 %s69, 1
      %s71 = scalar_select %p68, %s69, %s70
      %p74 = pneg %p68
      %p75 = scmp.eq.s32.totalorder %s21, 1
      %p76 = por %p74, %p75
      %p77 = scmp.ne.s32.totalorder %s69, %s72
      %p78 = scmp.eq.s32.totalorder %s21, 0
      %p79 = por %p77, %p78
      %p80 = scmp.ne.s32.totalorder %s69, %s72
      %p81 = scmp.eq.s32.totalorder %s26, 1
      %p82 = por %p80, %p81
      %p83 = scmp.ne.s32.totalorder %s72, %s73
      %p84 = scmp.eq.s32.totalorder %s26, 0
      %p85 = por %p83, %p84
      %p86 = scmp.ne.s32.totalorder %s72, %s73
      %p87 = scmp.eq.s32.totalorder %s27, 1
      %p88 = por %p86, %p87
      %p90 = scmp.ne.s32.totalorder %s73, %s89
      %p91 = scmp.eq.s32.totalorder %s27, 0
      %p92 = por %p90, %p91
      %s93 = ssub.s32 %s28, %s40
      %p94 = scmp.eq.s32.totalorder %s93, 0
      %s96 = sadd.s32 %s95, 1
      %s97 = scalar_select %p94, %s95, %s96
      %p100 = pneg %p94
      %p101 = scmp.eq.s32.totalorder %s21, 1
      %p102 = por %p100, %p101
      %p103 = scmp.ne.s32.totalorder %s95, %s98
      %p104 = scmp.eq.s32.totalorder %s21, 0
      %p105 = por %p103, %p104
      %p106 = scmp.ne.s32.totalorder %s95, %s98
      %p107 = scmp.eq.s32.totalorder %s26, 1
      %p108 = por %p106, %p107
      %p109 = scmp.ne.s32.totalorder %s98, %s99
      %p110 = scmp.eq.s32.totalorder %s26, 0
      %p111 = por %p109, %p110
      %p112 = scmp.ne.s32.totalorder %s98, %s99
      %p113 = scmp.eq.s32.totalorder %s27, 1
      %p114 = por %p112, %p113
      %p116 = scmp.ne.s32.totalorder %s99, %s115
      %p117 = scmp.eq.s32.totalorder %s27, 0
      %p118 = por %p116, %p117
      %s119 = ssub.s32 %s29, %s36
      %p120 = scmp.eq.s32.totalorder %s119, 0
      %s122 = sadd.s32 %s121, 1
      %s123 = scalar_select %p120, %s121, %s122
      %p126 = pneg %p120
      %p127 = scmp.eq.s32.totalorder %s21, 1
      %p128 = por %p126, %p127
      %p129 = scmp.ne.s32.totalorder %s121, %s124
      %p130 = scmp.eq.s32.totalorder %s21, 0
      %p131 = por %p129, %p130
      %p132 = scmp.ne.s32.totalorder %s121, %s124
      %p133 = scmp.eq.s32.totalorder %s26, 1
      %p134 = por %p132, %p133
      %p135 = scmp.ne.s32.totalorder %s124, %s125
      %p136 = scmp.eq.s32.totalorder %s26, 0
      %p137 = por %p135, %p136
      %p138 = scmp.ne.s32.totalorder %s124, %s125
      %p139 = scmp.eq.s32.totalorder %s27, 1
      %p140 = por %p138, %p139
      %p142 = scmp.ne.s32.totalorder %s125, %s141
      %p143 = scmp.eq.s32.totalorder %s27, 0
      %p144 = por %p142, %p143
      %s145 = ssub.s32 %s28, %s40
      %p146 = scmp.eq.s32.totalorder %s145, 0
      %s148 = sadd.s32 %s147, 1
      %s149 = scalar_select %p146, %s147, %s148
      %p152 = pneg %p146
      %p153 = scmp.eq.s32.totalorder %s21, 1
      %p154 = por %p152, %p153
      %p155 = scmp.ne.s32.totalorder %s147, %s150
      %p156 = scmp.eq.s32.totalorder %s21, 0
      %p157 = por %p155, %p156
      %p158 = scmp.ne.s32.totalorder %s147, %s150
      %p159 = scmp.eq.s32.totalorder %s26, 1
      %p160 = por %p158, %p159
      %p161 = scmp.ne.s32.totalorder %s150, %s151
      %p162 = scmp.eq.s32.totalorder %s26, 0
      %p163 = por %p161, %p162
      %p164 = scmp.ne.s32.totalorder %s150, %s151
      %p165 = scmp.eq.s32.totalorder %s27, 1
      %p166 = por %p164, %p165
      %p168 = scmp.ne.s32.totalorder %s151, %s167
      %p169 = scmp.eq.s32.totalorder %s27, 0
      %p170 = por %p168, %p169
      %s171 = ssub.s32 %s29, %s36
      %s172 = ssub.s32 %s28, %s40
      %s173 = sor.u32 %s171, %s172
      %p174 = scmp.eq.s32.totalorder %s173, 0
      %s176 = sadd.s32 %s175, 1
      %s177 = scalar_select %p174, %s175, %s176
      %p180 = pneg %p174
      %p181 = scmp.eq.s32.totalorder %s21, 1
      %p182 = por %p180, %p181
      %p183 = scmp.ne.s32.totalorder %s175, %s178
      %p184 = scmp.eq.s32.totalorder %s21, 0
      %p185 = por %p183, %p184
      %p186 = scmp.ne.s32.totalorder %s175, %s178
      %p187 = scmp.eq.s32.totalorder %s26, 1
      %p188 = por %p186, %p187
      %p189 = scmp.ne.s32.totalorder %s178, %s179
      %p190 = scmp.eq.s32.totalorder %s26, 0
      %p191 = por %p189, %p190
      %p192 = scmp.ne.s32.totalorder %s178, %s179
      %p193 = scmp.eq.s32.totalorder %s27, 1
      %p194 = por %p192, %p193
      %p196 = scmp.ne.s32.totalorder %s179, %s195
      %p197 = scmp.eq.s32.totalorder %s27, 0
      %p198 = por %p196, %p197
      %p199 = scmp.le.s32.totalorder 1, %s21
      %p200 = scmp.lt.s32.totalorder %s21, 3
      %p201 = pnand %p199, %p200
      %p202 = pneg %p201
      // Predicated region
      $region9: #{bottleneck_forward.5} parent=5 // pred_check
        _
      $region10: #{bottleneck_forward.5} parent=5 // pred_check_branch
        %204 = sbr.rel (%p201) target = $region12
      $region11: #{bottleneck_forward.5} parent=5 // pred_region
        %s205 = ssub.s32 %s21, 1
        // Predicated region
        $region13: #{bottleneck_forward.5} parent=11 // pred_check
          %p206 = pneg %p85
        $region14: #{bottleneck_forward.5} parent=11 // pred_check_branch
          %208 = sbr.rel (%p206) target = $region16
        $region15: #{bottleneck_forward.5} parent=11 // pred_region
          %s210 = ssub.s32 2048, 2048
          %211 = vsyncadd [#allocation6], %s210
          %s212 = smul.addr %s30, 128
          %s213 = scalar_lea.hbm %s1, %s212
          %s214 = sshll.u32 [#allocation5], 4
          %s215 = int_to_ptr.vmem [resolvable:$true] %s214
          %220 = dma.hbm_to_vmem [thread:$0]  %s213, 2048, %s215, [#allocation6], 128, 128, 8
        $region16: #{bottleneck_forward.5} parent=11 // pred_fallthru
          _
        // Predicated region
        $region17: #{bottleneck_forward.5} parent=11 // pred_check
          %p221 = pneg %p111
        $region18: #{bottleneck_forward.5} parent=11 // pred_check_branch
          %223 = sbr.rel (%p221) target = $region20
        $region19: #{bottleneck_forward.5} parent=11 // pred_region
          %s225 = ssub.s32 16, 16
          %226 = vsyncadd [#allocation6], %s225
          %s227 = smul.addr %s30, 16
          %s228 = scalar_lea.hbm %s2, %s227
          %s230 = sshll.u32 [#allocation7], 4
          %s231 = int_to_ptr.vmem [resolvable:$true] %s230
          %233 = dma.hbm_to_vmem [thread:$0]  %s228, 16, %s231, [#allocation6]
        $region20: #{bottleneck_forward.5} parent=11 // pred_fallthru
          _
        // Predicated region
        $region21: #{bottleneck_forward.5} parent=11 // pred_check
          %p234 = pneg %p163
        $region22: #{bottleneck_forward.5} parent=11 // pred_check_branch
          %236 = sbr.rel (%p234) target = $region24
        $region23: #{bottleneck_forward.5} parent=11 // pred_region
          %s238 = ssub.s32 2048, 2048
          %239 = vsyncadd [#allocation9], %s238
          %s240 = smul.addr %s30, 128
          %s241 = scalar_lea.hbm %s4, %s240
          %s242 = sshll.u32 [#allocation10], 4
          %s243 = int_to_ptr.vmem [resolvable:$true] %s242
          %248 = dma.hbm_to_vmem [thread:$0]  %s241, 2048, %s243, [#allocation9], 128, 128, 8
        $region24: #{bottleneck_forward.5} parent=11 // pred_fallthru
          _
      $region12: #{bottleneck_forward.5} parent=5 // pred_fallthru
        _
      %p249 = scmp.lt.s32.totalorder %s21, 2
      // Predicated region
      $region25: #{bottleneck_forward.5} parent=5 // pred_check
        %p250 = pneg %p249
      $region26: #{bottleneck_forward.5} parent=5 // pred_check_branch
        %252 = sbr.rel (%p250) target = $region28
      $region27: #{bottleneck_forward.5} parent=5 // pred_region
        // Predicated region
        $region29: #{bottleneck_forward.5} parent=27 // pred_check
          %p253 = pneg %p53
        $region30: #{bottleneck_forward.5} parent=27 // pred_check_branch
          %255 = sbr.rel (%p253) target = $region32
        $region31: #{bottleneck_forward.5} parent=27 // pred_region
          %s256 = sand.u32 %s43, 1
          %s257 = scalar_lea.sflag [#allocation3], %s256
          %s258 = sand.u32 %s43, 1
          %s259 = smul.addr %s258, 64
          %s260 = scalar_lea.vmem [#allocation2], %s259
          %s261 = smul.u32 8, %s29
          %s263 = ssub.s32 1024, 1024
          %264 = vsyncadd %s257, %s263
          %s265 = smul.addr %s261, 128
          %s266 = scalar_lea.hbm %s0, %s265
          %s267 = sshll.u32 %s260, 4
          %s268 = int_to_ptr.vmem [resolvable:$true] %s267
          %273 = dma.hbm_to_vmem [thread:$0]  %s266, 1024, %s268, %s257, 128, 128, 8
        $region32: #{bottleneck_forward.5} parent=27 // pred_fallthru
          _
        // Predicated region
        $region33: #{bottleneck_forward.5} parent=27 // pred_check
          %p274 = pneg %p131
        $region34: #{bottleneck_forward.5} parent=27 // pred_check_branch
          %276 = sbr.rel (%p274) target = $region36
        $region35: #{bottleneck_forward.5} parent=27 // pred_region
          %s277 = sand.u32 %s21, 1
          %s278 = scalar_lea.sflag [#allocation9], %s277
          %s279 = sand.u32 %s121, 1
          %s280 = smul.addr %s279, 64
          %s281 = scalar_lea.vmem [#allocation8], %s280
          %s282 = smul.u32 8, %s29
          %s284 = ssub.s32 1024, 1024
          %285 = vsyncadd %s278, %s284
          %s286 = smul.addr %s282, 128
          %s287 = scalar_lea.hbm %s3, %s286
          %s288 = sshll.u32 %s281, 4
          %s289 = int_to_ptr.vmem [resolvable:$true] %s288
          %294 = dma.hbm_to_vmem [thread:$0]  %s287, 1024, %s289, %s278, 128, 128, 8
        $region36: #{bottleneck_forward.5} parent=27 // pred_fallthru
          _
      $region28: #{bottleneck_forward.5} parent=5 // pred_fallthru
        _
      %p295 = scmp.le.s32.totalorder 1, %s21
      %p296 = scmp.lt.s32.totalorder %s21, 3
      %p297 = pnand %p295, %p296
      %p298 = pneg %p297
      // Predicated region
      $region37: #{bottleneck_forward.5} parent=5 // pred_check
        _
      $region38: #{bottleneck_forward.5} parent=5 // pred_check_branch
        %300 = sbr.rel (%p297) target = $region40
      $region39: #{bottleneck_forward.5} parent=5 // pred_region
        %s301 = ssub.s32 %s21, 1
        %s302 = sand.u32 %s46, 1
        %s303 = scalar_lea.sflag [#allocation3], %s302
        %s304 = sand.u32 %s46, 1
        %s305 = smul.addr %s304, 64
        %s306 = scalar_lea.vmem [#allocation2], %s305
        // Predicated region
        $region41: #{bottleneck_forward.5} parent=39 // pred_check
          %p307 = pneg %p59
        $region42: #{bottleneck_forward.5} parent=39 // pred_check_branch
          %309 = sbr.rel (%p307) target = $region44
        $region43: #{bottleneck_forward.5} parent=39 // pred_region
          %310 = dma.done %s303, 1024
        $region44: #{bottleneck_forward.5} parent=39 // pred_fallthru
          _
        // Predicated region
        $region45: #{bottleneck_forward.5} parent=39 // pred_check
          %p311 = pneg %p85
        $region46: #{bottleneck_forward.5} parent=39 // pred_check_branch
          %313 = sbr.rel (%p311) target = $region48
        $region47: #{bottleneck_forward.5} parent=39 // pred_region
          %314 = dma.done [#allocation6], 2048
        $region48: #{bottleneck_forward.5} parent=39 // pred_fallthru
          _
        // Predicated region
        $region49: #{bottleneck_forward.5} parent=39 // pred_check
          %p315 = pneg %p111
        $region50: #{bottleneck_forward.5} parent=39 // pred_check_branch
          %317 = sbr.rel (%p315) target = $region52
        $region51: #{bottleneck_forward.5} parent=39 // pred_region
          %318 = dma.done [#allocation6], 16
        $region52: #{bottleneck_forward.5} parent=39 // pred_fallthru
          _
        %s319 = sand.u32 %s26, 1
        %s320 = scalar_lea.sflag [#allocation9], %s319
        %s321 = sand.u32 %s124, 1
        %s322 = smul.addr %s321, 64
        %s323 = scalar_lea.vmem [#allocation8], %s322
        // Predicated region
        $region53: #{bottleneck_forward.5} parent=39 // pred_check
          %p324 = pneg %p137
        $region54: #{bottleneck_forward.5} parent=39 // pred_check_branch
          %326 = sbr.rel (%p324) target = $region56
        $region55: #{bottleneck_forward.5} parent=39 // pred_region
          %327 = dma.done %s320, 1024
        $region56: #{bottleneck_forward.5} parent=39 // pred_fallthru
          _
        // Predicated region
        $region57: #{bottleneck_forward.5} parent=39 // pred_check
          %p328 = pneg %p163
        $region58: #{bottleneck_forward.5} parent=39 // pred_check_branch
          %330 = sbr.rel (%p328) target = $region60
        $region59: #{bottleneck_forward.5} parent=39 // pred_region
          %331 = dma.done [#allocation9], 2048
        $region60: #{bottleneck_forward.5} parent=39 // pred_fallthru
          _
        %s332 = sand.u32 %s46, 1
        %s333 = scalar_lea.sflag [#allocation3], %s332
        %s334 = sand.u32 %s46, 1
        %s335 = smul.addr %s334, 64
        %s336 = scalar_lea.vmem [#allocation2], %s335
        %p337 = pneg %p59
        %p338 = pneg %p56
        %p339 = pneg %p85
        %p340 = pneg %p82
        %p341 = pneg %p111
        %p342 = pneg %p108
        %s343 = sand.u32 %s26, 1
        %s344 = scalar_lea.sflag [#allocation9], %s343
        %s345 = sand.u32 %s124, 1
        %s346 = smul.addr %s345, 64
        %s347 = scalar_lea.vmem [#allocation8], %s346
        %p348 = pneg %p137
        %p349 = pneg %p134
        %p350 = pneg %p163
        %p351 = pneg %p160
        %p352 = pneg %p191
        %p353 = pneg %p188
        %s354 = sand.u32 %s178, 1
        %s355 = scalar_lea.sflag [#allocation4], %s354
        %s356 = sand.u32 %s178, 1
        %s357 = smul.addr %s356, 64
        %s358 = scalar_lea.vmem [#allocation11], %s357
        %s359 = smul.u32 8, %s31
        %s360 = smul.u32 8, %s31
        %s361 = smul.u32 8, %s31
        %v362 = vld [vmem:[%s306] sm:$0xff]
        %v363 = vld [vmem:[%s306 + $0x8] sm:$0xff]
        %v364 = vld [vmem:[%s306 + $0x10] sm:$0xff]
        %v365 = vld [vmem:[%s306 + $0x18] sm:$0xff]
        %v366 = vld [vmem:[%s306 + $0x20] sm:$0xff]
        %v367 = vld [vmem:[%s306 + $0x28] sm:$0xff]
        %v368 = vld [vmem:[%s306 + $0x30] sm:$0xff]
        %v369 = vld [vmem:[%s306 + $0x38] sm:$0xff]
        %v370 = vld [vmem:[#allocation5] sm:$0xff]
        %v371 = vld [vmem:[#allocation5 + $0x8] sm:$0xff]
        %v372 = vld [vmem:[#allocation5 + $0x10] sm:$0xff]
        %v373 = vld [vmem:[#allocation5 + $0x18] sm:$0xff]
        %v374 = vld [vmem:[#allocation5 + $0x20] sm:$0xff]
        %v375 = vld [vmem:[#allocation5 + $0x28] sm:$0xff]
        %v376 = vld [vmem:[#allocation5 + $0x30] sm:$0xff]
        %v377 = vld [vmem:[#allocation5 + $0x38] sm:$0xff]
        %v378 = vld [vmem:[#allocation5 + $0x40] sm:$0xff]
        %v379 = vld [vmem:[#allocation5 + $0x48] sm:$0xff]
        %v380 = vld [vmem:[#allocation5 + $0x50] sm:$0xff]
        %v381 = vld [vmem:[#allocation5 + $0x58] sm:$0xff]
        %v382 = vld [vmem:[#allocation5 + $0x60] sm:$0xff]
        %v383 = vld [vmem:[#allocation5 + $0x68] sm:$0xff]
        %v384 = vld [vmem:[#allocation5 + $0x70] sm:$0xff]
        %v385 = vld [vmem:[#allocation5 + $0x78] sm:$0xff]
        %v386 = vld [vmem:[%s323] sm:$0xff]
        %v387 = vld [vmem:[%s323 + $0x8] sm:$0xff]
        %v388 = vld [vmem:[%s323 + $0x10] sm:$0xff]
        %v389 = vld [vmem:[%s323 + $0x18] sm:$0xff]
        %v390 = vld [vmem:[%s323 + $0x20] sm:$0xff]
        %v391 = vld [vmem:[%s323 + $0x28] sm:$0xff]
        %v392 = vld [vmem:[%s323 + $0x30] sm:$0xff]
        %v393 = vld [vmem:[%s323 + $0x38] sm:$0xff]
        %v394 = vld [vmem:[#allocation10] sm:$0xff]
        %v395 = vld [vmem:[#allocation10 + $0x8] sm:$0xff]
        %v396 = vld [vmem:[#allocation10 + $0x10] sm:$0xff]
        %v397 = vld [vmem:[#allocation10 + $0x18] sm:$0xff]
        %v398 = vld [vmem:[#allocation10 + $0x20] sm:$0xff]
        %v399 = vld [vmem:[#allocation10 + $0x28] sm:$0xff]
        %v400 = vld [vmem:[#allocation10 + $0x30] sm:$0xff]
        %v401 = vld [vmem:[#allocation10 + $0x38] sm:$0xff]
        %v402 = vld [vmem:[#allocation10 + $0x40] sm:$0xff]
        %v403 = vld [vmem:[#allocation10 + $0x48] sm:$0xff]
        %v404 = vld [vmem:[#allocation10 + $0x50] sm:$0xff]
        %v405 = vld [vmem:[#allocation10 + $0x58] sm:$0xff]
        %v406 = vld [vmem:[#allocation10 + $0x60] sm:$0xff]
        %v407 = vld [vmem:[#allocation10 + $0x68] sm:$0xff]
        %v408 = vld [vmem:[#allocation10 + $0x70] sm:$0xff]
        %v409 = vld [vmem:[#allocation10 + $0x78] sm:$0xff]
        %410 = vmatprep.subr.mxu0 0.0
        %411 = vmatpush1.msra.mxu0 %v394
        %412 = vmatprep.subr.mxu0 0.0
        %413 = vmatpush1.msra.mxu0 %v395
        %414 = vmatprep.subr.mxu0 0.0
        %415 = vmatpush1.msra.mxu0 %v396
        %416 = vmatprep.subr.mxu0 0.0
        %417 = vmatpush1.msra.mxu0 %v397
        %418 = vmatprep.subr.mxu0 0.0
        %419 = vmatpush1.msra.mxu0 %v398
        %420 = vmatprep.subr.mxu0 0.0
        %421 = vmatpush1.msra.mxu0 %v399
        %422 = vmatprep.subr.mxu0 0.0
        %423 = vmatpush1.msra.mxu0 %v400
        %424 = vmatprep.subr.mxu0 0.0
        %425 = vmatpush1.msra.mxu0 %v401
        %426 = vmatprep.subr.mxu0 0.0
        %427 = vmatpush1.msra.mxu0 %v402
        %428 = vmatprep.subr.mxu0 0.0
        %429 = vmatpush1.msra.mxu0 %v403
        %430 = vmatprep.subr.mxu0 0.0
        %431 = vmatpush1.msra.mxu0 %v404
        %432 = vmatprep.subr.mxu0 0.0
        %433 = vmatpush1.msra.mxu0 %v405
        %434 = vmatprep.subr.mxu0 0.0
        %435 = vmatpush1.msra.mxu0 %v406
        %436 = vmatprep.subr.mxu0 0.0
        %437 = vmatpush1.msra.mxu0 %v407
        %438 = vmatprep.subr.mxu0 0.0
        %439 = vmatpush1.msra.mxu0 %v408
        %440 = vmatprep.subr.mxu0 0.0
        %441 = vmatpush1.msra.mxu0 %v409
        %442 = vmatprep.subr.mxu0 0.0
        %443 = vmatpush1.msra.mxu0 0.0
        %444 = vmatprep.subr.mxu0 0.0
        %445 = vmatpush1.msra.mxu0 0.0
        %446 = vmatprep.subr.mxu0 0.0
        %447 = vmatpush1.msra.mxu0 0.0
        %448 = vmatprep.subr.mxu0 0.0
        %449 = vmatpush1.msra.mxu0 0.0
        %450 = vmatprep.subr.mxu0 0.0
        %451 = vmatpush1.msra.mxu0 0.0
        %452 = vmatprep.subr.mxu0 0.0
        %453 = vmatpush1.msra.mxu0 0.0
        %454 = vmatprep.subr.mxu0 0.0
        %455 = vmatpush1.msra.mxu0 0.0
        %456 = vmatprep.subr.mxu0 0.0
        %457 = vmatpush1.msra.mxu0 0.0
        %458 = vmatprep.subr.mxu0 0.0
        %459 = vmatpush1.msra.mxu0 0.0
        %460 = vmatprep.subr.mxu0 0.0
        %461 = vmatpush1.msra.mxu0 0.0
        %462 = vmatprep.subr.mxu0 0.0
        %463 = vmatpush1.msra.mxu0 0.0
        %464 = vmatprep.subr.mxu0 0.0
        %465 = vmatpush1.msra.mxu0 0.0
        %466 = vmatprep.subr.mxu0 0.0
        %467 = vmatpush1.msra.mxu0 0.0
        %468 = vmatprep.subr.mxu0 0.0
        %469 = vmatpush1.msra.mxu0 0.0
        %470 = vmatprep.subr.mxu0 0.0
        %471 = vmatpush1.msra.mxu0 0.0
        %472 = vmatprep.subr.mxu0 0.0
        %473 = vmatpush1.msra.mxu0 0.0
        %474 = vmatprep.mubr.f32.mxu0 0.0
        %475 = vmatmul.mubr.f32.gmra.mrb[0].mxu0 %v386
        %v476 = vpop.f32.mrb[0].mxu0
        %v477 = vadd.f32 0.0, %v476
        %v478 = vpop.f32.mrb[0].mxu0
        %479 = vmatprep.mubr.f32.mxu0 0.0
        %480 = vmatmul.mubr.f32.gmra.mrb[0].mxu0 %v387
        %v481 = vpop.f32.mrb[0].mxu0
        %v482 = vadd.f32 0.0, %v481
        %v483 = vpop.f32.mrb[0].mxu0
        %484 = vmatprep.mubr.f32.mxu0 0.0
        %485 = vmatmul.mubr.f32.gmra.mrb[0].mxu0 %v388
        %v486 = vpop.f32.mrb[0].mxu0
        %v487 = vadd.f32 0.0, %v486
        %v488 = vpop.f32.mrb[0].mxu0
        %489 = vmatprep.mubr.f32.mxu0 0.0
        %490 = vmatmul.mubr.f32.gmra.mrb[0].mxu0 %v389
        %v491 = vpop.f32.mrb[0].mxu0
        %v492 = vadd.f32 0.0, %v491
        %v493 = vpop.f32.mrb[0].mxu0
        %494 = vmatprep.mubr.f32.mxu0 0.0
        %495 = vmatmul.mubr.f32.gmra.mrb[0].mxu0 %v390
        %v496 = vpop.f32.mrb[0].mxu0
        %v497 = vadd.f32 0.0, %v496
        %v498 = vpop.f32.mrb[0].mxu0
        %499 = vmatprep.mubr.f32.mxu0 0.0
        %500 = vmatmul.mubr.f32.gmra.mrb[0].mxu0 %v391
        %v501 = vpop.f32.mrb[0].mxu0
        %v502 = vadd.f32 0.0, %v501
        %v503 = vpop.f32.mrb[0].mxu0
        %504 = vmatprep.mubr.f32.mxu0 0.0
        %505 = vmatmul.mubr.f32.gmra.mrb[0].mxu0 %v392
        %v506 = vpop.f32.mrb[0].mxu0
        %v507 = vadd.f32 0.0, %v506
        %v508 = vpop.f32.mrb[0].mxu0
        %509 = vmatprep.mubr.f32.mxu0 0.0
        %510 = vmatmul.mubr.f32.gmra.mrb[0].mxu0 %v393
        %v511 = vpop.f32.mrb[0].mxu0
        %v512 = vadd.f32 0.0, %v511
        %v513 = vpop.f32.mrb[0].mxu0
        %514 = vdwg.mxu0
        %515 = vmatprep.subr.mxu0 0.0
        %516 = vmatpush1.msra.mxu0 %v370
        %517 = vmatprep.subr.mxu0 0.0
        %518 = vmatpush1.msra.mxu0 %v371
        %519 = vmatprep.subr.mxu0 0.0
        %520 = vmatpush1.msra.mxu0 %v372
        %521 = vmatprep.subr.mxu0 0.0
        %522 = vmatpush1.msra.mxu0 %v373
        %523 = vmatprep.subr.mxu0 0.0
        %524 = vmatpush1.msra.mxu0 %v374
        %525 = vmatprep.subr.mxu0 0.0
        %526 = vmatpush1.msra.mxu0 %v375
        %527 = vmatprep.subr.mxu0 0.0
        %528 = vmatpush1.msra.mxu0 %v376
        %529 = vmatprep.subr.mxu0 0.0
        %530 = vmatpush1.msra.mxu0 %v377
        %531 = vmatprep.subr.mxu0 0.0
        %532 = vmatpush1.msra.mxu0 %v378
        %533 = vmatprep.subr.mxu0 0.0
        %534 = vmatpush1.msra.mxu0 %v379
        %535 = vmatprep.subr.mxu0 0.0
        %536 = vmatpush1.msra.mxu0 %v380
        %537 = vmatprep.subr.mxu0 0.0
        %538 = vmatpush1.msra.mxu0 %v381
        %539 = vmatprep.subr.mxu0 0.0
        %540 = vmatpush1.msra.mxu0 %v382
        %541 = vmatprep.subr.mxu0 0.0
        %542 = vmatpush1.msra.mxu0 %v383
        %543 = vmatprep.subr.mxu0 0.0
        %544 = vmatpush1.msra.mxu0 %v384
        %545 = vmatprep.subr.mxu0 0.0
        %546 = vmatpush1.msra.mxu0 %v385
        %547 = vmatprep.subr.mxu0 0.0
        %548 = vmatpush1.msra.mxu0 0.0
        %549 = vmatprep.subr.mxu0 0.0
        %550 = vmatpush1.msra.mxu0 0.0
        %551 = vmatprep.subr.mxu0 0.0
        %552 = vmatpush1.msra.mxu0 0.0
        %553 = vmatprep.subr.mxu0 0.0
        %554 = vmatpush1.msra.mxu0 0.0
        %555 = vmatprep.subr.mxu0 0.0
        %556 = vmatpush1.msra.mxu0 0.0
        %557 = vmatprep.subr.mxu0 0.0
        %558 = vmatpush1.msra.mxu0 0.0
        %559 = vmatprep.subr.mxu0 0.0
        %560 = vmatpush1.msra.mxu0 0.0
        %561 = vmatprep.subr.mxu0 0.0
        %562 = vmatpush1.msra.mxu0 0.0
        %563 = vmatprep.subr.mxu0 0.0
        %564 = vmatpush1.msra.mxu0 0.0
        %565 = vmatprep.subr.mxu0 0.0
        %566 = vmatpush1.msra.mxu0 0.0
        %567 = vmatprep.subr.mxu0 0.0
        %568 = vmatpush1.msra.mxu0 0.0
        %569 = vmatprep.subr.mxu0 0.0
        %570 = vmatpush1.msra.mxu0 0.0
        %571 = vmatprep.subr.mxu0 0.0
        %572 = vmatpush1.msra.mxu0 0.0
        %573 = vmatprep.subr.mxu0 0.0
        %574 = vmatpush1.msra.mxu0 0.0
        %575 = vmatprep.subr.mxu0 0.0
        %576 = vmatpush1.msra.mxu0 0.0
        %577 = vmatprep.subr.mxu0 0.0
        %578 = vmatpush1.msra.mxu0 0.0
        %579 = vmatprep.mubr.f32.mxu0 0.0
        %580 = vmatmul.mubr.f32.gmra.mrb[0].mxu0 %v362
        %v581 = vpop.f32.mrb[0].mxu0
        %v582 = vadd.f32 %v477, %v581
        %v583 = vpop.f32.mrb[0].mxu0
        %584 = vmatprep.mubr.f32.mxu0 0.0
        %585 = vmatmul.mubr.f32.gmra.mrb[0].mxu0 %v363
        %v586 = vpop.f32.mrb[0].mxu0
        %v587 = vadd.f32 %v482, %v586
        %v588 = vpop.f32.mrb[0].mxu0
        %589 = vmatprep.mubr.f32.mxu0 0.0
        %590 = vmatmul.mubr.f32.gmra.mrb[0].mxu0 %v364
        %v591 = vpop.f32.mrb[0].mxu0
        %v592 = vadd.f32 %v487, %v591
        %v593 = vpop.f32.mrb[0].mxu0
        %594 = vmatprep.mubr.f32.mxu0 0.0
        %595 = vmatmul.mubr.f32.gmra.mrb[0].mxu0 %v365
        %v596 = vpop.f32.mrb[0].mxu0
        %v597 = vadd.f32 %v492, %v596
        %v598 = vpop.f32.mrb[0].mxu0
        %599 = vmatprep.mubr.f32.mxu0 0.0
        %600 = vmatmul.mubr.f32.gmra.mrb[0].mxu0 %v366
        %v601 = vpop.f32.mrb[0].mxu0
        %v602 = vadd.f32 %v497, %v601
        %v603 = vpop.f32.mrb[0].mxu0
        %604 = vmatprep.mubr.f32.mxu0 0.0
        %605 = vmatmul.mubr.f32.gmra.mrb[0].mxu0 %v367
        %v606 = vpop.f32.mrb[0].mxu0
        %v607 = vadd.f32 %v502, %v606
        %v608 = vpop.f32.mrb[0].mxu0
        %609 = vmatprep.mubr.f32.mxu0 0.0
        %610 = vmatmul.mubr.f32.gmra.mrb[0].mxu0 %v368
        %v611 = vpop.f32.mrb[0].mxu0
        %v612 = vadd.f32 %v507, %v611
        %v613 = vpop.f32.mrb[0].mxu0
        %614 = vmatprep.mubr.f32.mxu0 0.0
        %615 = vmatmul.mubr.f32.gmra.mrb[0].mxu0 %v369
        %v616 = vpop.f32.mrb[0].mxu0
        %v617 = vadd.f32 %v512, %v616
        %v618 = vpop.f32.mrb[0].mxu0
        %619 = vdwg.mxu0
        %v620 = vld [vmem:[#allocation7] sm:$0x1]
        %v622 = vlaneseq
        %v623 = vshrl.u32 %v622, 7
        %v624 = vsub.s32 0, %v623
        %v625 = vrot.slane %v620, %v624
        %v627 = vadd.f32 %v582, %v625
        %v628 = vadd.f32 %v587, %v625
        %v629 = vadd.f32 %v592, %v625
        %v630 = vadd.f32 %v597, %v625
        %v631 = vadd.f32 %v602, %v625
        %v632 = vadd.f32 %v607, %v625
        %v633 = vadd.f32 %v612, %v625
        %v634 = vadd.f32 %v617, %v625
        %v635 = vmax.f32 %v627, 0.0
        %v636 = vmax.f32 %v628, 0.0
        %v637 = vmax.f32 %v629, 0.0
        %v638 = vmax.f32 %v630, 0.0
        %v639 = vmax.f32 %v631, 0.0
        %v640 = vmax.f32 %v632, 0.0
        %v641 = vmax.f32 %v633, 0.0
        %v642 = vmax.f32 %v634, 0.0
        %v643 = vmin.f32 %v635, 6.0
        %v644 = vmin.f32 %v636, 6.0
        %v645 = vmin.f32 %v637, 6.0
        %v646 = vmin.f32 %v638, 6.0
        %v647 = vmin.f32 %v639, 6.0
        %v648 = vmin.f32 %v640, 6.0
        %v649 = vmin.f32 %v641, 6.0
        %v650 = vmin.f32 %v642, 6.0
        %651 = vst [vmem:[%s358] sm:$0xff] %v643
        %652 = vst [vmem:[%s358 + $0x8] sm:$0xff] %v644
        %653 = vst [vmem:[%s358 + $0x10] sm:$0xff] %v645
        %654 = vst [vmem:[%s358 + $0x18] sm:$0xff] %v646
        %655 = vst [vmem:[%s358 + $0x20] sm:$0xff] %v647
        %656 = vst [vmem:[%s358 + $0x28] sm:$0xff] %v648
        %657 = vst [vmem:[%s358 + $0x30] sm:$0xff] %v649
        %658 = vst [vmem:[%s358 + $0x38] sm:$0xff] %v650
        %s659 = sand.u32 %s178, 1
        %s660 = scalar_lea.sflag [#allocation4], %s659
        %s661 = sand.u32 %s178, 1
        %s662 = smul.addr %s661, 64
        %s663 = scalar_lea.vmem [#allocation11], %s662
        // Predicated region
        $region61: #{bottleneck_forward.5} parent=39 // pred_check
          %p664 = pneg %p188
        $region62: #{bottleneck_forward.5} parent=39 // pred_check_branch
          %666 = sbr.rel (%p664) target = $region64
        $region63: #{bottleneck_forward.5} parent=39 // pred_region
          %s667 = smul.u32 8, %s31
          %s669 = ssub.s32 1024, 1024
          %670 = vsyncadd %s660, %s669
          %s671 = sadd.s32 %s30, %s667
          %s672 = smul.addr %s671, 128
          %s673 = scalar_lea.hbm %s5, %s672
          %s674 = sshll.u32 %s663, 4
          %s675 = int_to_ptr.vmem [resolvable:$true] %s674
          %680 = dma.vmem_to_hbm [thread:$0]  %s675, 1024, %s673, %s660, 128, 128, 8
        $region64: #{bottleneck_forward.5} parent=39 // pred_fallthru
          _
      $region40: #{bottleneck_forward.5} parent=5 // pred_fallthru
        _
      %p681 = scmp.le.s32.totalorder 2, %s21
      // Predicated region
      $region65: #{bottleneck_forward.5} parent=5 // pred_check
        %p682 = pneg %p681
      $region66: #{bottleneck_forward.5} parent=5 // pred_check_branch
        %684 = sbr.rel (%p682) target = $region68
      $region67: #{bottleneck_forward.5} parent=5 // pred_region
        %s685 = ssub.s32 %s21, 2
        // Predicated region
        $region69: #{bottleneck_forward.5} parent=67 // pred_check
          %p686 = pneg %p194
        $region70: #{bottleneck_forward.5} parent=67 // pred_check_branch
          %688 = sbr.rel (%p686) target = $region72
        $region71: #{bottleneck_forward.5} parent=67 // pred_region
          %s689 = sand.u32 %s179, 1
          %s690 = scalar_lea.sflag [#allocation4], %s689
          %s691 = sand.u32 %s179, 1
          %s692 = smul.addr %s691, 64
          %s693 = scalar_lea.vmem [#allocation11], %s692
          %694 = dma.done %s690, 1024
        $region72: #{bottleneck_forward.5} parent=67 // pred_fallthru
          _
      $region68: #{bottleneck_forward.5} parent=5 // pred_fallthru
        _
    $region6: #{bottleneck_forward.5} parent=1 // loop_footer
      %s25 = sadd.s32 1, %s21
    $region7: #{bottleneck_forward.5} parent=1 // loop_footer_branch
      %20 = sbr.rel target = $region3
    $region8: #{bottleneck_forward.5} parent=1 // loop_exit
      _
    %695 = vsyncpa [#allocation3], 1
    %s696 = scalar_lea.sflag [#allocation3], 1
    %697 = vsyncpa %s696, 1
    %698 = vsyncpa [#allocation6], 1
    %699 = vsyncpa [#allocation9], 1
    %s700 = scalar_lea.sflag [#allocation9], 1
    %701 = vsyncpa %s700, 1
    %702 = vsyncpa [#allocation4], 1
    %s703 = scalar_lea.sflag [#allocation4], 1
    %704 = vsyncpa %s703, 1

// kernel: bottleneck_forward.4
$region0: #{bottleneck_forward.4}
  #allocation0 [shape = 'u32[]', space=smem, size = 0x4, offset = 0x4, fixed_abs, tag = 'smem constant byte address 0x4 - core index']
  #allocation1 [shape = 'u32[144,128]{1,0:T(1,128)}', space=vmem, size = 0x12000, scoped, tag = 'internal scratch']
  %s0 = inlined_call_operand.hbm [shape: f32[2,10,10,128], index: 0, kind: input, shape index: {}]
  %s1 = inlined_call_operand.hbm [shape: f32[3,3,128,128], index: 1, kind: input, shape index: {}]
  %s2 = inlined_call_operand.hbm [shape: f32[1,128], index: 2, kind: input, shape index: {}]
  %s3 = inlined_call_operand.hbm [shape: f32[128,128], index: 3, kind: output, shape index: {}]
  %s4 = sld [smem:[#allocation0]]
  $region57: #{bottleneck_forward.4} parent=0
    _
  %s6 = ssub.s32 1, %s4
  %s7 = scalar_select 0, %s6, %s4
  $region1: #{bottleneck_forward.4} parent=0
    #allocation2 [shape = 'u8[163840]{0}', space=vmem, size = 0x28000, scoped, tag = 'input window, operand 0']
    #allocation3 [shape = 's32[2]{0}', space=sflag, size = 0x8, scoped, tag = 'scoped memory for bottleneck_forward.4']
    #allocation4 [shape = 's32[2]{0}', space=sflag, size = 0x8, scoped, tag = 'scoped memory for bottleneck_forward.4']
    #allocation5 [shape = 'u8[589824]{0}', space=vmem, size = 0x90000, scoped, tag = 'input window, operand 1, single buffered']
    #allocation6 [shape = 's32[1]{0}', space=sflag, size = 0x4, scoped, tag = 'scoped memory for bottleneck_forward.4']
    #allocation7 [shape = 'u8[512]{0}', space=vmem, size = 0x400, scoped, tag = 'input window, operand 2, single buffered']
    #allocation8 [shape = 'u8[65536]{0}', space=vmem, size = 0x10000, scoped, tag = 'output window, operand 0']
    %8 = vsyncpa [#allocation3], 0
    %s9 = scalar_lea.sflag [#allocation3], 1
    %10 = vsyncpa %s9, 0
    %11 = vsyncpa [#allocation6], 0
    %12 = vsyncpa [#allocation4], 0
    %s13 = scalar_lea.sflag [#allocation4], 1
    %14 = vsyncpa %s13, 0
    loop: start=0, step=1, limit=4
    $region2: #{bottleneck_forward.4} parent=1 // loop_pre_header
      _
    $region3: #{bottleneck_forward.4} parent=1 // loop_header
      %s16 = sphi 0, %s20
      %p17 = scmp.ge.s32.totalorder %s16, 4
      %s23 = sphi 0, %s35
      %s24 = sphi 0, %s31
      %s25 = sphi 0, %s23
      %s26 = sphi 0, %s24
      %s27 = sphi 0, %s25
      %s28 = sphi 0, %s26
      %s38 = sphi 0, %s40
      %s41 = sphi 0, %s38
      %s42 = sphi 0, %s41
      %s58 = sphi 0, %s42
      %s62 = sphi 0, %s62
      %s64 = sphi 0, %s62
      %s65 = sphi 0, %s64
      %s79 = sphi 0, %s65
      %s83 = sphi 0, %s83
      %s85 = sphi 0, %s83
      %s86 = sphi 0, %s85
      %s100 = sphi 0, %s86
      %s108 = sphi 0, %s110
      %s111 = sphi 0, %s108
      %s112 = sphi 0, %s111
      %s128 = sphi 0, %s112
    $region4: #{bottleneck_forward.4} parent=1 // loop_header_branch
      %19 = sbr.rel (%p17) target = $region8
    $region5: #{bottleneck_forward.4} parent=1 // loop_body
      %s21 = ssub.s32 %s16, 1
      %s22 = ssub.s32 %s16, 2
      %s29 = sadd.s32 1, %s24
      %p30 = scmp.ge.s32.totalorder %s29, 1
      %s31 = scalar_select %p30, 0, %s29
      %s32 = sadd.s32 1, %s23
      %s33 = scalar_select %p30, %s32, %s23
      %p34 = scmp.ge.s32.totalorder %s33, 2
      %s35 = scalar_select %p34, 0, %s33
      %s36 = ssub.s32 %s23, %s35
      %p37 = scmp.eq.s32.totalorder %s36, 0
      %s39 = sadd.s32 %s38, 1
      %s40 = scalar_select %p37, %s38, %s39
      %p43 = pneg %p37
      %p44 = scmp.eq.s32.totalorder %s16, 1
      %p45 = por %p43, %p44
      %p46 = scmp.ne.s32.totalorder %s38, %s41
      %p47 = scmp.eq.s32.totalorder %s16, 0
      %p48 = por %p46, %p47
      %p49 = scmp.ne.s32.totalorder %s38, %s41
      %p50 = scmp.eq.s32.totalorder %s21, 1
      %p51 = por %p49, %p50
      %p52 = scmp.ne.s32.totalorder %s41, %s42
      %p53 = scmp.eq.s32.totalorder %s21, 0
      %p54 = por %p52, %p53
      %p55 = scmp.ne.s32.totalorder %s41, %s42
      %p56 = scmp.eq.s32.totalorder %s22, 1
      %p57 = por %p55, %p56
      %p59 = scmp.ne.s32.totalorder %s42, %s58
      %p60 = scmp.eq.s32.totalorder %s22, 0
      %p61 = por %p59, %p60
      %s63 = sadd.s32 %s62, 1
      %p66 = scmp.eq.s32.totalorder %s16, 1
      %p67 = scmp.ne.s32.totalorder %s62, %s64
      %p68 = scmp.eq.s32.totalorder %s16, 0
      %p69 = por %p67, %p68
      %p70 = scmp.ne.s32.totalorder %s62, %s64
      %p71 = scmp.eq.s32.totalorder %s21, 1
      %p72 = por %p70, %p71
      %p73 = scmp.ne.s32.totalorder %s64, %s65
      %p74 = scmp.eq.s32.totalorder %s21, 0
      %p75 = por %p73, %p74
      %p76 = scmp.ne.s32.totalorder %s64, %s65
      %p77 = scmp.eq.s32.totalorder %s22, 1
      %p78 = por %p76, %p77
      %p80 = scmp.ne.s32.totalorder %s65, %s79
      %p81 = scmp.eq.s32.totalorder %s22, 0
      %p82 = por %p80, %p81
      %s84 = sadd.s32 %s83, 1
      %p87 = scmp.eq.s32.totalorder %s16, 1
      %p88 = scmp.ne.s32.totalorder %s83, %s85
      %p89 = scmp.eq.s32.totalorder %s16, 0
      %p90 = por %p88, %p89
      %p91 = scmp.ne.s32.totalorder %s83, %s85
      %p92 = scmp.eq.s32.totalorder %s21, 1
      %p93 = por %p91, %p92
      %p94 = scmp.ne.s32.totalorder %s85, %s86
      %p95 = scmp.eq.s32.totalorder %s21, 0
      %p96 = por %p94, %p95
      %p97 = scmp.ne.s32.totalorder %s85, %s86
      %p98 = scmp.eq.s32.totalorder %s22, 1
      %p99 = por %p97, %p98
      %p101 = scmp.ne.s32.totalorder %s86, %s100
      %p102 = scmp.eq.s32.totalorder %s22, 0
      %p103 = por %p101, %p102
      %s104 = sadd.s32 %s23, %s24
      %s105 = sadd.s32 %s35, %s31
      %s106 = ssub.s32 %s104, %s105
      %p107 = scmp.eq.s32.totalorder %s106, 0
      %s109 = sadd.s32 %s108, 1
      %s110 = scalar_select %p107, %s108, %s109
      %p113 = pneg %p107
      %p114 = scmp.eq.s32.totalorder %s16, 1
      %p115 = por %p113, %p114
      %p116 = scmp.ne.s32.totalorder %s108, %s111
      %p117 = scmp.eq.s32.totalorder %s16, 0
      %p118 = por %p116, %p117
      %p119 = scmp.ne.s32.totalorder %s108, %s111
      %p120 = scmp.eq.s32.totalorder %s21, 1
      %p121 = por %p119, %p120
      %p122 = scmp.ne.s32.totalorder %s111, %s112
      %p123 = scmp.eq.s32.totalorder %s21, 0
      %p124 = por %p122, %p123
      %p125 = scmp.ne.s32.totalorder %s111, %s112
      %p126 = scmp.eq.s32.totalorder %s22, 1
      %p127 = por %p125, %p126
      %p129 = scmp.ne.s32.totalorder %s112, %s128
      %p130 = scmp.eq.s32.totalorder %s22, 0
      %p131 = por %p129, %p130
      %p132 = scmp.le.s32.totalorder 1, %s16
      %p133 = scmp.lt.s32.totalorder %s16, 3
      %p134 = pnand %p132, %p133
      %p135 = pneg %p134
      // Predicated region
      $region9: #{bottleneck_forward.4} parent=5 // pred_check
        _
      $region10: #{bottleneck_forward.4} parent=5 // pred_check_branch
        %137 = sbr.rel (%p134) target = $region12
      $region11: #{bottleneck_forward.4} parent=5 // pred_region
        %s138 = ssub.s32 %s16, 1
        // Predicated region
        $region13: #{bottleneck_forward.4} parent=11 // pred_check
          %p139 = pneg %p75
        $region14: #{bottleneck_forward.4} parent=11 // pred_check_branch
          %141 = sbr.rel (%p139) target = $region16
        $region15: #{bottleneck_forward.4} parent=11 // pred_region
          %s143 = ssub.s32 18432, 18432
          %144 = vsyncadd [#allocation6], %s143
          %s145 = sshll.u32 [#allocation5], 4
          %s146 = int_to_ptr.vmem [resolvable:$true] %s145
          %151 = dma.hbm_to_vmem [thread:$0]  %s1, 18432, %s146, [#allocation6], 128, 128, 8
        $region16: #{bottleneck_forward.4} parent=11 // pred_fallthru
          _
        // Predicated region
        $region17: #{bottleneck_forward.4} parent=11 // pred_check
          %p152 = pneg %p96
        $region18: #{bottleneck_forward.4} parent=11 // pred_check_branch
          %154 = sbr.rel (%p152) target = $region20
        $region19: #{bottleneck_forward.4} parent=11 // pred_region
          %s156 = ssub.s32 16, 16
          %157 = vsyncadd [#allocation6], %s156
          %s159 = sshll.u32 [#allocation7], 4
          %s160 = int_to_ptr.vmem [resolvable:$true] %s159
          %162 = dma.hbm_to_vmem [thread:$0]  %s2, 16, %s160, [#allocation6]
        $region20: #{bottleneck_forward.4} parent=11 // pred_fallthru
          _
      $region12: #{bottleneck_forward.4} parent=5 // pred_fallthru
        _
      %p163 = scmp.lt.s32.totalorder %s16, 2
      // Predicated region
      $region21: #{bottleneck_forward.4} parent=5 // pred_check
        %p164 = pneg %p163
      $region22: #{bottleneck_forward.4} parent=5 // pred_check_branch
        %166 = sbr.rel (%p164) target = $region24
      $region23: #{bottleneck_forward.4} parent=5 // pred_region
        // Predicated region
        $region25: #{bottleneck_forward.4} parent=23 // pred_check
          %p167 = pneg %p48
        $region26: #{bottleneck_forward.4} parent=23 // pred_check_branch
          %169 = sbr.rel (%p167) target = $region28
        $region27: #{bottleneck_forward.4} parent=23 // pred_region
          %s170 = sand.u32 %s38, 1
          %s171 = scalar_lea.sflag [#allocation3], %s170
          %s172 = sand.u32 %s38, 1
          %s173 = smul.addr %s172, 160
          %s174 = scalar_lea.vmem [#allocation2], %s173
          %s176 = ssub.s32 2560, 2560
          %177 = vsyncadd %s171, %s176
          %s178 = smul.addr %s23, 20
          %s179 = smul.addr %s178, 128
          %s180 = scalar_lea.hbm %s0, %s179
          %s181 = sshll.u32 %s174, 4
          %s182 = int_to_ptr.vmem [resolvable:$true] %s181
          %187 = dma.hbm_to_vmem [thread:$0]  %s180, 2560, %s182, %s171, 128, 128, 8
        $region28: #{bottleneck_forward.4} parent=23 // pred_fallthru
          _
      $region24: #{bottleneck_forward.4} parent=5 // pred_fallthru
        _
      %p188 = scmp.le.s32.totalorder 1, %s16
      %p189 = scmp.lt.s32.totalorder %s16, 3
      %p190 = pnand %p188, %p189
      %p191 = pneg %p190
      // Predicated region
      $region29: #{bottleneck_forward.4} parent=5 // pred_check
        _
      $region30: #{bottleneck_forward.4} parent=5 // pred_check_branch
        %193 = sbr.rel (%p190) target = $region32
      $region31: #{bottleneck_forward.4} parent=5 // pred_region
        %s194 = ssub.s32 %s16, 1
        %s195 = sand.u32 %s41, 1
        %s196 = scalar_lea.sflag [#allocation3], %s195
        %s197 = sand.u32 %s41, 1
        %s198 = smul.addr %s197, 160
        %s199 = scalar_lea.vmem [#allocation2], %s198
        // Predicated region
        $region33: #{bottleneck_forward.4} parent=31 // pred_check
          %p200 = pneg %p54
        $region34: #{bottleneck_forward.4} parent=31 // pred_check_branch
          %202 = sbr.rel (%p200) target = $region36
        $region35: #{bottleneck_forward.4} parent=31 // pred_region
          %203 = dma.done %s196, 2560
        $region36: #{bottleneck_forward.4} parent=31 // pred_fallthru
          _
        // Predicated region
        $region37: #{bottleneck_forward.4} parent=31 // pred_check
          %p204 = pneg %p75
        $region38: #{bottleneck_forward.4} parent=31 // pred_check_branch
          %206 = sbr.rel (%p204) target = $region40
        $region39: #{bottleneck_forward.4} parent=31 // pred_region
          %207 = dma.done [#allocation6], 18432
        $region40: #{bottleneck_forward.4} parent=31 // pred_fallthru
          _
        // Predicated region
        $region41: #{bottleneck_forward.4} parent=31 // pred_check
          %p208 = pneg %p96
        $region42: #{bottleneck_forward.4} parent=31 // pred_check_branch
          %210 = sbr.rel (%p208) target = $region44
        $region43: #{bottleneck_forward.4} parent=31 // pred_region
          %211 = dma.done [#allocation6], 16
        $region44: #{bottleneck_forward.4} parent=31 // pred_fallthru
          _
        %s212 = sand.u32 %s41, 1
        %s213 = scalar_lea.sflag [#allocation3], %s212
        %s214 = sand.u32 %s41, 1
        %s215 = smul.addr %s214, 160
        %s216 = scalar_lea.vmem [#allocation2], %s215
        %p217 = pneg %p54
        %p218 = pneg %p51
        %p219 = pneg %p75
        %p220 = pneg %p72
        %p221 = pneg %p96
        %p222 = pneg %p93
        %p223 = pneg %p124
        %p224 = pneg %p121
        %s225 = sand.u32 %s111, 1
        %s226 = scalar_lea.sflag [#allocation4], %s225
        %s227 = sand.u32 %s111, 1
        %s228 = smul.addr %s227, 64
        %s229 = scalar_lea.vmem [#allocation8], %s228
        %s230 = sadd.s32 %s25, %s26
        %s231 = smul.u32 8, %s230
        %s232 = smul.u32 %s26, 8
        %v233 = vld [vmem:[#allocation7] sm:$0x1]
        %v235 = vlaneseq
        %v236 = vshrl.u32 %v235, 7
        %v237 = vsub.s32 0, %v236
        %v238 = vrot.slane %v233, %v237
        %s240 = smul.u32 %s232, 16
        %s241 = scalar_lea.vmem %s199, %s240 [#allocation2]
        %v242 = vld [vmem:[%s241] sm:$0xff]
        %v243 = vld [vmem:[%s241 + $0x10] sm:$0xff]
        %v244 = vld [vmem:[%s241 + $0x20] sm:$0xff]
        %v245 = vld [vmem:[%s241 + $0x30] sm:$0xff]
        %v246 = vld [vmem:[%s241 + $0x40] sm:$0xff]
        %v247 = vld [vmem:[%s241 + $0x50] sm:$0xff]
        %v248 = vld [vmem:[%s241 + $0x60] sm:$0xff]
        %v249 = vld [vmem:[%s241 + $0x70] sm:$0xff]
        %v250 = vld [vmem:[#allocation5] sm:$0xff]
        %v251 = vld [vmem:[#allocation5 + $0x8] sm:$0xff]
        %v252 = vld [vmem:[#allocation5 + $0x10] sm:$0xff]
        %v253 = vld [vmem:[#allocation5 + $0x18] sm:$0xff]
        %v254 = vld [vmem:[#allocation5 + $0x20] sm:$0xff]
        %v255 = vld [vmem:[#allocation5 + $0x28] sm:$0xff]
        %v256 = vld [vmem:[#allocation5 + $0x30] sm:$0xff]
        %v257 = vld [vmem:[#allocation5 + $0x38] sm:$0xff]
        %v258 = vld [vmem:[#allocation5 + $0x40] sm:$0xff]
        %v259 = vld [vmem:[#allocation5 + $0x48] sm:$0xff]
        %v260 = vld [vmem:[#allocation5 + $0x50] sm:$0xff]
        %v261 = vld [vmem:[#allocation5 + $0x58] sm:$0xff]
        %v262 = vld [vmem:[#allocation5 + $0x60] sm:$0xff]
        %v263 = vld [vmem:[#allocation5 + $0x68] sm:$0xff]
        %v264 = vld [vmem:[#allocation5 + $0x70] sm:$0xff]
        %v265 = vld [vmem:[#allocation5 + $0x78] sm:$0xff]
        %266 = vmatprep.subr.mxu0 0.0
        %267 = vmatpush1.msra.mxu0 %v250
        %268 = vmatprep.subr.mxu0 0.0
        %269 = vmatpush1.msra.mxu0 %v251
        %270 = vmatprep.subr.mxu0 0.0
        %271 = vmatpush1.msra.mxu0 %v252
        %272 = vmatprep.subr.mxu0 0.0
        %273 = vmatpush1.msra.mxu0 %v253
        %274 = vmatprep.subr.mxu0 0.0
        %275 = vmatpush1.msra.mxu0 %v254
        %276 = vmatprep.subr.mxu0 0.0
        %277 = vmatpush1.msra.mxu0 %v255
        %278 = vmatprep.subr.mxu0 0.0
        %279 = vmatpush1.msra.mxu0 %v256
        %280 = vmatprep.subr.mxu0 0.0
        %281 = vmatpush1.msra.mxu0 %v257
        %282 = vmatprep.subr.mxu0 0.0
        %283 = vmatpush1.msra.mxu0 %v258
        %284 = vmatprep.subr.mxu0 0.0
        %285 = vmatpush1.msra.mxu0 %v259
        %286 = vmatprep.subr.mxu0 0.0
        %287 = vmatpush1.msra.mxu0 %v260
        %288 = vmatprep.subr.mxu0 0.0
        %289 = vmatpush1.msra.mxu0 %v261
        %290 = vmatprep.subr.mxu0 0.0
        %291 = vmatpush1.msra.mxu0 %v262
        %292 = vmatprep.subr.mxu0 0.0
        %293 = vmatpush1.msra.mxu0 %v263
        %294 = vmatprep.subr.mxu0 0.0
        %295 = vmatpush1.msra.mxu0 %v264
        %296 = vmatprep.subr.mxu0 0.0
        %297 = vmatpush1.msra.mxu0 %v265
        %298 = vmatprep.subr.mxu0 0.0
        %299 = vmatpush1.msra.mxu0 0.0
        %300 = vmatprep.subr.mxu0 0.0
        %301 = vmatpush1.msra.mxu0 0.0
        %302 = vmatprep.subr.mxu0 0.0
        %303 = vmatpush1.msra.mxu0 0.0
        %304 = vmatprep.subr.mxu0 0.0
        %305 = vmatpush1.msra.mxu0 0.0
        %306 = vmatprep.subr.mxu0 0.0
        %307 = vmatpush1.msra.mxu0 0.0
        %308 = vmatprep.subr.mxu0 0.0
        %309 = vmatpush1.msra.mxu0 0.0
        %310 = vmatprep.subr.mxu0 0.0
        %311 = vmatpush1.msra.mxu0 0.0
        %312 = vmatprep.subr.mxu0 0.0
        %313 = vmatpush1.msra.mxu0 0.0
        %314 = vmatprep.subr.mxu0 0.0
        %315 = vmatpush1.msra.mxu0 0.0
        %316 = vmatprep.subr.mxu0 0.0
        %317 = vmatpush1.msra.mxu0 0.0
        %318 = vmatprep.subr.mxu0 0.0
        %319 = vmatpush1.msra.mxu0 0.0
        %320 = vmatprep.subr.mxu0 0.0
        %321 = vmatpush1.msra.mxu0 0.0
        %322 = vmatprep.subr.mxu0 0.0
        %323 = vmatpush1.msra.mxu0 0.0
        %324 = vmatprep.subr.mxu0 0.0
        %325 = vmatpush1.msra.mxu0 0.0
        %326 = vmatprep.subr.mxu0 0.0
        %327 = vmatpush1.msra.mxu0 0.0
        %328 = vmatprep.subr.mxu0 0.0
        %329 = vmatpush1.msra.mxu0 0.0
        %330 = vmatprep.mubr.f32.mxu0 0.0
        %331 = vmatmul.mubr.f32.gmra.mrb[0].mxu0 %v242
        %v332 = vpop.f32.mrb[0].mxu0
        %v333 = vadd.f32 0.0, %v332
        %v334 = vpop.f32.mrb[0].mxu0
        %335 = vmatprep.mubr.f32.mxu0 0.0
        %336 = vmatmul.mubr.f32.gmra.mrb[0].mxu0 %v243
        %v337 = vpop.f32.mrb[0].mxu0
        %v338 = vadd.f32 0.0, %v337
        %v339 = vpop.f32.mrb[0].mxu0
        %340 = vmatprep.mubr.f32.mxu0 0.0
        %341 = vmatmul.mubr.f32.gmra.mrb[0].mxu0 %v244
        %v342 = vpop.f32.mrb[0].mxu0
        %v343 = vadd.f32 0.0, %v342
        %v344 = vpop.f32.mrb[0].mxu0
        %345 = vmatprep.mubr.f32.mxu0 0.0
        %346 = vmatmul.mubr.f32.gmra.mrb[0].mxu0 %v245
        %v347 = vpop.f32.mrb[0].mxu0
        %v348 = vadd.f32 0.0, %v347
        %v349 = vpop.f32.mrb[0].mxu0
        %350 = vmatprep.mubr.f32.mxu0 0.0
        %351 = vmatmul.mubr.f32.gmra.mrb[0].mxu0 %v246
        %v352 = vpop.f32.mrb[0].mxu0
        %v353 = vadd.f32 0.0, %v352
        %v354 = vpop.f32.mrb[0].mxu0
        %355 = vmatprep.mubr.f32.mxu0 0.0
        %356 = vmatmul.mubr.f32.gmra.mrb[0].mxu0 %v247
        %v357 = vpop.f32.mrb[0].mxu0
        %v358 = vadd.f32 0.0, %v357
        %v359 = vpop.f32.mrb[0].mxu0
        %360 = vmatprep.mubr.f32.mxu0 0.0
        %361 = vmatmul.mubr.f32.gmra.mrb[0].mxu0 %v248
        %v362 = vpop.f32.mrb[0].mxu0
        %v363 = vadd.f32 0.0, %v362
        %v364 = vpop.f32.mrb[0].mxu0
        %365 = vmatprep.mubr.f32.mxu0 0.0
        %366 = vmatmul.mubr.f32.gmra.mrb[0].mxu0 %v249
        %v367 = vpop.f32.mrb[0].mxu0
        %v368 = vadd.f32 0.0, %v367
        %v369 = vpop.f32.mrb[0].mxu0
        %370 = vdwg.mxu0
        %v371 = vadd.f32 %v238, %v333
        %v372 = vadd.f32 %v238, %v338
        %v373 = vadd.f32 %v238, %v343
        %v374 = vadd.f32 %v238, %v348
        %v375 = vadd.f32 %v238, %v353
        %v376 = vadd.f32 %v238, %v358
        %v377 = vadd.f32 %v238, %v363
        %v378 = vadd.f32 %v238, %v368
        %v379 = vld [vmem:[%s241 + $0x1] sm:$0xff]
        %v380 = vld [vmem:[%s241 + $0x11] sm:$0xff]
        %v381 = vld [vmem:[%s241 + $0x21] sm:$0xff]
        %v382 = vld [vmem:[%s241 + $0x31] sm:$0xff]
        %v383 = vld [vmem:[%s241 + $0x41] sm:$0xff]
        %v384 = vld [vmem:[%s241 + $0x51] sm:$0xff]
        %v385 = vld [vmem:[%s241 + $0x61] sm:$0xff]
        %v386 = vld [vmem:[%s241 + $0x71] sm:$0xff]
        %s387 = scalar_lea.vmem [#allocation5], 128
        %v388 = vld [vmem:[%s387] sm:$0xff]
        %v389 = vld [vmem:[%s387 + $0x8] sm:$0xff]
        %v390 = vld [vmem:[%s387 + $0x10] sm:$0xff]
        %v391 = vld [vmem:[%s387 + $0x18] sm:$0xff]
        %v392 = vld [vmem:[%s387 + $0x20] sm:$0xff]
        %v393 = vld [vmem:[%s387 + $0x28] sm:$0xff]
        %v394 = vld [vmem:[%s387 + $0x30] sm:$0xff]
        %v395 = vld [vmem:[%s387 + $0x38] sm:$0xff]
        %v396 = vld [vmem:[%s387 + $0x40] sm:$0xff]
        %v397 = vld [vmem:[%s387 + $0x48] sm:$0xff]
        %v398 = vld [vmem:[%s387 + $0x50] sm:$0xff]
        %v399 = vld [vmem:[%s387 + $0x58] sm:$0xff]
        %v400 = vld [vmem:[%s387 + $0x60] sm:$0xff]
        %v401 = vld [vmem:[%s387 + $0x68] sm:$0xff]
        %v402 = vld [vmem:[%s387 + $0x70] sm:$0xff]
        %v403 = vld [vmem:[%s387 + $0x78] sm:$0xff]
        %404 = vmatprep.subr.mxu0 0.0
        %405 = vmatpush1.msra.mxu0 %v388
        %406 = vmatprep.subr.mxu0 0.0
        %407 = vmatpush1.msra.mxu0 %v389
        %408 = vmatprep.subr.mxu0 0.0
        %409 = vmatpush1.msra.mxu0 %v390
        %410 = vmatprep.subr.mxu0 0.0
        %411 = vmatpush1.msra.mxu0 %v391
        %412 = vmatprep.subr.mxu0 0.0
        %413 = vmatpush1.msra.mxu0 %v392
        %414 = vmatprep.subr.mxu0 0.0
        %415 = vmatpush1.msra.mxu0 %v393
        %416 = vmatprep.subr.mxu0 0.0
        %417 = vmatpush1.msra.mxu0 %v394
        %418 = vmatprep.subr.mxu0 0.0
        %419 = vmatpush1.msra.mxu0 %v395
        %420 = vmatprep.subr.mxu0 0.0
        %421 = vmatpush1.msra.mxu0 %v396
        %422 = vmatprep.subr.mxu0 0.0
        %423 = vmatpush1.msra.mxu0 %v397
        %424 = vmatprep.subr.mxu0 0.0
        %425 = vmatpush1.msra.mxu0 %v398
        %426 = vmatprep.subr.mxu0 0.0
        %427 = vmatpush1.msra.mxu0 %v399
        %428 = vmatprep.subr.mxu0 0.0
        %429 = vmatpush1.msra.mxu0 %v400
        %430 = vmatprep.subr.mxu0 0.0
        %431 = vmatpush1.msra.mxu0 %v401
        %432 = vmatprep.subr.mxu0 0.0
        %433 = vmatpush1.msra.mxu0 %v402
        %434 = vmatprep.subr.mxu0 0.0
        %435 = vmatpush1.msra.mxu0 %v403
        %436 = vmatprep.subr.mxu0 0.0
        %437 = vmatpush1.msra.mxu0 0.0
        %438 = vmatprep.subr.mxu0 0.0
        %439 = vmatpush1.msra.mxu0 0.0
        %440 = vmatprep.subr.mxu0 0.0
        %441 = vmatpush1.msra.mxu0 0.0
        %442 = vmatprep.subr.mxu0 0.0
        %443 = vmatpush1.msra.mxu0 0.0
        %444 = vmatprep.subr.mxu0 0.0
        %445 = vmatpush1.msra.mxu0 0.0
        %446 = vmatprep.subr.mxu0 0.0
        %447 = vmatpush1.msra.mxu0 0.0
        %448 = vmatprep.subr.mxu0 0.0
        %449 = vmatpush1.msra.mxu0 0.0
        %450 = vmatprep.subr.mxu0 0.0
        %451 = vmatpush1.msra.mxu0 0.0
        %452 = vmatprep.subr.mxu0 0.0
        %453 = vmatpush1.msra.mxu0 0.0
        %454 = vmatprep.subr.mxu0 0.0
        %455 = vmatpush1.msra.mxu0 0.0
        %456 = vmatprep.subr.mxu0 0.0
        %457 = vmatpush1.msra.mxu0 0.0
        %458 = vmatprep.subr.mxu0 0.0
        %459 = vmatpush1.msra.mxu0 0.0
        %460 = vmatprep.subr.mxu0 0.0
        %461 = vmatpush1.msra.mxu0 0.0
        %462 = vmatprep.subr.mxu0 0.0
        %463 = vmatpush1.msra.mxu0 0.0
        %464 = vmatprep.subr.mxu0 0.0
        %465 = vmatpush1.msra.mxu0 0.0
        %466 = vmatprep.subr.mxu0 0.0
        %467 = vmatpush1.msra.mxu0 0.0
        %468 = vmatprep.mubr.f32.mxu0 0.0
        %469 = vmatmul.mubr.f32.gmra.mrb[0].mxu0 %v379
        %v470 = vpop.f32.mrb[0].mxu0
        %v471 = vadd.f32 0.0, %v470
        %v472 = vpop.f32.mrb[0].mxu0
        %473 = vmatprep.mubr.f32.mxu0 0.0
        %474 = vmatmul.mubr.f32.gmra.mrb[0].mxu0 %v380
        %v475 = vpop.f32.mrb[0].mxu0
        %v476 = vadd.f32 0.0, %v475
        %v477 = vpop.f32.mrb[0].mxu0
        %478 = vmatprep.mubr.f32.mxu0 0.0
        %479 = vmatmul.mubr.f32.gmra.mrb[0].mxu0 %v381
        %v480 = vpop.f32.mrb[0].mxu0
        %v481 = vadd.f32 0.0, %v480
        %v482 = vpop.f32.mrb[0].mxu0
        %483 = vmatprep.mubr.f32.mxu0 0.0
        %484 = vmatmul.mubr.f32.gmra.mrb[0].mxu0 %v382
        %v485 = vpop.f32.mrb[0].mxu0
        %v486 = vadd.f32 0.0, %v485
        %v487 = vpop.f32.mrb[0].mxu0
        %488 = vmatprep.mubr.f32.mxu0 0.0
        %489 = vmatmul.mubr.f32.gmra.mrb[0].mxu0 %v383
        %v490 = vpop.f32.mrb[0].mxu0
        %v491 = vadd.f32 0.0, %v490
        %v492 = vpop.f32.mrb[0].mxu0
        %493 = vmatprep.mubr.f32.mxu0 0.0
        %494 = vmatmul.mubr.f32.gmra.mrb[0].mxu0 %v384
        %v495 = vpop.f32.mrb[0].mxu0
        %v496 = vadd.f32 0.0, %v495
        %v497 = vpop.f32.mrb[0].mxu0
        %498 = vmatprep.mubr.f32.mxu0 0.0
        %499 = vmatmul.mubr.f32.gmra.mrb[0].mxu0 %v385
        %v500 = vpop.f32.mrb[0].mxu0
        %v501 = vadd.f32 0.0, %v500
        %v502 = vpop.f32.mrb[0].mxu0
        %503 = vmatprep.mubr.f32.mxu0 0.0
        %504 = vmatmul.mubr.f32.gmra.mrb[0].mxu0 %v386
        %v505 = vpop.f32.mrb[0].mxu0
        %v506 = vadd.f32 0.0, %v505
        %v507 = vpop.f32.mrb[0].mxu0
        %508 = vdwg.mxu0
        %v509 = vadd.f32 %v371, %v471
        %v510 = vadd.f32 %v372, %v476
        %v511 = vadd.f32 %v373, %v481
        %v512 = vadd.f32 %v374, %v486
        %v513 = vadd.f32 %v375, %v491
        %v514 = vadd.f32 %v376, %v496
        %v515 = vadd.f32 %v377, %v501
        %v516 = vadd.f32 %v378, %v506
        %v517 = vld [vmem:[%s241 + $0x2] sm:$0xff]
        %v518 = vld [vmem:[%s241 + $0x12] sm:$0xff]
        %v519 = vld [vmem:[%s241 + $0x22] sm:$0xff]
        %v520 = vld [vmem:[%s241 + $0x32] sm:$0xff]
        %v521 = vld [vmem:[%s241 + $0x42] sm:$0xff]
        %v522 = vld [vmem:[%s241 + $0x52] sm:$0xff]
        %v523 = vld [vmem:[%s241 + $0x62] sm:$0xff]
        %v524 = vld [vmem:[%s241 + $0x72] sm:$0xff]
        %s525 = scalar_lea.vmem [#allocation5], 256
        %v526 = vld [vmem:[%s525] sm:$0xff]
        %v527 = vld [vmem:[%s525 + $0x8] sm:$0xff]
        %v528 = vld [vmem:[%s525 + $0x10] sm:$0xff]
        %v529 = vld [vmem:[%s525 + $0x18] sm:$0xff]
        %v530 = vld [vmem:[%s525 + $0x20] sm:$0xff]
        %v531 = vld [vmem:[%s525 + $0x28] sm:$0xff]
        %v532 = vld [vmem:[%s525 + $0x30] sm:$0xff]
        %v533 = vld [vmem:[%s525 + $0x38] sm:$0xff]
        %v534 = vld [vmem:[%s525 + $0x40] sm:$0xff]
        %v535 = vld [vmem:[%s525 + $0x48] sm:$0xff]
        %v536 = vld [vmem:[%s525 + $0x50] sm:$0xff]
        %v537 = vld [vmem:[%s525 + $0x58] sm:$0xff]
        %v538 = vld [vmem:[%s525 + $0x60] sm:$0xff]
        %v539 = vld [vmem:[%s525 + $0x68] sm:$0xff]
        %v540 = vld [vmem:[%s525 + $0x70] sm:$0xff]
        %v541 = vld [vmem:[%s525 + $0x78] sm:$0xff]
        %542 = vmatprep.subr.mxu0 0.0
        %543 = vmatpush1.msra.mxu0 %v526
        %544 = vmatprep.subr.mxu0 0.0
        %545 = vmatpush1.msra.mxu0 %v527
        %546 = vmatprep.subr.mxu0 0.0
        %547 = vmatpush1.msra.mxu0 %v528
        %548 = vmatprep.subr.mxu0 0.0
        %549 = vmatpush1.msra.mxu0 %v529
        %550 = vmatprep.subr.mxu0 0.0
        %551 = vmatpush1.msra.mxu0 %v530
        %552 = vmatprep.subr.mxu0 0.0
        %553 = vmatpush1.msra.mxu0 %v531
        %554 = vmatprep.subr.mxu0 0.0
        %555 = vmatpush1.msra.mxu0 %v532
        %556 = vmatprep.subr.mxu0 0.0
        %557 = vmatpush1.msra.mxu0 %v533
        %558 = vmatprep.subr.mxu0 0.0
        %559 = vmatpush1.msra.mxu0 %v534
        %560 = vmatprep.subr.mxu0 0.0
        %561 = vmatpush1.msra.mxu0 %v535
        %562 = vmatprep.subr.mxu0 0.0
        %563 = vmatpush1.msra.mxu0 %v536
        %564 = vmatprep.subr.mxu0 0.0
        %565 = vmatpush1.msra.mxu0 %v537
        %566 = vmatprep.subr.mxu0 0.0
        %567 = vmatpush1.msra.mxu0 %v538
        %568 = vmatprep.subr.mxu0 0.0
        %569 = vmatpush1.msra.mxu0 %v539
        %570 = vmatprep.subr.mxu0 0.0
        %571 = vmatpush1.msra.mxu0 %v540
        %572 = vmatprep.subr.mxu0 0.0
        %573 = vmatpush1.msra.mxu0 %v541
        %574 = vmatprep.subr.mxu0 0.0
        %575 = vmatpush1.msra.mxu0 0.0
        %576 = vmatprep.subr.mxu0 0.0
        %577 = vmatpush1.msra.mxu0 0.0
        %578 = vmatprep.subr.mxu0 0.0
        %579 = vmatpush1.msra.mxu0 0.0
        %580 = vmatprep.subr.mxu0 0.0
        %581 = vmatpush1.msra.mxu0 0.0
        %582 = vmatprep.subr.mxu0 0.0
        %583 = vmatpush1.msra.mxu0 0.0
        %584 = vmatprep.subr.mxu0 0.0
        %585 = vmatpush1.msra.mxu0 0.0
        %586 = vmatprep.subr.mxu0 0.0
        %587 = vmatpush1.msra.mxu0 0.0
        %588 = vmatprep.subr.mxu0 0.0
        %589 = vmatpush1.msra.mxu0 0.0
        %590 = vmatprep.subr.mxu0 0.0
        %591 = vmatpush1.msra.mxu0 0.0
        %592 = vmatprep.subr.mxu0 0.0
        %593 = vmatpush1.msra.mxu0 0.0
        %594 = vmatprep.subr.mxu0 0.0
        %595 = vmatpush1.msra.mxu0 0.0
        %596 = vmatprep.subr.mxu0 0.0
        %597 = vmatpush1.msra.mxu0 0.0
        %598 = vmatprep.subr.mxu0 0.0
        %599 = vmatpush1.msra.mxu0 0.0
        %600 = vmatprep.subr.mxu0 0.0
        %601 = vmatpush1.msra.mxu0 0.0
        %602 = vmatprep.subr.mxu0 0.0
        %603 = vmatpush1.msra.mxu0 0.0
        %604 = vmatprep.subr.mxu0 0.0
        %605 = vmatpush1.msra.mxu0 0.0
        %606 = vmatprep.mubr.f32.mxu0 0.0
        %607 = vmatmul.mubr.f32.gmra.mrb[0].mxu0 %v517
        %v608 = vpop.f32.mrb[0].mxu0
        %v609 = vadd.f32 0.0, %v608
        %v610 = vpop.f32.mrb[0].mxu0
        %611 = vmatprep.mubr.f32.mxu0 0.0
        %612 = vmatmul.mubr.f32.gmra.mrb[0].mxu0 %v518
        %v613 = vpop.f32.mrb[0].mxu0
        %v614 = vadd.f32 0.0, %v613
        %v615 = vpop.f32.mrb[0].mxu0
        %616 = vmatprep.mubr.f32.mxu0 0.0
        %617 = vmatmul.mubr.f32.gmra.mrb[0].mxu0 %v519
        %v618 = vpop.f32.mrb[0].mxu0
        %v619 = vadd.f32 0.0, %v618
        %v620 = vpop.f32.mrb[0].mxu0
        %621 = vmatprep.mubr.f32.mxu0 0.0
        %622 = vmatmul.mubr.f32.gmra.mrb[0].mxu0 %v520
        %v623 = vpop.f32.mrb[0].mxu0
        %v624 = vadd.f32 0.0, %v623
        %v625 = vpop.f32.mrb[0].mxu0
        %626 = vmatprep.mubr.f32.mxu0 0.0
        %627 = vmatmul.mubr.f32.gmra.mrb[0].mxu0 %v521
        %v628 = vpop.f32.mrb[0].mxu0
        %v629 = vadd.f32 0.0, %v628
        %v630 = vpop.f32.mrb[0].mxu0
        %631 = vmatprep.mubr.f32.mxu0 0.0
        %632 = vmatmul.mubr.f32.gmra.mrb[0].mxu0 %v522
        %v633 = vpop.f32.mrb[0].mxu0
        %v634 = vadd.f32 0.0, %v633
        %v635 = vpop.f32.mrb[0].mxu0
        %636 = vmatprep.mubr.f32.mxu0 0.0
        %637 = vmatmul.mubr.f32.gmra.mrb[0].mxu0 %v523
        %v638 = vpop.f32.mrb[0].mxu0
        %v639 = vadd.f32 0.0, %v638
        %v640 = vpop.f32.mrb[0].mxu0
        %641 = vmatprep.mubr.f32.mxu0 0.0
        %642 = vmatmul.mubr.f32.gmra.mrb[0].mxu0 %v524
        %v643 = vpop.f32.mrb[0].mxu0
        %v644 = vadd.f32 0.0, %v643
        %v645 = vpop.f32.mrb[0].mxu0
        %646 = vdwg.mxu0
        %v647 = vadd.f32 %v509, %v609
        %v648 = vadd.f32 %v510, %v614
        %v649 = vadd.f32 %v511, %v619
        %v650 = vadd.f32 %v512, %v624
        %v651 = vadd.f32 %v513, %v629
        %v652 = vadd.f32 %v514, %v634
        %v653 = vadd.f32 %v515, %v639
        %v654 = vadd.f32 %v516, %v644
        %s655 = sadd.s32 %s232, 1
        %s656 = smul.u32 %s655, 16
        %s657 = scalar_lea.vmem %s199, %s656 [#allocation2]
        %v658 = vld [vmem:[%s657] sm:$0xff]
        %v659 = vld [vmem:[%s657 + $0x10] sm:$0xff]
        %v660 = vld [vmem:[%s657 + $0x20] sm:$0xff]
        %v661 = vld [vmem:[%s657 + $0x30] sm:$0xff]
        %v662 = vld [vmem:[%s657 + $0x40] sm:$0xff]
        %v663 = vld [vmem:[%s657 + $0x50] sm:$0xff]
        %v664 = vld [vmem:[%s657 + $0x60] sm:$0xff]
        %v665 = vld [vmem:[%s657 + $0x70] sm:$0xff]
        %s666 = scalar_lea.vmem [#allocation5], 384
        %v667 = vld [vmem:[%s666] sm:$0xff]
        %v668 = vld [vmem:[%s666 + $0x8] sm:$0xff]
        %v669 = vld [vmem:[%s666 + $0x10] sm:$0xff]
        %v670 = vld [vmem:[%s666 + $0x18] sm:$0xff]
        %v671 = vld [vmem:[%s666 + $0x20] sm:$0xff]
        %v672 = vld [vmem:[%s666 + $0x28] sm:$0xff]
        %v673 = vld [vmem:[%s666 + $0x30] sm:$0xff]
        %v674 = vld [vmem:[%s666 + $0x38] sm:$0xff]
        %v675 = vld [vmem:[%s666 + $0x40] sm:$0xff]
        %v676 = vld [vmem:[%s666 + $0x48] sm:$0xff]
        %v677 = vld [vmem:[%s666 + $0x50] sm:$0xff]
        %v678 = vld [vmem:[%s666 + $0x58] sm:$0xff]
        %v679 = vld [vmem:[%s666 + $0x60] sm:$0xff]
        %v680 = vld [vmem:[%s666 + $0x68] sm:$0xff]
        %v681 = vld [vmem:[%s666 + $0x70] sm:$0xff]
        %v682 = vld [vmem:[%s666 + $0x78] sm:$0xff]
        %683 = vmatprep.subr.mxu0 0.0
        %684 = vmatpush1.msra.mxu0 %v667
        %685 = vmatprep.subr.mxu0 0.0
        %686 = vmatpush1.msra.mxu0 %v668
        %687 = vmatprep.subr.mxu0 0.0
        %688 = vmatpush1.msra.mxu0 %v669
        %689 = vmatprep.subr.mxu0 0.0
        %690 = vmatpush1.msra.mxu0 %v670
        %691 = vmatprep.subr.mxu0 0.0
        %692 = vmatpush1.msra.mxu0 %v671
        %693 = vmatprep.subr.mxu0 0.0
        %694 = vmatpush1.msra.mxu0 %v672
        %695 = vmatprep.subr.mxu0 0.0
        %696 = vmatpush1.msra.mxu0 %v673
        %697 = vmatprep.subr.mxu0 0.0
        %698 = vmatpush1.msra.mxu0 %v674
        %699 = vmatprep.subr.mxu0 0.0
        %700 = vmatpush1.msra.mxu0 %v675
        %701 = vmatprep.subr.mxu0 0.0
        %702 = vmatpush1.msra.mxu0 %v676
        %703 = vmatprep.subr.mxu0 0.0
        %704 = vmatpush1.msra.mxu0 %v677
        %705 = vmatprep.subr.mxu0 0.0
        %706 = vmatpush1.msra.mxu0 %v678
        %707 = vmatprep.subr.mxu0 0.0
        %708 = vmatpush1.msra.mxu0 %v679
        %709 = vmatprep.subr.mxu0 0.0
        %710 = vmatpush1.msra.mxu0 %v680
        %711 = vmatprep.subr.mxu0 0.0
        %712 = vmatpush1.msra.mxu0 %v681
        %713 = vmatprep.subr.mxu0 0.0
        %714 = vmatpush1.msra.mxu0 %v682
        %715 = vmatprep.subr.mxu0 0.0
        %716 = vmatpush1.msra.mxu0 0.0
        %717 = vmatprep.subr.mxu0 0.0
        %718 = vmatpush1.msra.mxu0 0.0
        %719 = vmatprep.subr.mxu0 0.0
        %720 = vmatpush1.msra.mxu0 0.0
        %721 = vmatprep.subr.mxu0 0.0
        %722 = vmatpush1.msra.mxu0 0.0
        %723 = vmatprep.subr.mxu0 0.0
        %724 = vmatpush1.msra.mxu0 0.0
        %725 = vmatprep.subr.mxu0 0.0
        %726 = vmatpush1.msra.mxu0 0.0
        %727 = vmatprep.subr.mxu0 0.0
        %728 = vmatpush1.msra.mxu0 0.0
        %729 = vmatprep.subr.mxu0 0.0
        %730 = vmatpush1.msra.mxu0 0.0
        %731 = vmatprep.subr.mxu0 0.0
        %732 = vmatpush1.msra.mxu0 0.0
        %733 = vmatprep.subr.mxu0 0.0
        %734 = vmatpush1.msra.mxu0 0.0
        %735 = vmatprep.subr.mxu0 0.0
        %736 = vmatpush1.msra.mxu0 0.0
        %737 = vmatprep.subr.mxu0 0.0
        %738 = vmatpush1.msra.mxu0 0.0
        %739 = vmatprep.subr.mxu0 0.0
        %740 = vmatpush1.msra.mxu0 0.0
        %741 = vmatprep.subr.mxu0 0.0
        %742 = vmatpush1.msra.mxu0 0.0
        %743 = vmatprep.subr.mxu0 0.0
        %744 = vmatpush1.msra.mxu0 0.0
        %745 = vmatprep.subr.mxu0 0.0
        %746 = vmatpush1.msra.mxu0 0.0
        %747 = vmatprep.mubr.f32.mxu0 0.0
        %748 = vmatmul.mubr.f32.gmra.mrb[0].mxu0 %v658
        %v749 = vpop.f32.mrb[0].mxu0
        %v750 = vadd.f32 0.0, %v749
        %v751 = vpop.f32.mrb[0].mxu0
        %752 = vmatprep.mubr.f32.mxu0 0.0
        %753 = vmatmul.mubr.f32.gmra.mrb[0].mxu0 %v659
        %v754 = vpop.f32.mrb[0].mxu0
        %v755 = vadd.f32 0.0, %v754
        %v756 = vpop.f32.mrb[0].mxu0
        %757 = vmatprep.mubr.f32.mxu0 0.0
        %758 = vmatmul.mubr.f32.gmra.mrb[0].mxu0 %v660
        %v759 = vpop.f32.mrb[0].mxu0
        %v760 = vadd.f32 0.0, %v759
        %v761 = vpop.f32.mrb[0].mxu0
        %762 = vmatprep.mubr.f32.mxu0 0.0
        %763 = vmatmul.mubr.f32.gmra.mrb[0].mxu0 %v661
        %v764 = vpop.f32.mrb[0].mxu0
        %v765 = vadd.f32 0.0, %v764
        %v766 = vpop.f32.mrb[0].mxu0
        %767 = vmatprep.mubr.f32.mxu0 0.0
        %768 = vmatmul.mubr.f32.gmra.mrb[0].mxu0 %v662
        %v769 = vpop.f32.mrb[0].mxu0
        %v770 = vadd.f32 0.0, %v769
        %v771 = vpop.f32.mrb[0].mxu0
        %772 = vmatprep.mubr.f32.mxu0 0.0
        %773 = vmatmul.mubr.f32.gmra.mrb[0].mxu0 %v663
        %v774 = vpop.f32.mrb[0].mxu0
        %v775 = vadd.f32 0.0, %v774
        %v776 = vpop.f32.mrb[0].mxu0
        %777 = vmatprep.mubr.f32.mxu0 0.0
        %778 = vmatmul.mubr.f32.gmra.mrb[0].mxu0 %v664
        %v779 = vpop.f32.mrb[0].mxu0
        %v780 = vadd.f32 0.0, %v779
        %v781 = vpop.f32.mrb[0].mxu0
        %782 = vmatprep.mubr.f32.mxu0 0.0
        %783 = vmatmul.mubr.f32.gmra.mrb[0].mxu0 %v665
        %v784 = vpop.f32.mrb[0].mxu0
        %v785 = vadd.f32 0.0, %v784
        %v786 = vpop.f32.mrb[0].mxu0
        %787 = vdwg.mxu0
        %v788 = vadd.f32 %v647, %v750
        %v789 = vadd.f32 %v648, %v755
        %v790 = vadd.f32 %v649, %v760
        %v791 = vadd.f32 %v650, %v765
        %v792 = vadd.f32 %v651, %v770
        %v793 = vadd.f32 %v652, %v775
        %v794 = vadd.f32 %v653, %v780
        %v795 = vadd.f32 %v654, %v785
        %v796 = vld [vmem:[%s657 + $0x1] sm:$0xff]
        %v797 = vld [vmem:[%s657 + $0x11] sm:$0xff]
        %v798 = vld [vmem:[%s657 + $0x21] sm:$0xff]
        %v799 = vld [vmem:[%s657 + $0x31] sm:$0xff]
        %v800 = vld [vmem:[%s657 + $0x41] sm:$0xff]
        %v801 = vld [vmem:[%s657 + $0x51] sm:$0xff]
        %v802 = vld [vmem:[%s657 + $0x61] sm:$0xff]
        %v803 = vld [vmem:[%s657 + $0x71] sm:$0xff]
        %s804 = scalar_lea.vmem [#allocation5], 512
        %v805 = vld [vmem:[%s804] sm:$0xff]
        %v806 = vld [vmem:[%s804 + $0x8] sm:$0xff]
        %v807 = vld [vmem:[%s804 + $0x10] sm:$0xff]
        %v808 = vld [vmem:[%s804 + $0x18] sm:$0xff]
        %v809 = vld [vmem:[%s804 + $0x20] sm:$0xff]
        %v810 = vld [vmem:[%s804 + $0x28] sm:$0xff]
        %v811 = vld [vmem:[%s804 + $0x30] sm:$0xff]
        %v812 = vld [vmem:[%s804 + $0x38] sm:$0xff]
        %v813 = vld [vmem:[%s804 + $0x40] sm:$0xff]
        %v814 = vld [vmem:[%s804 + $0x48] sm:$0xff]
        %v815 = vld [vmem:[%s804 + $0x50] sm:$0xff]
        %v816 = vld [vmem:[%s804 + $0x58] sm:$0xff]
        %v817 = vld [vmem:[%s804 + $0x60] sm:$0xff]
        %v818 = vld [vmem:[%s804 + $0x68] sm:$0xff]
        %v819 = vld [vmem:[%s804 + $0x70] sm:$0xff]
        %v820 = vld [vmem:[%s804 + $0x78] sm:$0xff]
        %821 = vmatprep.subr.mxu0 0.0
        %822 = vmatpush1.msra.mxu0 %v805
        %823 = vmatprep.subr.mxu0 0.0
        %824 = vmatpush1.msra.mxu0 %v806
        %825 = vmatprep.subr.mxu0 0.0
        %826 = vmatpush1.msra.mxu0 %v807
        %827 = vmatprep.subr.mxu0 0.0
        %828 = vmatpush1.msra.mxu0 %v808
        %829 = vmatprep.subr.mxu0 0.0
        %830 = vmatpush1.msra.mxu0 %v809
        %831 = vmatprep.subr.mxu0 0.0
        %832 = vmatpush1.msra.mxu0 %v810
        %833 = vmatprep.subr.mxu0 0.0
        %834 = vmatpush1.msra.mxu0 %v811
        %835 = vmatprep.subr.mxu0 0.0
        %836 = vmatpush1.msra.mxu0 %v812
        %837 = vmatprep.subr.mxu0 0.0
        %838 = vmatpush1.msra.mxu0 %v813
        %839 = vmatprep.subr.mxu0 0.0
        %840 = vmatpush1.msra.mxu0 %v814
        %841 = vmatprep.subr.mxu0 0.0
        %842 = vmatpush1.msra.mxu0 %v815
        %843 = vmatprep.subr.mxu0 0.0
        %844 = vmatpush1.msra.mxu0 %v816
        %845 = vmatprep.subr.mxu0 0.0
        %846 = vmatpush1.msra.mxu0 %v817
        %847 = vmatprep.subr.mxu0 0.0
        %848 = vmatpush1.msra.mxu0 %v818
        %849 = vmatprep.subr.mxu0 0.0
        %850 = vmatpush1.msra.mxu0 %v819
        %851 = vmatprep.subr.mxu0 0.0
        %852 = vmatpush1.msra.mxu0 %v820
        %853 = vmatprep.subr.mxu0 0.0
        %854 = vmatpush1.msra.mxu0 0.0
        %855 = vmatprep.subr.mxu0 0.0
        %856 = vmatpush1.msra.mxu0 0.0
        %857 = vmatprep.subr.mxu0 0.0
        %858 = vmatpush1.msra.mxu0 0.0
        %859 = vmatprep.subr.mxu0 0.0
        %860 = vmatpush1.msra.mxu0 0.0
        %861 = vmatprep.subr.mxu0 0.0
        %862 = vmatpush1.msra.mxu0 0.0
        %863 = vmatprep.subr.mxu0 0.0
        %864 = vmatpush1.msra.mxu0 0.0
        %865 = vmatprep.subr.mxu0 0.0
        %866 = vmatpush1.msra.mxu0 0.0
        %867 = vmatprep.subr.mxu0 0.0
        %868 = vmatpush1.msra.mxu0 0.0
        %869 = vmatprep.subr.mxu0 0.0
        %870 = vmatpush1.msra.mxu0 0.0
        %871 = vmatprep.subr.mxu0 0.0
        %872 = vmatpush1.msra.mxu0 0.0
        %873 = vmatprep.subr.mxu0 0.0
        %874 = vmatpush1.msra.mxu0 0.0
        %875 = vmatprep.subr.mxu0 0.0
        %876 = vmatpush1.msra.mxu0 0.0
        %877 = vmatprep.subr.mxu0 0.0
        %878 = vmatpush1.msra.mxu0 0.0
        %879 = vmatprep.subr.mxu0 0.0
        %880 = vmatpush1.msra.mxu0 0.0
        %881 = vmatprep.subr.mxu0 0.0
        %882 = vmatpush1.msra.mxu0 0.0
        %883 = vmatprep.subr.mxu0 0.0
        %884 = vmatpush1.msra.mxu0 0.0
        %885 = vmatprep.mubr.f32.mxu0 0.0
        %886 = vmatmul.mubr.f32.gmra.mrb[0].mxu0 %v796
        %v887 = vpop.f32.mrb[0].mxu0
        %v888 = vadd.f32 0.0, %v887
        %v889 = vpop.f32.mrb[0].mxu0
        %890 = vmatprep.mubr.f32.mxu0 0.0
        %891 = vmatmul.mubr.f32.gmra.mrb[0].mxu0 %v797
        %v892 = vpop.f32.mrb[0].mxu0
        %v893 = vadd.f32 0.0, %v892
        %v894 = vpop.f32.mrb[0].mxu0
        %895 = vmatprep.mubr.f32.mxu0 0.0
        %896 = vmatmul.mubr.f32.gmra.mrb[0].mxu0 %v798
        %v897 = vpop.f32.mrb[0].mxu0
        %v898 = vadd.f32 0.0, %v897
        %v899 = vpop.f32.mrb[0].mxu0
        %900 = vmatprep.mubr.f32.mxu0 0.0
        %901 = vmatmul.mubr.f32.gmra.mrb[0].mxu0 %v799
        %v902 = vpop.f32.mrb[0].mxu0
        %v903 = vadd.f32 0.0, %v902
        %v904 = vpop.f32.mrb[0].mxu0
        %905 = vmatprep.mubr.f32.mxu0 0.0
        %906 = vmatmul.mubr.f32.gmra.mrb[0].mxu0 %v800
        %v907 = vpop.f32.mrb[0].mxu0
        %v908 = vadd.f32 0.0, %v907
        %v909 = vpop.f32.mrb[0].mxu0
        %910 = vmatprep.mubr.f32.mxu0 0.0
        %911 = vmatmul.mubr.f32.gmra.mrb[0].mxu0 %v801
        %v912 = vpop.f32.mrb[0].mxu0
        %v913 = vadd.f32 0.0, %v912
        %v914 = vpop.f32.mrb[0].mxu0
        %915 = vmatprep.mubr.f32.mxu0 0.0
        %916 = vmatmul.mubr.f32.gmra.mrb[0].mxu0 %v802
        %v917 = vpop.f32.mrb[0].mxu0
        %v918 = vadd.f32 0.0, %v917
        %v919 = vpop.f32.mrb[0].mxu0
        %920 = vmatprep.mubr.f32.mxu0 0.0
        %921 = vmatmul.mubr.f32.gmra.mrb[0].mxu0 %v803
        %v922 = vpop.f32.mrb[0].mxu0
        %v923 = vadd.f32 0.0, %v922
        %v924 = vpop.f32.mrb[0].mxu0
        %925 = vdwg.mxu0
        %v926 = vadd.f32 %v788, %v888
        %v927 = vadd.f32 %v789, %v893
        %v928 = vadd.f32 %v790, %v898
        %v929 = vadd.f32 %v791, %v903
        %v930 = vadd.f32 %v792, %v908
        %v931 = vadd.f32 %v793, %v913
        %v932 = vadd.f32 %v794, %v918
        %v933 = vadd.f32 %v795, %v923
        %v934 = vld [vmem:[%s657 + $0x2] sm:$0xff]
        %v935 = vld [vmem:[%s657 + $0x12] sm:$0xff]
        %v936 = vld [vmem:[%s657 + $0x22] sm:$0xff]
        %v937 = vld [vmem:[%s657 + $0x32] sm:$0xff]
        %v938 = vld [vmem:[%s657 + $0x42] sm:$0xff]
        %v939 = vld [vmem:[%s657 + $0x52] sm:$0xff]
        %v940 = vld [vmem:[%s657 + $0x62] sm:$0xff]
        %v941 = vld [vmem:[%s657 + $0x72] sm:$0xff]
        %s942 = scalar_lea.vmem [#allocation5], 640
        %v943 = vld [vmem:[%s942] sm:$0xff]
        %v944 = vld [vmem:[%s942 + $0x8] sm:$0xff]
        %v945 = vld [vmem:[%s942 + $0x10] sm:$0xff]
        %v946 = vld [vmem:[%s942 + $0x18] sm:$0xff]
        %v947 = vld [vmem:[%s942 + $0x20] sm:$0xff]
        %v948 = vld [vmem:[%s942 + $0x28] sm:$0xff]
        %v949 = vld [vmem:[%s942 + $0x30] sm:$0xff]
        %v950 = vld [vmem:[%s942 + $0x38] sm:$0xff]
        %v951 = vld [vmem:[%s942 + $0x40] sm:$0xff]
        %v952 = vld [vmem:[%s942 + $0x48] sm:$0xff]
        %v953 = vld [vmem:[%s942 + $0x50] sm:$0xff]
        %v954 = vld [vmem:[%s942 + $0x58] sm:$0xff]
        %v955 = vld [vmem:[%s942 + $0x60] sm:$0xff]
        %v956 = vld [vmem:[%s942 + $0x68] sm:$0xff]
        %v957 = vld [vmem:[%s942 + $0x70] sm:$0xff]
        %v958 = vld [vmem:[%s942 + $0x78] sm:$0xff]
        %959 = vmatprep.subr.mxu0 0.0
        %960 = vmatpush1.msra.mxu0 %v943
        %961 = vmatprep.subr.mxu0 0.0
        %962 = vmatpush1.msra.mxu0 %v944
        %963 = vmatprep.subr.mxu0 0.0
        %964 = vmatpush1.msra.mxu0 %v945
        %965 = vmatprep.subr.mxu0 0.0
        %966 = vmatpush1.msra.mxu0 %v946
        %967 = vmatprep.subr.mxu0 0.0
        %968 = vmatpush1.msra.mxu0 %v947
        %969 = vmatprep.subr.mxu0 0.0
        %970 = vmatpush1.msra.mxu0 %v948
        %971 = vmatprep.subr.mxu0 0.0
        %972 = vmatpush1.msra.mxu0 %v949
        %973 = vmatprep.subr.mxu0 0.0
        %974 = vmatpush1.msra.mxu0 %v950
        %975 = vmatprep.subr.mxu0 0.0
        %976 = vmatpush1.msra.mxu0 %v951
        %977 = vmatprep.subr.mxu0 0.0
        %978 = vmatpush1.msra.mxu0 %v952
        %979 = vmatprep.subr.mxu0 0.0
        %980 = vmatpush1.msra.mxu0 %v953
        %981 = vmatprep.subr.mxu0 0.0
        %982 = vmatpush1.msra.mxu0 %v954
        %983 = vmatprep.subr.mxu0 0.0
        %984 = vmatpush1.msra.mxu0 %v955
        %985 = vmatprep.subr.mxu0 0.0
        %986 = vmatpush1.msra.mxu0 %v956
        %987 = vmatprep.subr.mxu0 0.0
        %988 = vmatpush1.msra.mxu0 %v957
        %989 = vmatprep.subr.mxu0 0.0
        %990 = vmatpush1.msra.mxu0 %v958
        %991 = vmatprep.subr.mxu0 0.0
        %992 = vmatpush1.msra.mxu0 0.0
        %993 = vmatprep.subr.mxu0 0.0
        %994 = vmatpush1.msra.mxu0 0.0
        %995 = vmatprep.subr.mxu0 0.0
        %996 = vmatpush1.msra.mxu0 0.0
        %997 = vmatprep.subr.mxu0 0.0
        %998 = vmatpush1.msra.mxu0 0.0
        %999 = vmatprep.subr.mxu0 0.0
        %1000 = vmatpush1.msra.mxu0 0.0
        %1001 = vmatprep.subr.mxu0 0.0
        %1002 = vmatpush1.msra.mxu0 0.0
        %1003 = vmatprep.subr.mxu0 0.0
        %1004 = vmatpush1.msra.mxu0 0.0
        %1005 = vmatprep.subr.mxu0 0.0
        %1006 = vmatpush1.msra.mxu0 0.0
        %1007 = vmatprep.subr.mxu0 0.0
        %1008 = vmatpush1.msra.mxu0 0.0
        %1009 = vmatprep.subr.mxu0 0.0
        %1010 = vmatpush1.msra.mxu0 0.0
        %1011 = vmatprep.subr.mxu0 0.0
        %1012 = vmatpush1.msra.mxu0 0.0
        %1013 = vmatprep.subr.mxu0 0.0
        %1014 = vmatpush1.msra.mxu0 0.0
        %1015 = vmatprep.subr.mxu0 0.0
        %1016 = vmatpush1.msra.mxu0 0.0
        %1017 = vmatprep.subr.mxu0 0.0
        %1018 = vmatpush1.msra.mxu0 0.0
        %1019 = vmatprep.subr.mxu0 0.0
        %1020 = vmatpush1.msra.mxu0 0.0
        %1021 = vmatprep.subr.mxu0 0.0
        %1022 = vmatpush1.msra.mxu0 0.0
        %1023 = vmatprep.mubr.f32.mxu0 0.0
        %1024 = vmatmul.mubr.f32.gmra.mrb[0].mxu0 %v934
        %v1025 = vpop.f32.mrb[0].mxu0
        %v1026 = vadd.f32 0.0, %v1025
        %v1027 = vpop.f32.mrb[0].mxu0
        %1028 = vmatprep.mubr.f32.mxu0 0.0
        %1029 = vmatmul.mubr.f32.gmra.mrb[0].mxu0 %v935
        %v1030 = vpop.f32.mrb[0].mxu0
        %v1031 = vadd.f32 0.0, %v1030
        %v1032 = vpop.f32.mrb[0].mxu0
        %1033 = vmatprep.mubr.f32.mxu0 0.0
        %1034 = vmatmul.mubr.f32.gmra.mrb[0].mxu0 %v936
        %v1035 = vpop.f32.mrb[0].mxu0
        %v1036 = vadd.f32 0.0, %v1035
        %v1037 = vpop.f32.mrb[0].mxu0
        %1038 = vmatprep.mubr.f32.mxu0 0.0
        %1039 = vmatmul.mubr.f32.gmra.mrb[0].mxu0 %v937
        %v1040 = vpop.f32.mrb[0].mxu0
        %v1041 = vadd.f32 0.0, %v1040
        %v1042 = vpop.f32.mrb[0].mxu0
        %1043 = vmatprep.mubr.f32.mxu0 0.0
        %1044 = vmatmul.mubr.f32.gmra.mrb[0].mxu0 %v938
        %v1045 = vpop.f32.mrb[0].mxu0
        %v1046 = vadd.f32 0.0, %v1045
        %v1047 = vpop.f32.mrb[0].mxu0
        %1048 = vmatprep.mubr.f32.mxu0 0.0
        %1049 = vmatmul.mubr.f32.gmra.mrb[0].mxu0 %v939
        %v1050 = vpop.f32.mrb[0].mxu0
        %v1051 = vadd.f32 0.0, %v1050
        %v1052 = vpop.f32.mrb[0].mxu0
        %1053 = vmatprep.mubr.f32.mxu0 0.0
        %1054 = vmatmul.mubr.f32.gmra.mrb[0].mxu0 %v940
        %v1055 = vpop.f32.mrb[0].mxu0
        %v1056 = vadd.f32 0.0, %v1055
        %v1057 = vpop.f32.mrb[0].mxu0
        %1058 = vmatprep.mubr.f32.mxu0 0.0
        %1059 = vmatmul.mubr.f32.gmra.mrb[0].mxu0 %v941
        %v1060 = vpop.f32.mrb[0].mxu0
        %v1061 = vadd.f32 0.0, %v1060
        %v1062 = vpop.f32.mrb[0].mxu0
        %1063 = vdwg.mxu0
        %v1064 = vadd.f32 %v926, %v1026
        %v1065 = vadd.f32 %v927, %v1031
        %v1066 = vadd.f32 %v928, %v1036
        %v1067 = vadd.f32 %v929, %v1041
        %v1068 = vadd.f32 %v930, %v1046
        %v1069 = vadd.f32 %v931, %v1051
        %v1070 = vadd.f32 %v932, %v1056
        %v1071 = vadd.f32 %v933, %v1061
        %s1072 = sadd.s32 %s232, 2
        %s1073 = smul.u32 %s1072, 16
        %s1074 = scalar_lea.vmem %s199, %s1073 [#allocation2]
        %v1075 = vld [vmem:[%s1074] sm:$0xff]
        %v1076 = vld [vmem:[%s1074 + $0x10] sm:$0xff]
        %v1077 = vld [vmem:[%s1074 + $0x20] sm:$0xff]
        %v1078 = vld [vmem:[%s1074 + $0x30] sm:$0xff]
        %v1079 = vld [vmem:[%s1074 + $0x40] sm:$0xff]
        %v1080 = vld [vmem:[%s1074 + $0x50] sm:$0xff]
        %v1081 = vld [vmem:[%s1074 + $0x60] sm:$0xff]
        %v1082 = vld [vmem:[%s1074 + $0x70] sm:$0xff]
        %s1083 = scalar_lea.vmem [#allocation5], 768
        %v1084 = vld [vmem:[%s1083] sm:$0xff]
        %v1085 = vld [vmem:[%s1083 + $0x8] sm:$0xff]
        %v1086 = vld [vmem:[%s1083 + $0x10] sm:$0xff]
        %v1087 = vld [vmem:[%s1083 + $0x18] sm:$0xff]
        %v1088 = vld [vmem:[%s1083 + $0x20] sm:$0xff]
        %v1089 = vld [vmem:[%s1083 + $0x28] sm:$0xff]
        %v1090 = vld [vmem:[%s1083 + $0x30] sm:$0xff]
        %v1091 = vld [vmem:[%s1083 + $0x38] sm:$0xff]
        %v1092 = vld [vmem:[%s1083 + $0x40] sm:$0xff]
        %v1093 = vld [vmem:[%s1083 + $0x48] sm:$0xff]
        %v1094 = vld [vmem:[%s1083 + $0x50] sm:$0xff]
        %v1095 = vld [vmem:[%s1083 + $0x58] sm:$0xff]
        %v1096 = vld [vmem:[%s1083 + $0x60] sm:$0xff]
        %v1097 = vld [vmem:[%s1083 + $0x68] sm:$0xff]
        %v1098 = vld [vmem:[%s1083 + $0x70] sm:$0xff]
        %v1099 = vld [vmem:[%s1083 + $0x78] sm:$0xff]
        %1100 = vmatprep.subr.mxu0 0.0
        %1101 = vmatpush1.msra.mxu0 %v1084
        %1102 = vmatprep.subr.mxu0 0.0
        %1103 = vmatpush1.msra.mxu0 %v1085
        %1104 = vmatprep.subr.mxu0 0.0
        %1105 = vmatpush1.msra.mxu0 %v1086
        %1106 = vmatprep.subr.mxu0 0.0
        %1107 = vmatpush1.msra.mxu0 %v1087
        %1108 = vmatprep.subr.mxu0 0.0
        %1109 = vmatpush1.msra.mxu0 %v1088
        %1110 = vmatprep.subr.mxu0 0.0
        %1111 = vmatpush1.msra.mxu0 %v1089
        %1112 = vmatprep.subr.mxu0 0.0
        %1113 = vmatpush1.msra.mxu0 %v1090
        %1114 = vmatprep.subr.mxu0 0.0
        %1115 = vmatpush1.msra.mxu0 %v1091
        %1116 = vmatprep.subr.mxu0 0.0
        %1117 = vmatpush1.msra.mxu0 %v1092
        %1118 = vmatprep.subr.mxu0 0.0
        %1119 = vmatpush1.msra.mxu0 %v1093
        %1120 = vmatprep.subr.mxu0 0.0
        %1121 = vmatpush1.msra.mxu0 %v1094
        %1122 = vmatprep.subr.mxu0 0.0
        %1123 = vmatpush1.msra.mxu0 %v1095
        %1124 = vmatprep.subr.mxu0 0.0
        %1125 = vmatpush1.msra.mxu0 %v1096
        %1126 = vmatprep.subr.mxu0 0.0
        %1127 = vmatpush1.msra.mxu0 %v1097
        %1128 = vmatprep.subr.mxu0 0.0
        %1129 = vmatpush1.msra.mxu0 %v1098
        %1130 = vmatprep.subr.mxu0 0.0
        %1131 = vmatpush1.msra.mxu0 %v1099
        %1132 = vmatprep.subr.mxu0 0.0
        %1133 = vmatpush1.msra.mxu0 0.0
        %1134 = vmatprep.subr.mxu0 0.0
        %1135 = vmatpush1.msra.mxu0 0.0
        %1136 = vmatprep.subr.mxu0 0.0
        %1137 = vmatpush1.msra.mxu0 0.0
        %1138 = vmatprep.subr.mxu0 0.0
        %1139 = vmatpush1.msra.mxu0 0.0
        %1140 = vmatprep.subr.mxu0 0.0
        %1141 = vmatpush1.msra.mxu0 0.0
        %1142 = vmatprep.subr.mxu0 0.0
        %1143 = vmatpush1.msra.mxu0 0.0
        %1144 = vmatprep.subr.mxu0 0.0
        %1145 = vmatpush1.msra.mxu0 0.0
        %1146 = vmatprep.subr.mxu0 0.0
        %1147 = vmatpush1.msra.mxu0 0.0
        %1148 = vmatprep.subr.mxu0 0.0
        %1149 = vmatpush1.msra.mxu0 0.0
        %1150 = vmatprep.subr.mxu0 0.0
        %1151 = vmatpush1.msra.mxu0 0.0
        %1152 = vmatprep.subr.mxu0 0.0
        %1153 = vmatpush1.msra.mxu0 0.0
        %1154 = vmatprep.subr.mxu0 0.0
        %1155 = vmatpush1.msra.mxu0 0.0
        %1156 = vmatprep.subr.mxu0 0.0
        %1157 = vmatpush1.msra.mxu0 0.0
        %1158 = vmatprep.subr.mxu0 0.0
        %1159 = vmatpush1.msra.mxu0 0.0
        %1160 = vmatprep.subr.mxu0 0.0
        %1161 = vmatpush1.msra.mxu0 0.0
        %1162 = vmatprep.subr.mxu0 0.0
        %1163 = vmatpush1.msra.mxu0 0.0
        %1164 = vmatprep.mubr.f32.mxu0 0.0
        %1165 = vmatmul.mubr.f32.gmra.mrb[0].mxu0 %v1075
        %v1166 = vpop.f32.mrb[0].mxu0
        %v1167 = vadd.f32 0.0, %v1166
        %v1168 = vpop.f32.mrb[0].mxu0
        %1169 = vmatprep.mubr.f32.mxu0 0.0
        %1170 = vmatmul.mubr.f32.gmra.mrb[0].mxu0 %v1076
        %v1171 = vpop.f32.mrb[0].mxu0
        %v1172 = vadd.f32 0.0, %v1171
        %v1173 = vpop.f32.mrb[0].mxu0
        %1174 = vmatprep.mubr.f32.mxu0 0.0
        %1175 = vmatmul.mubr.f32.gmra.mrb[0].mxu0 %v1077
        %v1176 = vpop.f32.mrb[0].mxu0
        %v1177 = vadd.f32 0.0, %v1176
        %v1178 = vpop.f32.mrb[0].mxu0
        %1179 = vmatprep.mubr.f32.mxu0 0.0
        %1180 = vmatmul.mubr.f32.gmra.mrb[0].mxu0 %v1078
        %v1181 = vpop.f32.mrb[0].mxu0
        %v1182 = vadd.f32 0.0, %v1181
        %v1183 = vpop.f32.mrb[0].mxu0
        %1184 = vmatprep.mubr.f32.mxu0 0.0
        %1185 = vmatmul.mubr.f32.gmra.mrb[0].mxu0 %v1079
        %v1186 = vpop.f32.mrb[0].mxu0
        %v1187 = vadd.f32 0.0, %v1186
        %v1188 = vpop.f32.mrb[0].mxu0
        %1189 = vmatprep.mubr.f32.mxu0 0.0
        %1190 = vmatmul.mubr.f32.gmra.mrb[0].mxu0 %v1080
        %v1191 = vpop.f32.mrb[0].mxu0
        %v1192 = vadd.f32 0.0, %v1191
        %v1193 = vpop.f32.mrb[0].mxu0
        %1194 = vmatprep.mubr.f32.mxu0 0.0
        %1195 = vmatmul.mubr.f32.gmra.mrb[0].mxu0 %v1081
        %v1196 = vpop.f32.mrb[0].mxu0
        %v1197 = vadd.f32 0.0, %v1196
        %v1198 = vpop.f32.mrb[0].mxu0
        %1199 = vmatprep.mubr.f32.mxu0 0.0
        %1200 = vmatmul.mubr.f32.gmra.mrb[0].mxu0 %v1082
        %v1201 = vpop.f32.mrb[0].mxu0
        %v1202 = vadd.f32 0.0, %v1201
        %v1203 = vpop.f32.mrb[0].mxu0
        %1204 = vdwg.mxu0
        %v1205 = vadd.f32 %v1064, %v1167
        %v1206 = vadd.f32 %v1065, %v1172
        %v1207 = vadd.f32 %v1066, %v1177
        %v1208 = vadd.f32 %v1067, %v1182
        %v1209 = vadd.f32 %v1068, %v1187
        %v1210 = vadd.f32 %v1069, %v1192
        %v1211 = vadd.f32 %v1070, %v1197
        %v1212 = vadd.f32 %v1071, %v1202
        %v1213 = vld [vmem:[%s1074 + $0x1] sm:$0xff]
        %v1214 = vld [vmem:[%s1074 + $0x11] sm:$0xff]
        %v1215 = vld [vmem:[%s1074 + $0x21] sm:$0xff]
        %v1216 = vld [vmem:[%s1074 + $0x31] sm:$0xff]
        %v1217 = vld [vmem:[%s1074 + $0x41] sm:$0xff]
        %v1218 = vld [vmem:[%s1074 + $0x51] sm:$0xff]
        %v1219 = vld [vmem:[%s1074 + $0x61] sm:$0xff]
        %v1220 = vld [vmem:[%s1074 + $0x71] sm:$0xff]
        %s1221 = scalar_lea.vmem [#allocation5], 896
        %v1222 = vld [vmem:[%s1221] sm:$0xff]
        %v1223 = vld [vmem:[%s1221 + $0x8] sm:$0xff]
        %v1224 = vld [vmem:[%s1221 + $0x10] sm:$0xff]
        %v1225 = vld [vmem:[%s1221 + $0x18] sm:$0xff]
        %v1226 = vld [vmem:[%s1221 + $0x20] sm:$0xff]
        %v1227 = vld [vmem:[%s1221 + $0x28] sm:$0xff]
        %v1228 = vld [vmem:[%s1221 + $0x30] sm:$0xff]
        %v1229 = vld [vmem:[%s1221 + $0x38] sm:$0xff]
        %v1230 = vld [vmem:[%s1221 + $0x40] sm:$0xff]
        %v1231 = vld [vmem:[%s1221 + $0x48] sm:$0xff]
        %v1232 = vld [vmem:[%s1221 + $0x50] sm:$0xff]
        %v1233 = vld [vmem:[%s1221 + $0x58] sm:$0xff]
        %v1234 = vld [vmem:[%s1221 + $0x60] sm:$0xff]
        %v1235 = vld [vmem:[%s1221 + $0x68] sm:$0xff]
        %v1236 = vld [vmem:[%s1221 + $0x70] sm:$0xff]
        %v1237 = vld [vmem:[%s1221 + $0x78] sm:$0xff]
        %1238 = vmatprep.subr.mxu0 0.0
        %1239 = vmatpush1.msra.mxu0 %v1222
        %1240 = vmatprep.subr.mxu0 0.0
        %1241 = vmatpush1.msra.mxu0 %v1223
        %1242 = vmatprep.subr.mxu0 0.0
        %1243 = vmatpush1.msra.mxu0 %v1224
        %1244 = vmatprep.subr.mxu0 0.0
        %1245 = vmatpush1.msra.mxu0 %v1225
        %1246 = vmatprep.subr.mxu0 0.0
        %1247 = vmatpush1.msra.mxu0 %v1226
        %1248 = vmatprep.subr.mxu0 0.0
        %1249 = vmatpush1.msra.mxu0 %v1227
        %1250 = vmatprep.subr.mxu0 0.0
        %1251 = vmatpush1.msra.mxu0 %v1228
        %1252 = vmatprep.subr.mxu0 0.0
        %1253 = vmatpush1.msra.mxu0 %v1229
        %1254 = vmatprep.subr.mxu0 0.0
        %1255 = vmatpush1.msra.mxu0 %v1230
        %1256 = vmatprep.subr.mxu0 0.0
        %1257 = vmatpush1.msra.mxu0 %v1231
        %1258 = vmatprep.subr.mxu0 0.0
        %1259 = vmatpush1.msra.mxu0 %v1232
        %1260 = vmatprep.subr.mxu0 0.0
        %1261 = vmatpush1.msra.mxu0 %v1233
        %1262 = vmatprep.subr.mxu0 0.0
        %1263 = vmatpush1.msra.mxu0 %v1234
        %1264 = vmatprep.subr.mxu0 0.0
        %1265 = vmatpush1.msra.mxu0 %v1235
        %1266 = vmatprep.subr.mxu0 0.0
        %1267 = vmatpush1.msra.mxu0 %v1236
        %1268 = vmatprep.subr.mxu0 0.0
        %1269 = vmatpush1.msra.mxu0 %v1237
        %1270 = vmatprep.subr.mxu0 0.0
        %1271 = vmatpush1.msra.mxu0 0.0
        %1272 = vmatprep.subr.mxu0 0.0
        %1273 = vmatpush1.msra.mxu0 0.0
        %1274 = vmatprep.subr.mxu0 0.0
        %1275 = vmatpush1.msra.mxu0 0.0
        %1276 = vmatprep.subr.mxu0 0.0
        %1277 = vmatpush1.msra.mxu0 0.0
        %1278 = vmatprep.subr.mxu0 0.0
        %1279 = vmatpush1.msra.mxu0 0.0
        %1280 = vmatprep.subr.mxu0 0.0
        %1281 = vmatpush1.msra.mxu0 0.0
        %1282 = vmatprep.subr.mxu0 0.0
        %1283 = vmatpush1.msra.mxu0 0.0
        %1284 = vmatprep.subr.mxu0 0.0
        %1285 = vmatpush1.msra.mxu0 0.0
        %1286 = vmatprep.subr.mxu0 0.0
        %1287 = vmatpush1.msra.mxu0 0.0
        %1288 = vmatprep.subr.mxu0 0.0
        %1289 = vmatpush1.msra.mxu0 0.0
        %1290 = vmatprep.subr.mxu0 0.0
        %1291 = vmatpush1.msra.mxu0 0.0
        %1292 = vmatprep.subr.mxu0 0.0
        %1293 = vmatpush1.msra.mxu0 0.0
        %1294 = vmatprep.subr.mxu0 0.0
        %1295 = vmatpush1.msra.mxu0 0.0
        %1296 = vmatprep.subr.mxu0 0.0
        %1297 = vmatpush1.msra.mxu0 0.0
        %1298 = vmatprep.subr.mxu0 0.0
        %1299 = vmatpush1.msra.mxu0 0.0
        %1300 = vmatprep.subr.mxu0 0.0
        %1301 = vmatpush1.msra.mxu0 0.0
        %1302 = vmatprep.mubr.f32.mxu0 0.0
        %1303 = vmatmul.mubr.f32.gmra.mrb[0].mxu0 %v1213
        %v1304 = vpop.f32.mrb[0].mxu0
        %v1305 = vadd.f32 0.0, %v1304
        %v1306 = vpop.f32.mrb[0].mxu0
        %1307 = vmatprep.mubr.f32.mxu0 0.0
        %1308 = vmatmul.mubr.f32.gmra.mrb[0].mxu0 %v1214
        %v1309 = vpop.f32.mrb[0].mxu0
        %v1310 = vadd.f32 0.0, %v1309
        %v1311 = vpop.f32.mrb[0].mxu0
        %1312 = vmatprep.mubr.f32.mxu0 0.0
        %1313 = vmatmul.mubr.f32.gmra.mrb[0].mxu0 %v1215
        %v1314 = vpop.f32.mrb[0].mxu0
        %v1315 = vadd.f32 0.0, %v1314
        %v1316 = vpop.f32.mrb[0].mxu0
        %1317 = vmatprep.mubr.f32.mxu0 0.0
        %1318 = vmatmul.mubr.f32.gmra.mrb[0].mxu0 %v1216
        %v1319 = vpop.f32.mrb[0].mxu0
        %v1320 = vadd.f32 0.0, %v1319
        %v1321 = vpop.f32.mrb[0].mxu0
        %1322 = vmatprep.mubr.f32.mxu0 0.0
        %1323 = vmatmul.mubr.f32.gmra.mrb[0].mxu0 %v1217
        %v1324 = vpop.f32.mrb[0].mxu0
        %v1325 = vadd.f32 0.0, %v1324
        %v1326 = vpop.f32.mrb[0].mxu0
        %1327 = vmatprep.mubr.f32.mxu0 0.0
        %1328 = vmatmul.mubr.f32.gmra.mrb[0].mxu0 %v1218
        %v1329 = vpop.f32.mrb[0].mxu0
        %v1330 = vadd.f32 0.0, %v1329
        %v1331 = vpop.f32.mrb[0].mxu0
        %1332 = vmatprep.mubr.f32.mxu0 0.0
        %1333 = vmatmul.mubr.f32.gmra.mrb[0].mxu0 %v1219
        %v1334 = vpop.f32.mrb[0].mxu0
        %v1335 = vadd.f32 0.0, %v1334
        %v1336 = vpop.f32.mrb[0].mxu0
        %1337 = vmatprep.mubr.f32.mxu0 0.0
        %1338 = vmatmul.mubr.f32.gmra.mrb[0].mxu0 %v1220
        %v1339 = vpop.f32.mrb[0].mxu0
        %v1340 = vadd.f32 0.0, %v1339
        %v1341 = vpop.f32.mrb[0].mxu0
        %1342 = vdwg.mxu0
        %v1343 = vadd.f32 %v1205, %v1305
        %v1344 = vadd.f32 %v1206, %v1310
        %v1345 = vadd.f32 %v1207, %v1315
        %v1346 = vadd.f32 %v1208, %v1320
        %v1347 = vadd.f32 %v1209, %v1325
        %v1348 = vadd.f32 %v1210, %v1330
        %v1349 = vadd.f32 %v1211, %v1335
        %v1350 = vadd.f32 %v1212, %v1340
        %v1351 = vld [vmem:[%s1074 + $0x2] sm:$0xff]
        %v1352 = vld [vmem:[%s1074 + $0x12] sm:$0xff]
        %v1353 = vld [vmem:[%s1074 + $0x22] sm:$0xff]
        %v1354 = vld [vmem:[%s1074 + $0x32] sm:$0xff]
        %v1355 = vld [vmem:[%s1074 + $0x42] sm:$0xff]
        %v1356 = vld [vmem:[%s1074 + $0x52] sm:$0xff]
        %v1357 = vld [vmem:[%s1074 + $0x62] sm:$0xff]
        %v1358 = vld [vmem:[%s1074 + $0x72] sm:$0xff]
        %s1359 = scalar_lea.vmem [#allocation5], 1024
        %v1360 = vld [vmem:[%s1359] sm:$0xff]
        %v1361 = vld [vmem:[%s1359 + $0x8] sm:$0xff]
        %v1362 = vld [vmem:[%s1359 + $0x10] sm:$0xff]
        %v1363 = vld [vmem:[%s1359 + $0x18] sm:$0xff]
        %v1364 = vld [vmem:[%s1359 + $0x20] sm:$0xff]
        %v1365 = vld [vmem:[%s1359 + $0x28] sm:$0xff]
        %v1366 = vld [vmem:[%s1359 + $0x30] sm:$0xff]
        %v1367 = vld [vmem:[%s1359 + $0x38] sm:$0xff]
        %v1368 = vld [vmem:[%s1359 + $0x40] sm:$0xff]
        %v1369 = vld [vmem:[%s1359 + $0x48] sm:$0xff]
        %v1370 = vld [vmem:[%s1359 + $0x50] sm:$0xff]
        %v1371 = vld [vmem:[%s1359 + $0x58] sm:$0xff]
        %v1372 = vld [vmem:[%s1359 + $0x60] sm:$0xff]
        %v1373 = vld [vmem:[%s1359 + $0x68] sm:$0xff]
        %v1374 = vld [vmem:[%s1359 + $0x70] sm:$0xff]
        %v1375 = vld [vmem:[%s1359 + $0x78] sm:$0xff]
        %1376 = vmatprep.subr.mxu0 0.0
        %1377 = vmatpush1.msra.mxu0 %v1360
        %1378 = vmatprep.subr.mxu0 0.0
        %1379 = vmatpush1.msra.mxu0 %v1361
        %1380 = vmatprep.subr.mxu0 0.0
        %1381 = vmatpush1.msra.mxu0 %v1362
        %1382 = vmatprep.subr.mxu0 0.0
        %1383 = vmatpush1.msra.mxu0 %v1363
        %1384 = vmatprep.subr.mxu0 0.0
        %1385 = vmatpush1.msra.mxu0 %v1364
        %1386 = vmatprep.subr.mxu0 0.0
        %1387 = vmatpush1.msra.mxu0 %v1365
        %1388 = vmatprep.subr.mxu0 0.0
        %1389 = vmatpush1.msra.mxu0 %v1366
        %1390 = vmatprep.subr.mxu0 0.0
        %1391 = vmatpush1.msra.mxu0 %v1367
        %1392 = vmatprep.subr.mxu0 0.0
        %1393 = vmatpush1.msra.mxu0 %v1368
        %1394 = vmatprep.subr.mxu0 0.0
        %1395 = vmatpush1.msra.mxu0 %v1369
        %1396 = vmatprep.subr.mxu0 0.0
        %1397 = vmatpush1.msra.mxu0 %v1370
        %1398 = vmatprep.subr.mxu0 0.0
        %1399 = vmatpush1.msra.mxu0 %v1371
        %1400 = vmatprep.subr.mxu0 0.0
        %1401 = vmatpush1.msra.mxu0 %v1372
        %1402 = vmatprep.subr.mxu0 0.0
        %1403 = vmatpush1.msra.mxu0 %v1373
        %1404 = vmatprep.subr.mxu0 0.0
        %1405 = vmatpush1.msra.mxu0 %v1374
        %1406 = vmatprep.subr.mxu0 0.0
        %1407 = vmatpush1.msra.mxu0 %v1375
        %1408 = vmatprep.subr.mxu0 0.0
        %1409 = vmatpush1.msra.mxu0 0.0
        %1410 = vmatprep.subr.mxu0 0.0
        %1411 = vmatpush1.msra.mxu0 0.0
        %1412 = vmatprep.subr.mxu0 0.0
        %1413 = vmatpush1.msra.mxu0 0.0
        %1414 = vmatprep.subr.mxu0 0.0
        %1415 = vmatpush1.msra.mxu0 0.0
        %1416 = vmatprep.subr.mxu0 0.0
        %1417 = vmatpush1.msra.mxu0 0.0
        %1418 = vmatprep.subr.mxu0 0.0
        %1419 = vmatpush1.msra.mxu0 0.0
        %1420 = vmatprep.subr.mxu0 0.0
        %1421 = vmatpush1.msra.mxu0 0.0
        %1422 = vmatprep.subr.mxu0 0.0
        %1423 = vmatpush1.msra.mxu0 0.0
        %1424 = vmatprep.subr.mxu0 0.0
        %1425 = vmatpush1.msra.mxu0 0.0
        %1426 = vmatprep.subr.mxu0 0.0
        %1427 = vmatpush1.msra.mxu0 0.0
        %1428 = vmatprep.subr.mxu0 0.0
        %1429 = vmatpush1.msra.mxu0 0.0
        %1430 = vmatprep.subr.mxu0 0.0
        %1431 = vmatpush1.msra.mxu0 0.0
        %1432 = vmatprep.subr.mxu0 0.0
        %1433 = vmatpush1.msra.mxu0 0.0
        %1434 = vmatprep.subr.mxu0 0.0
        %1435 = vmatpush1.msra.mxu0 0.0
        %1436 = vmatprep.subr.mxu0 0.0
        %1437 = vmatpush1.msra.mxu0 0.0
        %1438 = vmatprep.subr.mxu0 0.0
        %1439 = vmatpush1.msra.mxu0 0.0
        %1440 = vmatprep.mubr.f32.mxu0 0.0
        %1441 = vmatmul.mubr.f32.gmra.mrb[0].mxu0 %v1351
        %v1442 = vpop.f32.mrb[0].mxu0
        %v1443 = vadd.f32 0.0, %v1442
        %v1444 = vpop.f32.mrb[0].mxu0
        %1445 = vmatprep.mubr.f32.mxu0 0.0
        %1446 = vmatmul.mubr.f32.gmra.mrb[0].mxu0 %v1352
        %v1447 = vpop.f32.mrb[0].mxu0
        %v1448 = vadd.f32 0.0, %v1447
        %v1449 = vpop.f32.mrb[0].mxu0
        %1450 = vmatprep.mubr.f32.mxu0 0.0
        %1451 = vmatmul.mubr.f32.gmra.mrb[0].mxu0 %v1353
        %v1452 = vpop.f32.mrb[0].mxu0
        %v1453 = vadd.f32 0.0, %v1452
        %v1454 = vpop.f32.mrb[0].mxu0
        %1455 = vmatprep.mubr.f32.mxu0 0.0
        %1456 = vmatmul.mubr.f32.gmra.mrb[0].mxu0 %v1354
        %v1457 = vpop.f32.mrb[0].mxu0
        %v1458 = vadd.f32 0.0, %v1457
        %v1459 = vpop.f32.mrb[0].mxu0
        %1460 = vmatprep.mubr.f32.mxu0 0.0
        %1461 = vmatmul.mubr.f32.gmra.mrb[0].mxu0 %v1355
        %v1462 = vpop.f32.mrb[0].mxu0
        %v1463 = vadd.f32 0.0, %v1462
        %v1464 = vpop.f32.mrb[0].mxu0
        %1465 = vmatprep.mubr.f32.mxu0 0.0
        %1466 = vmatmul.mubr.f32.gmra.mrb[0].mxu0 %v1356
        %v1467 = vpop.f32.mrb[0].mxu0
        %v1468 = vadd.f32 0.0, %v1467
        %v1469 = vpop.f32.mrb[0].mxu0
        %1470 = vmatprep.mubr.f32.mxu0 0.0
        %1471 = vmatmul.mubr.f32.gmra.mrb[0].mxu0 %v1357
        %v1472 = vpop.f32.mrb[0].mxu0
        %v1473 = vadd.f32 0.0, %v1472
        %v1474 = vpop.f32.mrb[0].mxu0
        %1475 = vmatprep.mubr.f32.mxu0 0.0
        %1476 = vmatmul.mubr.f32.gmra.mrb[0].mxu0 %v1358
        %v1477 = vpop.f32.mrb[0].mxu0
        %v1478 = vadd.f32 0.0, %v1477
        %v1479 = vpop.f32.mrb[0].mxu0
        %1480 = vdwg.mxu0
        %v1481 = vadd.f32 %v1343, %v1443
        %v1482 = vadd.f32 %v1344, %v1448
        %v1483 = vadd.f32 %v1345, %v1453
        %v1484 = vadd.f32 %v1346, %v1458
        %v1485 = vadd.f32 %v1347, %v1463
        %v1486 = vadd.f32 %v1348, %v1468
        %v1487 = vadd.f32 %v1349, %v1473
        %v1488 = vadd.f32 %v1350, %v1478
        %v1489 = vmax.f32 %v1481, 0.0
        %v1490 = vmax.f32 %v1482, 0.0
        %v1491 = vmax.f32 %v1483, 0.0
        %v1492 = vmax.f32 %v1484, 0.0
        %v1493 = vmax.f32 %v1485, 0.0
        %v1494 = vmax.f32 %v1486, 0.0
        %v1495 = vmax.f32 %v1487, 0.0
        %v1496 = vmax.f32 %v1488, 0.0
        %v1497 = vmin.f32 %v1489, 6.0
        %v1498 = vmin.f32 %v1490, 6.0
        %v1499 = vmin.f32 %v1491, 6.0
        %v1500 = vmin.f32 %v1492, 6.0
        %v1501 = vmin.f32 %v1493, 6.0
        %v1502 = vmin.f32 %v1494, 6.0
        %v1503 = vmin.f32 %v1495, 6.0
        %v1504 = vmin.f32 %v1496, 6.0
        %1505 = vst [vmem:[%s229] sm:$0xff] %v1497
        %1506 = vst [vmem:[%s229 + $0x8] sm:$0xff] %v1498
        %1507 = vst [vmem:[%s229 + $0x10] sm:$0xff] %v1499
        %1508 = vst [vmem:[%s229 + $0x18] sm:$0xff] %v1500
        %1509 = vst [vmem:[%s229 + $0x20] sm:$0xff] %v1501
        %1510 = vst [vmem:[%s229 + $0x28] sm:$0xff] %v1502
        %1511 = vst [vmem:[%s229 + $0x30] sm:$0xff] %v1503
        %1512 = vst [vmem:[%s229 + $0x38] sm:$0xff] %v1504
        %s1513 = sand.u32 %s111, 1
        %s1514 = scalar_lea.sflag [#allocation4], %s1513
        %s1515 = sand.u32 %s111, 1
        %s1516 = smul.addr %s1515, 64
        %s1517 = scalar_lea.vmem [#allocation8], %s1516
        // Predicated region
        $region45: #{bottleneck_forward.4} parent=31 // pred_check
          %p1518 = pneg %p121
        $region46: #{bottleneck_forward.4} parent=31 // pred_check_branch
          %1520 = sbr.rel (%p1518) target = $region48
        $region47: #{bottleneck_forward.4} parent=31 // pred_region
          %s1521 = sadd.s32 %s25, %s26
          %s1522 = smul.u32 8, %s1521
          %s1524 = ssub.s32 1024, 1024
          %1525 = vsyncadd %s1514, %s1524
          %s1526 = smul.addr %s1522, 128
          %s1527 = scalar_lea.hbm %s3, %s1526
          %s1528 = sshll.u32 %s1517, 4
          %s1529 = int_to_ptr.vmem [resolvable:$true] %s1528
          %1534 = dma.vmem_to_hbm [thread:$0]  %s1529, 1024, %s1527, %s1514, 128, 128, 8
        $region48: #{bottleneck_forward.4} parent=31 // pred_fallthru
          _
      $region32: #{bottleneck_forward.4} parent=5 // pred_fallthru
        _
      %p1535 = scmp.le.s32.totalorder 2, %s16
      // Predicated region
      $region49: #{bottleneck_forward.4} parent=5 // pred_check
        %p1536 = pneg %p1535
      $region50: #{bottleneck_forward.4} parent=5 // pred_check_branch
        %1538 = sbr.rel (%p1536) target = $region52
      $region51: #{bottleneck_forward.4} parent=5 // pred_region
        %s1539 = ssub.s32 %s16, 2
        // Predicated region
        $region53: #{bottleneck_forward.4} parent=51 // pred_check
          %p1540 = pneg %p127
        $region54: #{bottleneck_forward.4} parent=51 // pred_check_branch
          %1542 = sbr.rel (%p1540) target = $region56
        $region55: #{bottleneck_forward.4} parent=51 // pred_region
          %s1543 = sand.u32 %s112, 1
          %s1544 = scalar_lea.sflag [#allocation4], %s1543
          %s1545 = sand.u32 %s112, 1
          %s1546 = smul.addr %s1545, 64
          %s1547 = scalar_lea.vmem [#allocation8], %s1546
          %1548 = dma.done %s1544, 1024
        $region56: #{bottleneck_forward.4} parent=51 // pred_fallthru
          _
      $region52: #{bottleneck_forward.4} parent=5 // pred_fallthru
        _
    $region6: #{bottleneck_forward.4} parent=1 // loop_footer
      %s20 = sadd.s32 1, %s16
    $region7: #{bottleneck_forward.4} parent=1 // loop_footer_branch
      %15 = sbr.rel target = $region3
    $region8: #{bottleneck_forward.4} parent=1 // loop_exit
      _
    %1549 = vsyncpa [#allocation3], 1
    %s1550 = scalar_lea.sflag [#allocation3], 1
    %1551 = vsyncpa %s1550, 1
    %1552 = vsyncpa [#allocation6], 1
    %1553 = vsyncpa [#allocation4], 1
    %s1554 = scalar_lea.sflag [#allocation4], 1
    %1555 = vsyncpa %s1554, 1

</llo_original>
